<compile_context>
chip_gen: v7x
topology: tpu7x:2x2x1
jax: 0.10.0
libtpu: 0.0.40
codegen_flags: <defaults>
</compile_context>

<pallas_src>
import math
from functools import partial

import jax
import jax.numpy as jnp
from jax.experimental import pallas as pl
from jax.experimental.pallas import tpu as pltpu


# ----------------------------- in-kernel helpers ----------------------------

def _gelu(x):
    # BERT-pytorch custom GELU (tanh approximation); tanh -> EUP slot.
    return 0.5 * x * (1.0 + jnp.tanh(math.sqrt(2.0 / math.pi)
                                     * (x + 0.044715 * x * x * x)))


def _layernorm(x, g, b, eps=1e-6):
    # BERT-pytorch custom LayerNorm: unbiased std (N-1), eps added to std (not
    # var).  NOTE: this matches BERT-pytorch, not torch.nn.LayerNorm.
    d = x.shape[-1]
    mu = jnp.mean(x, axis=-1, keepdims=True)
    xc = x - mu
    var = jnp.sum(xc * xc, axis=-1, keepdims=True) * (1.0 / (d - 1))
    std = jnp.sqrt(var)
    inv = 1.0 / (std + eps)          # EXACT reciprocal (narrow (M,1), cheap)
    return xc * inv * g + b


# ------------------------------- fused kernel --------------------------------

def bert_stack_kernel(x_ref, pos_ref,
                      wqkv_ref, bqkv_ref, wo_ref, bo_ref,
                      ln1g_ref, ln1b_ref,
                      w1_ref, b1_ref, w2_ref, b2_ref,
                      ln2g_ref, ln2b_ref,
                      o_ref, x_carry, ctx_vmem, *, n_heads):
    """One grid step = (batch tile of TB elements, one layer).

    grid = (B // TB, L), layer axis innermost & 'arbitrary'.  The f32 residual
    stream for the current batch tile is carried across layers in `x_carry`
    (VMEM); weights are double-buffered behind compute by the BlockSpec pipeline.
    """
    l = pl.program_id(1)
    n_layers = pl.num_programs(1)

    # Layer 0: initialize carry = input + positional embedding (fused add).
    @pl.when(l == 0)
    def _():
        x_carry[...] = x_ref[...] + pos_ref[...]

    x = x_carry[...]                                  # (TB, S, D) f32 residual
    TB, S, D = x.shape
    M = TB * S
    dk = D // n_heads
    scale = 1.0 / math.sqrt(dk)

    xf = x.reshape(M, D)

    # -------- self-attention sublayer:  x + Wo(Attn(LN(x))) --------
    h = _layernorm(xf, ln1g_ref[0], ln1b_ref[0]).astype(jnp.bfloat16)
    # Fused QKV: one lane-dense bf16 matmul on M = TB*S rows, f32 accumulation.
    qkv = jnp.dot(h, wqkv_ref[0], preferred_element_type=jnp.float32) + bqkv_ref[0]
    q = qkv[:, 0 * D:1 * D].astype(jnp.bfloat16).reshape(TB, S, D)
    k = qkv[:, 1 * D:2 * D].astype(jnp.bfloat16).reshape(TB, S, D)
    v = qkv[:, 2 * D:3 * D].astype(jnp.bfloat16).reshape(TB, S, D)

    # Per-head scores (batched over the TB batch elements), then ONE stacked
    # softmax over all heads/batches: single max / exp / sum / reciprocal.
    scores = []
    for hh in range(n_heads):
        lo, hi = hh * dk, (hh + 1) * dk
        scores.append(jnp.einsum('bqd,bkd->bqk', q[..., lo:hi], k[..., lo:hi],
                                 preferred_element_type=jnp.float32))
    s = jnp.concatenate(scores, axis=1) * scale       # (TB, H*S, S), f32 scale
    s = s - jnp.max(s, axis=-1, keepdims=True)
    p = jnp.exp(s)
    p = (p * pl.reciprocal(jnp.sum(p, axis=-1, keepdims=True), approx=True)
         ).astype(jnp.bfloat16)                       # approx OK for softmax

    # Per-head context written into a lane-offset VMEM scratch, then ONE
    # full-depth (M, D) @ (D, D) output projection (bias as accumulator init).
    for hh in range(n_heads):
        lo, hi = hh * dk, (hh + 1) * dk
        ph = p[:, hh * S:(hh + 1) * S, :]             # (TB, S, S)
        ctx = jnp.einsum('bqk,bkd->bqd', ph, v[..., lo:hi],
                         preferred_element_type=jnp.float32)   # (TB, S, dk)
        ctx_vmem[:, lo:hi] = ctx.reshape(M, dk).astype(jnp.bfloat16)
    attn = jnp.dot(ctx_vmem[...], wo_ref[0],
                   preferred_element_type=jnp.float32) + bo_ref[0]
    xf = xf + attn                                    # residual (dropout = id)

    # -------- feed-forward sublayer:  x + W2(gelu(W1(LN(x)))) --------
    h2 = _layernorm(xf, ln2g_ref[0], ln2b_ref[0]).astype(jnp.bfloat16)
    u = jnp.dot(h2, w1_ref[0], preferred_element_type=jnp.float32) + b1_ref[0]
    u = _gelu(u).astype(jnp.bfloat16)
    f = jnp.dot(u, w2_ref[0], preferred_element_type=jnp.float32) + b2_ref[0]
    xf = xf + f                                       # residual (dropout = id)

    x_carry[...] = xf.reshape(TB, S, D)

    @pl.when(l == n_layers - 1)
    def _():
        o_ref[...] = xf.reshape(TB, S, D).astype(o_ref.dtype)


# ------------------------------- JAX wrapper ---------------------------------

def bert_encoder(x, params, n_heads, *, batch_tile=4,
                 vmem_limit_bytes=48 * 1024 * 1024):
    B, S, D = x.shape
    L = params["wqkv"].shape[0]
    Dff = params["w1"].shape[2]
    assert D % n_heads == 0, "hidden must be divisible by attn_heads"
    TB = min(batch_tile, B)
    assert B % TB == 0, "batch must be divisible by batch_tile"

    def per_layer(n, k):
        # Stacked per-layer tensor (L, n, k); block index follows the layer axis
        # so Pallas prefetches/double-buffers the next layer's weights.
        return pl.BlockSpec((1, n, k), lambda b, l: (l, 0, 0))

    in_specs = [
        pl.BlockSpec((TB, S, D), lambda b, l: (b, 0, 0)),     # x (batch tile)
        pl.BlockSpec((1, S, D), lambda b, l: (0, 0, 0)),      # positional emb
        per_layer(D, 3 * D), per_layer(1, 3 * D),             # wqkv, bqkv
        per_layer(D, D),     per_layer(1, D),                 # wo, bo
        per_layer(1, D),     per_layer(1, D),                 # ln1 gamma, beta
        per_layer(D, Dff),   per_layer(1, Dff),               # w1, b1
        per_layer(Dff, D),   per_layer(1, D),                 # w2, b2
        per_layer(1, D),     per_layer(1, D),                 # ln2 gamma, beta
    ]

    return pl.pallas_call(
        partial(bert_stack_kernel, n_heads=n_heads),
        out_shape=jax.ShapeDtypeStruct((B, S, D), jnp.float32),
        grid=(B // TB, L),
        in_specs=in_specs,
        out_specs=pl.BlockSpec((TB, S, D), lambda b, l: (b, 0, 0)),
        scratch_shapes=[
            pltpu.VMEM((TB, S, D), jnp.float32),      # residual carry
            pltpu.VMEM((TB * S, D), jnp.bfloat16),    # per-head context slab
        ],
        compiler_params=pltpu.CompilerParams(
            dimension_semantics=("parallel", "arbitrary"),
            vmem_limit_bytes=vmem_limit_bytes),
    )(x, params["pos_emb"],
      params["wqkv"], params["bqkv"], params["wo"], params["bo"],
      params["ln1g"], params["ln1b"],
      params["w1"], params["b1"], params["w2"], params["b2"],
      params["ln2g"], params["ln2b"])


def bert_forward(input_vectors, params, n_heads, *, batch_tile=4):
    """Eval-mode BERT.forward: returns (x, sample) with sample=None."""
    B, _, D = input_vectors.shape
    cls = jnp.broadcast_to(params["cls_token"], (B, 1, D)).astype(input_vectors.dtype)
    x = jnp.concatenate([cls, input_vectors], axis=1)         # (B, max_len+1, D)
    out = bert_encoder(x, params, n_heads, batch_tile=batch_tile)
    return out, None


# ------------------------------ parameter init -------------------------------

def init_params(key, input_dim, max_len, hidden, n_layers):
    assert input_dim == hidden, "input_dim must equal hidden for this module"
    dff = hidden * 4
    S = max_len + 1
    k = jax.random.split(key, 8)

    def w(kk, shape):
        return 0.02 * jax.random.normal(kk, shape, dtype=jnp.float32)

    # Matmul weights stored bf16 (MXU-native, halves weight DMA/VMEM); biases
    # and LayerNorm params stay f32 (added after f32 accumulation).
    return dict(
        cls_token=w(k[0], (1, 1, input_dim)),
        pos_emb=w(k[1], (1, S, input_dim)),
        wqkv=w(k[2], (n_layers, hidden, 3 * hidden)).astype(jnp.bfloat16),
        bqkv=jnp.zeros((n_layers, 1, 3 * hidden), jnp.float32),
        wo=w(k[3], (n_layers, hidden, hidden)).astype(jnp.bfloat16),
        bo=jnp.zeros((n_layers, 1, hidden), jnp.float32),
        ln1g=jnp.ones((n_layers, 1, hidden), jnp.float32),
        ln1b=jnp.zeros((n_layers, 1, hidden), jnp.float32),
        w1=w(k[4], (n_layers, hidden, dff)).astype(jnp.bfloat16),
        b1=jnp.zeros((n_layers, 1, dff), jnp.float32),
        w2=w(k[5], (n_layers, dff, hidden)).astype(jnp.bfloat16),
        b2=jnp.zeros((n_layers, 1, hidden), jnp.float32),
        ln2g=jnp.ones((n_layers, 1, hidden), jnp.float32),
        ln2b=jnp.zeros((n_layers, 1, hidden), jnp.float32),
    )


# ----------------------------------- main -------------------------------------

if __name__ == "__main__":
    # Small but tile-aligned demo shapes: S = max_len + 1 = 8, D = 128, Dff = 512.
    # B=8 with batch_tile=4 -> grid parallel axis has 2 steps (both v7x TCs busy)
    # and each step's matmul M dimension is TB*S = 32.
    B = 8
    max_len = 7
    hidden = 128          # input_dim == hidden
    n_layers = 2
    n_heads = 4           # dk = 32

    key = jax.random.PRNGKey(0)
    kp, kx = jax.random.split(key)
    params = init_params(kp, hidden, max_len, hidden, n_layers)
    x = jax.random.normal(kx, (B, max_len, hidden), dtype=jnp.float32)

    out, sample = bert_forward(x, params, n_heads, batch_tile=4)
    out = jax.block_until_ready(out)
    assert out.shape == (B, max_len + 1, hidden)
    assert sample is None
    assert bool(jnp.all(jnp.isfinite(out)))
    print("KERNEL_OK")
</pallas_src>

<mosaic_0001>
module attributes {stable_mosaic.version = 11 : i64} {
  func.func @bert_stack_kernel(%arg0: i32, %arg1: i32, %arg2: memref<4x8x128xf32, #tpu.memory_space<vmem>>, %arg3: memref<1x8x128xf32, #tpu.memory_space<vmem>>, %arg4: memref<1x128x384xbf16, #tpu.memory_space<vmem>>, %arg5: memref<1x1x384xf32, #tpu.memory_space<vmem>>, %arg6: memref<1x128x128xbf16, #tpu.memory_space<vmem>>, %arg7: memref<1x1x128xf32, #tpu.memory_space<vmem>>, %arg8: memref<1x1x128xf32, #tpu.memory_space<vmem>>, %arg9: memref<1x1x128xf32, #tpu.memory_space<vmem>>, %arg10: memref<1x128x512xbf16, #tpu.memory_space<vmem>>, %arg11: memref<1x1x512xf32, #tpu.memory_space<vmem>>, %arg12: memref<1x512x128xbf16, #tpu.memory_space<vmem>>, %arg13: memref<1x1x128xf32, #tpu.memory_space<vmem>>, %arg14: memref<1x1x128xf32, #tpu.memory_space<vmem>>, %arg15: memref<1x1x128xf32, #tpu.memory_space<vmem>>, %arg16: memref<4x8x128xf32, #tpu.memory_space<vmem>>, %arg17: memref<4x8x128xf32, #tpu.memory_space<vmem>>, %arg18: memref<32x128xbf16, #tpu.memory_space<vmem>>) attributes {dimension_semantics = [#tpu.dimension_semantics<parallel>, #tpu.dimension_semantics<arbitrary>], iteration_bounds = array<i64: 2, 2>, scalar_prefetch = 0 : i64, scratch_operands = 2 : i64, tpu.core_type = #tpu.core_type<tc>, window_params = [{transform_indices = @transform_0, window_bounds = array<i64: 4, 8, 128>}, {pipeline_mode = #tpu.pipeline_mode<synchronous>, transform_indices = @transform_1, window_bounds = array<i64: 1, 8, 128>}, {transform_indices = @transform_2, window_bounds = array<i64: 1, 128, 384>}, {transform_indices = @transform_3, window_bounds = array<i64: 1, 1, 384>}, {transform_indices = @transform_4, window_bounds = array<i64: 1, 128, 128>}, {transform_indices = @transform_5, window_bounds = array<i64: 1, 1, 128>}, {transform_indices = @transform_6, window_bounds = array<i64: 1, 1, 128>}, {transform_indices = @transform_7, window_bounds = array<i64: 1, 1, 128>}, {transform_indices = @transform_8, window_bounds = array<i64: 1, 128, 512>}, {transform_indices = @transform_9, window_bounds = array<i64: 1, 1, 512>}, {transform_indices = @transform_10, window_bounds = array<i64: 1, 512, 128>}, {transform_indices = @transform_11, window_bounds = array<i64: 1, 1, 128>}, {transform_indices = @transform_12, window_bounds = array<i64: 1, 1, 128>}, {transform_indices = @transform_13, window_bounds = array<i64: 1, 1, 128>}, {transform_indices = @transform_14, window_bounds = array<i64: 4, 8, 128>}]} {
    %c0_i32 = arith.constant 0 : i32
    %0 = arith.cmpi eq, %arg1, %c0_i32 : i32
    %1 = arith.extui %0 : i1 to i32
    %c0_i32_0 = arith.constant 0 : i32
    %2 = arith.cmpi ne, %1, %c0_i32_0 : i32
    scf.if %2 {
      %c0_80 = arith.constant 0 : index
      %c0_81 = arith.constant 0 : index
      %c0_82 = arith.constant 0 : index
      %168 = vector.load %arg2[%c0_80, %c0_81, %c0_82] : memref<4x8x128xf32, #tpu.memory_space<vmem>>, vector<4x8x128xf32>
      %c0_83 = arith.constant 0 : index
      %c0_84 = arith.constant 0 : index
      %c0_85 = arith.constant 0 : index
      %169 = vector.load %arg3[%c0_83, %c0_84, %c0_85] : memref<1x8x128xf32, #tpu.memory_space<vmem>>, vector<1x8x128xf32>
      %170 = vector.broadcast %169 : vector<1x8x128xf32> to vector<4x8x128xf32>
      %171 = arith.addf %168, %170 : vector<4x8x128xf32>
      %c0_86 = arith.constant 0 : index
      %c0_87 = arith.constant 0 : index
      %c0_88 = arith.constant 0 : index
      %172 = vector.load %arg17[%c0_86, %c0_87, %c0_88] : memref<4x8x128xf32, #tpu.memory_space<vmem>>, vector<4x8x128xf32>
      tpu.vector_store %arg17[%c0_86, %c0_87, %c0_88], %171 {strides = array<i32>} : memref<4x8x128xf32, #tpu.memory_space<vmem>>, vector<4x8x128xf32>,
    } else {
    }
    %c0 = arith.constant 0 : index
    %c0_1 = arith.constant 0 : index
    %c0_2 = arith.constant 0 : index
    %3 = vector.load %arg17[%c0, %c0_1, %c0_2] : memref<4x8x128xf32, #tpu.memory_space<vmem>>, vector<4x8x128xf32>
    %4 = vector.shape_cast %3 : vector<4x8x128xf32> to vector<32x128xf32>
    %c0_3 = arith.constant 0 : index
    %c0_4 = arith.constant 0 : index
    %c0_5 = arith.constant 0 : index
    %5 = vector.load %arg8[%c0_3, %c0_4, %c0_5] : memref<1x1x128xf32, #tpu.memory_space<vmem>>, vector<1x1x128xf32>
    %6 = vector.shape_cast %5 : vector<1x1x128xf32> to vector<1x128xf32>
    %c0_6 = arith.constant 0 : index
    %c0_7 = arith.constant 0 : index
    %c0_8 = arith.constant 0 : index
    %7 = vector.load %arg9[%c0_6, %c0_7, %c0_8] : memref<1x1x128xf32, #tpu.memory_space<vmem>>, vector<1x1x128xf32>
    %8 = vector.shape_cast %7 : vector<1x1x128xf32> to vector<1x128xf32>
    %cst = arith.constant dense<0.000000e+00> : vector<32xf32>
    %9 = vector.multi_reduction <add>, %4, %cst [1] : vector<32x128xf32> to vector<32xf32>
    %10 = vector.shape_cast %9 : vector<32xf32> to vector<32x1xf32>
    %cst_9 = arith.constant 1.280000e+02 : f32
    %11 = vector.broadcast %cst_9 : f32 to vector<32x1xf32>
    %12 = arith.divf %10, %11 : vector<32x1xf32>
    %13 = vector.broadcast %12 : vector<32x1xf32> to vector<32x128xf32>
    %14 = arith.subf %4, %13 : vector<32x128xf32>
    %15 = arith.mulf %14, %14 : vector<32x128xf32>
    %cst_10 = arith.constant dense<0.000000e+00> : vector<32xf32>
    %16 = vector.multi_reduction <add>, %15, %cst_10 [1] : vector<32x128xf32> to vector<32xf32>
    %17 = vector.shape_cast %16 : vector<32xf32> to vector<32x1xf32>
    %cst_11 = arith.constant 0.00787401571 : f32
    %18 = vector.broadcast %cst_11 : f32 to vector<32x1xf32>
    %19 = arith.mulf %17, %18 : vector<32x1xf32>
    %20 = math.sqrt %19 : vector<32x1xf32>
    %cst_12 = arith.constant 9.99999997E-7 : f32
    %21 = vector.broadcast %cst_12 : f32 to vector<32x1xf32>
    %22 = arith.addf %20, %21 : vector<32x1xf32>
    %cst_13 = arith.constant 1.000000e+00 : f32
    %23 = vector.broadcast %cst_13 : f32 to vector<32x1xf32>
    %24 = arith.divf %23, %22 : vector<32x1xf32>
    %25 = vector.broadcast %24 : vector<32x1xf32> to vector<32x128xf32>
    %26 = arith.mulf %14, %25 : vector<32x128xf32>
    %27 = vector.broadcast %6 : vector<1x128xf32> to vector<32x128xf32>
    %28 = arith.mulf %26, %27 : vector<32x128xf32>
    %29 = vector.broadcast %8 : vector<1x128xf32> to vector<32x128xf32>
    %30 = arith.addf %28, %29 : vector<32x128xf32>
    %31 = arith.truncf %30 : vector<32x128xf32> to vector<32x128xbf16>
    %c0_14 = arith.constant 0 : index
    %c0_15 = arith.constant 0 : index
    %c0_16 = arith.constant 0 : index
    %32 = vector.load %arg4[%c0_14, %c0_15, %c0_16] : memref<1x128x384xbf16, #tpu.memory_space<vmem>>, vector<1x128x384xbf16>
    %33 = vector.shape_cast %32 : vector<1x128x384xbf16> to vector<128x384xbf16>
    %cst_17 = arith.constant dense<0.000000e+00> : vector<32x384xf32>
    %34 = tpu.matmul %31, %33, %cst_17 {dimension_numbers = #tpu.dot_dimension_numbers<[1], [0], [0], [1], [0, 0, 1, 1], [], []>} : vector<32x128xbf16>, vector<128x384xbf16>, vector<32x384xf32> -> vector<32x384xf32>
    %c0_18 = arith.constant 0 : index
    %c0_19 = arith.constant 0 : index
    %c0_20 = arith.constant 0 : index
    %35 = vector.load %arg5[%c0_18, %c0_19, %c0_20] : memref<1x1x384xf32, #tpu.memory_space<vmem>>, vector<1x1x384xf32>
    %36 = vector.shape_cast %35 : vector<1x1x384xf32> to vector<1x384xf32>
    %37 = vector.broadcast %36 : vector<1x384xf32> to vector<32x384xf32>
    %38 = arith.addf %34, %37 : vector<32x384xf32>
    %39 = vector.extract_strided_slice %38 {offsets = [0, 0], sizes = [32, 128], strides = [1, 1]} : vector<32x384xf32> to vector<32x128xf32>
    %40 = arith.truncf %39 : vector<32x128xf32> to vector<32x128xbf16>
    %41 = vector.shape_cast %40 : vector<32x128xbf16> to vector<4x8x128xbf16>
    %42 = vector.extract_strided_slice %38 {offsets = [0, 128], sizes = [32, 128], strides = [1, 1]} : vector<32x384xf32> to vector<32x128xf32>
    %43 = arith.truncf %42 : vector<32x128xf32> to vector<32x128xbf16>
    %44 = vector.shape_cast %43 : vector<32x128xbf16> to vector<4x8x128xbf16>
    %45 = vector.extract_strided_slice %38 {offsets = [0, 256], sizes = [32, 128], strides = [1, 1]} : vector<32x384xf32> to vector<32x128xf32>
    %46 = arith.truncf %45 : vector<32x128xf32> to vector<32x128xbf16>
    %47 = vector.shape_cast %46 : vector<32x128xbf16> to vector<4x8x128xbf16>
    %48 = vector.extract_strided_slice %41 {offsets = [0, 0, 0], sizes = [4, 8, 32], strides = [1, 1, 1]} : vector<4x8x128xbf16> to vector<4x8x32xbf16>
    %49 = vector.extract_strided_slice %44 {offsets = [0, 0, 0], sizes = [4, 8, 32], strides = [1, 1, 1]} : vector<4x8x128xbf16> to vector<4x8x32xbf16>
    "tpu.trace_start"() <{level = 10 : i32, message = "bqd,bkd->bqk"}> : () -> ()
    %cst_21 = arith.constant dense<0.000000e+00> : vector<4x8x8xf32>
    %50 = tpu.matmul %48, %49, %cst_21 {dimension_numbers = #tpu.dot_dimension_numbers<[2], [2], [1], [1], [0, 0, 0, 1, 1, 1], [0], [0]>} : vector<4x8x32xbf16>, vector<4x8x32xbf16>, vector<4x8x8xf32> -> vector<4x8x8xf32>
    "tpu.trace_stop"() : () -> ()
    %51 = vector.extract_strided_slice %41 {offsets = [0, 0, 32], sizes = [4, 8, 32], strides = [1, 1, 1]} : vector<4x8x128xbf16> to vector<4x8x32xbf16>
    %52 = vector.extract_strided_slice %44 {offsets = [0, 0, 32], sizes = [4, 8, 32], strides = [1, 1, 1]} : vector<4x8x128xbf16> to vector<4x8x32xbf16>
    "tpu.trace_start"() <{level = 10 : i32, message = "bqd,bkd->bqk"}> : () -> ()
    %cst_22 = arith.constant dense<0.000000e+00> : vector<4x8x8xf32>
    %53 = tpu.matmul %51, %52, %cst_22 {dimension_numbers = #tpu.dot_dimension_numbers<[2], [2], [1], [1], [0, 0, 0, 1, 1, 1], [0], [0]>} : vector<4x8x32xbf16>, vector<4x8x32xbf16>, vector<4x8x8xf32> -> vector<4x8x8xf32>
    "tpu.trace_stop"() : () -> ()
    %54 = vector.extract_strided_slice %41 {offsets = [0, 0, 64], sizes = [4, 8, 32], strides = [1, 1, 1]} : vector<4x8x128xbf16> to vector<4x8x32xbf16>
    %55 = vector.extract_strided_slice %44 {offsets = [0, 0, 64], sizes = [4, 8, 32], strides = [1, 1, 1]} : vector<4x8x128xbf16> to vector<4x8x32xbf16>
    "tpu.trace_start"() <{level = 10 : i32, message = "bqd,bkd->bqk"}> : () -> ()
    %cst_23 = arith.constant dense<0.000000e+00> : vector<4x8x8xf32>
    %56 = tpu.matmul %54, %55, %cst_23 {dimension_numbers = #tpu.dot_dimension_numbers<[2], [2], [1], [1], [0, 0, 0, 1, 1, 1], [0], [0]>} : vector<4x8x32xbf16>, vector<4x8x32xbf16>, vector<4x8x8xf32> -> vector<4x8x8xf32>
    "tpu.trace_stop"() : () -> ()
    %57 = vector.extract_strided_slice %41 {offsets = [0, 0, 96], sizes = [4, 8, 32], strides = [1, 1, 1]} : vector<4x8x128xbf16> to vector<4x8x32xbf16>
    %58 = vector.extract_strided_slice %44 {offsets = [0, 0, 96], sizes = [4, 8, 32], strides = [1, 1, 1]} : vector<4x8x128xbf16> to vector<4x8x32xbf16>
    "tpu.trace_start"() <{level = 10 : i32, message = "bqd,bkd->bqk"}> : () -> ()
    %cst_24 = arith.constant dense<0.000000e+00> : vector<4x8x8xf32>
    %59 = tpu.matmul %57, %58, %cst_24 {dimension_numbers = #tpu.dot_dimension_numbers<[2], [2], [1], [1], [0, 0, 0, 1, 1, 1], [0], [0]>} : vector<4x8x32xbf16>, vector<4x8x32xbf16>, vector<4x8x8xf32> -> vector<4x8x8xf32>
    "tpu.trace_stop"() : () -> ()
    %60 = tpu.concatenate %50, %53, %56, %59 in 1 : vector<4x8x8xf32>, vector<4x8x8xf32>, vector<4x8x8xf32>, vector<4x8x8xf32> -> vector<4x32x8xf32>
    %cst_25 = arith.constant 0.176776692 : f32
    %61 = vector.broadcast %cst_25 : f32 to vector<4x32x8xf32>
    %62 = arith.mulf %60, %61 : vector<4x32x8xf32>
    %cst_26 = arith.constant dense<0xFF800000> : vector<4x32xf32>
    %63 = vector.multi_reduction <maximumf>, %62, %cst_26 [2] : vector<4x32x8xf32> to vector<4x32xf32>
    %64 = vector.shape_cast %63 : vector<4x32xf32> to vector<4x32x1xf32>
    %65 = vector.broadcast %64 : vector<4x32x1xf32> to vector<4x32x8xf32>
    %66 = arith.subf %62, %65 : vector<4x32x8xf32>
    %67 = math.exp %66 : vector<4x32x8xf32>
    %cst_27 = arith.constant dense<0.000000e+00> : vector<4x32xf32>
    %68 = vector.multi_reduction <add>, %67, %cst_27 [2] : vector<4x32x8xf32> to vector<4x32xf32>
    %69 = vector.shape_cast %68 : vector<4x32xf32> to vector<4x32x1xf32>
    %70 = tpu.reciprocal %69 {approx = true} : vector<4x32x1xf32> -> vector<4x32x1xf32>
    %71 = vector.broadcast %70 : vector<4x32x1xf32> to vector<4x32x8xf32>
    %72 = arith.mulf %67, %71 : vector<4x32x8xf32>
    %73 = arith.truncf %72 : vector<4x32x8xf32> to vector<4x32x8xbf16>
    %74 = vector.extract_strided_slice %73 {offsets = [0, 0, 0], sizes = [4, 8, 8], strides = [1, 1, 1]} : vector<4x32x8xbf16> to vector<4x8x8xbf16>
    %75 = vector.extract_strided_slice %47 {offsets = [0, 0, 0], sizes = [4, 8, 32], strides = [1, 1, 1]} : vector<4x8x128xbf16> to vector<4x8x32xbf16>
    "tpu.trace_start"() <{level = 10 : i32, message = "bqk,bkd->bqd"}> : () -> ()
    %cst_28 = arith.constant dense<0.000000e+00> : vector<4x8x32xf32>
    %76 = tpu.matmul %74, %75, %cst_28 {dimension_numbers = #tpu.dot_dimension_numbers<[2], [1], [1], [2], [0, 0, 0, 1, 1, 2], [0], [0]>} : vector<4x8x8xbf16>, vector<4x8x32xbf16>, vector<4x8x32xf32> -> vector<4x8x32xf32>
    "tpu.trace_stop"() : () -> ()
    %77 = vector.shape_cast %76 : vector<4x8x32xf32> to vector<32x32xf32>
    %78 = arith.truncf %77 : vector<32x32xf32> to vector<32x32xbf16>
    %c0_29 = arith.constant 0 : index
    %c0_30 = arith.constant 0 : index
    %79 = vector.load %arg18[%c0_29, %c0_30] : memref<32x128xbf16, #tpu.memory_space<vmem>>, vector<32x32xbf16>
    tpu.vector_store %arg18[%c0_29, %c0_30], %78 {strides = array<i32>} : memref<32x128xbf16, #tpu.memory_space<vmem>>, vector<32x32xbf16>,
    %80 = vector.extract_strided_slice %73 {offsets = [0, 8, 0], sizes = [4, 8, 8], strides = [1, 1, 1]} : vector<4x32x8xbf16> to vector<4x8x8xbf16>
    %81 = vector.extract_strided_slice %47 {offsets = [0, 0, 32], sizes = [4, 8, 32], strides = [1, 1, 1]} : vector<4x8x128xbf16> to vector<4x8x32xbf16>
    "tpu.trace_start"() <{level = 10 : i32, message = "bqk,bkd->bqd"}> : () -> ()
    %cst_31 = arith.constant dense<0.000000e+00> : vector<4x8x32xf32>
    %82 = tpu.matmul %80, %81, %cst_31 {dimension_numbers = #tpu.dot_dimension_numbers<[2], [1], [1], [2], [0, 0, 0, 1, 1, 2], [0], [0]>} : vector<4x8x8xbf16>, vector<4x8x32xbf16>, vector<4x8x32xf32> -> vector<4x8x32xf32>
    "tpu.trace_stop"() : () -> ()
    %83 = vector.shape_cast %82 : vector<4x8x32xf32> to vector<32x32xf32>
    %84 = arith.truncf %83 : vector<32x32xf32> to vector<32x32xbf16>
    %c0_32 = arith.constant 0 : index
    %c32 = arith.constant 32 : index
    %85 = vector.load %arg18[%c0_32, %c32] : memref<32x128xbf16, #tpu.memory_space<vmem>>, vector<32x32xbf16>
    tpu.vector_store %arg18[%c0_32, %c32], %84 {strides = array<i32>} : memref<32x128xbf16, #tpu.memory_space<vmem>>, vector<32x32xbf16>,
    %86 = vector.extract_strided_slice %73 {offsets = [0, 16, 0], sizes = [4, 8, 8], strides = [1, 1, 1]} : vector<4x32x8xbf16> to vector<4x8x8xbf16>
    %87 = vector.extract_strided_slice %47 {offsets = [0, 0, 64], sizes = [4, 8, 32], strides = [1, 1, 1]} : vector<4x8x128xbf16> to vector<4x8x32xbf16>
    "tpu.trace_start"() <{level = 10 : i32, message = "bqk,bkd->bqd"}> : () -> ()
    %cst_33 = arith.constant dense<0.000000e+00> : vector<4x8x32xf32>
    %88 = tpu.matmul %86, %87, %cst_33 {dimension_numbers = #tpu.dot_dimension_numbers<[2], [1], [1], [2], [0, 0, 0, 1, 1, 2], [0], [0]>} : vector<4x8x8xbf16>, vector<4x8x32xbf16>, vector<4x8x32xf32> -> vector<4x8x32xf32>
    "tpu.trace_stop"() : () -> ()
    %89 = vector.shape_cast %88 : vector<4x8x32xf32> to vector<32x32xf32>
    %90 = arith.truncf %89 : vector<32x32xf32> to vector<32x32xbf16>
    %c0_34 = arith.constant 0 : index
    %c64 = arith.constant 64 : index
    %91 = vector.load %arg18[%c0_34, %c64] : memref<32x128xbf16, #tpu.memory_space<vmem>>, vector<32x32xbf16>
    tpu.vector_store %arg18[%c0_34, %c64], %90 {strides = array<i32>} : memref<32x128xbf16, #tpu.memory_space<vmem>>, vector<32x32xbf16>,
    %92 = vector.extract_strided_slice %73 {offsets = [0, 24, 0], sizes = [4, 8, 8], strides = [1, 1, 1]} : vector<4x32x8xbf16> to vector<4x8x8xbf16>
    %93 = vector.extract_strided_slice %47 {offsets = [0, 0, 96], sizes = [4, 8, 32], strides = [1, 1, 1]} : vector<4x8x128xbf16> to vector<4x8x32xbf16>
    "tpu.trace_start"() <{level = 10 : i32, message = "bqk,bkd->bqd"}> : () -> ()
    %cst_35 = arith.constant dense<0.000000e+00> : vector<4x8x32xf32>
    %94 = tpu.matmul %92, %93, %cst_35 {dimension_numbers = #tpu.dot_dimension_numbers<[2], [1], [1], [2], [0, 0, 0, 1, 1, 2], [0], [0]>} : vector<4x8x8xbf16>, vector<4x8x32xbf16>, vector<4x8x32xf32> -> vector<4x8x32xf32>
    "tpu.trace_stop"() : () -> ()
    %95 = vector.shape_cast %94 : vector<4x8x32xf32> to vector<32x32xf32>
    %96 = arith.truncf %95 : vector<32x32xf32> to vector<32x32xbf16>
    %c0_36 = arith.constant 0 : index
    %c96 = arith.constant 96 : index
    %97 = vector.load %arg18[%c0_36, %c96] : memref<32x128xbf16, #tpu.memory_space<vmem>>, vector<32x32xbf16>
    tpu.vector_store %arg18[%c0_36, %c96], %96 {strides = array<i32>} : memref<32x128xbf16, #tpu.memory_space<vmem>>, vector<32x32xbf16>,
    %c0_37 = arith.constant 0 : index
    %c0_38 = arith.constant 0 : index
    %98 = vector.load %arg18[%c0_37, %c0_38] : memref<32x128xbf16, #tpu.memory_space<vmem>>, vector<32x128xbf16>
    %c0_39 = arith.constant 0 : index
    %c0_40 = arith.constant 0 : index
    %c0_41 = arith.constant 0 : index
    %99 = vector.load %arg6[%c0_39, %c0_40, %c0_41] : memref<1x128x128xbf16, #tpu.memory_space<vmem>>, vector<1x128x128xbf16>
    %100 = vector.shape_cast %99 : vector<1x128x128xbf16> to vector<128x128xbf16>
    %cst_42 = arith.constant dense<0.000000e+00> : vector<32x128xf32>
    %101 = tpu.matmul %98, %100, %cst_42 {dimension_numbers = #tpu.dot_dimension_numbers<[1], [0], [0], [1], [0, 0, 1, 1], [], []>} : vector<32x128xbf16>, vector<128x128xbf16>, vector<32x128xf32> -> vector<32x128xf32>
    %c0_43 = arith.constant 0 : index
    %c0_44 = arith.constant 0 : index
    %c0_45 = arith.constant 0 : index
    %102 = vector.load %arg7[%c0_43, %c0_44, %c0_45] : memref<1x1x128xf32, #tpu.memory_space<vmem>>, vector<1x1x128xf32>
    %103 = vector.shape_cast %102 : vector<1x1x128xf32> to vector<1x128xf32>
    %104 = vector.broadcast %103 : vector<1x128xf32> to vector<32x128xf32>
    %105 = arith.addf %101, %104 : vector<32x128xf32>
    %106 = arith.addf %4, %105 : vector<32x128xf32>
    %c0_46 = arith.constant 0 : index
    %c0_47 = arith.constant 0 : index
    %c0_48 = arith.constant 0 : index
    %107 = vector.load %arg14[%c0_46, %c0_47, %c0_48] : memref<1x1x128xf32, #tpu.memory_space<vmem>>, vector<1x1x128xf32>
    %108 = vector.shape_cast %107 : vector<1x1x128xf32> to vector<1x128xf32>
    %c0_49 = arith.constant 0 : index
    %c0_50 = arith.constant 0 : index
    %c0_51 = arith.constant 0 : index
    %109 = vector.load %arg15[%c0_49, %c0_50, %c0_51] : memref<1x1x128xf32, #tpu.memory_space<vmem>>, vector<1x1x128xf32>
    %110 = vector.shape_cast %109 : vector<1x1x128xf32> to vector<1x128xf32>
    %cst_52 = arith.constant dense<0.000000e+00> : vector<32xf32>
    %111 = vector.multi_reduction <add>, %106, %cst_52 [1] : vector<32x128xf32> to vector<32xf32>
    %112 = vector.shape_cast %111 : vector<32xf32> to vector<32x1xf32>
    %cst_53 = arith.constant 1.280000e+02 : f32
    %113 = vector.broadcast %cst_53 : f32 to vector<32x1xf32>
    %114 = arith.divf %112, %113 : vector<32x1xf32>
    %115 = vector.broadcast %114 : vector<32x1xf32> to vector<32x128xf32>
    %116 = arith.subf %106, %115 : vector<32x128xf32>
    %117 = arith.mulf %116, %116 : vector<32x128xf32>
    %cst_54 = arith.constant dense<0.000000e+00> : vector<32xf32>
    %118 = vector.multi_reduction <add>, %117, %cst_54 [1] : vector<32x128xf32> to vector<32xf32>
    %119 = vector.shape_cast %118 : vector<32xf32> to vector<32x1xf32>
    %cst_55 = arith.constant 0.00787401571 : f32
    %120 = vector.broadcast %cst_55 : f32 to vector<32x1xf32>
    %121 = arith.mulf %119, %120 : vector<32x1xf32>
    %122 = math.sqrt %121 : vector<32x1xf32>
    %cst_56 = arith.constant 9.99999997E-7 : f32
    %123 = vector.broadcast %cst_56 : f32 to vector<32x1xf32>
    %124 = arith.addf %122, %123 : vector<32x1xf32>
    %cst_57 = arith.constant 1.000000e+00 : f32
    %125 = vector.broadcast %cst_57 : f32 to vector<32x1xf32>
    %126 = arith.divf %125, %124 : vector<32x1xf32>
    %127 = vector.broadcast %126 : vector<32x1xf32> to vector<32x128xf32>
    %128 = arith.mulf %116, %127 : vector<32x128xf32>
    %129 = vector.broadcast %108 : vector<1x128xf32> to vector<32x128xf32>
    %130 = arith.mulf %128, %129 : vector<32x128xf32>
    %131 = vector.broadcast %110 : vector<1x128xf32> to vector<32x128xf32>
    %132 = arith.addf %130, %131 : vector<32x128xf32>
    %133 = arith.truncf %132 : vector<32x128xf32> to vector<32x128xbf16>
    %c0_58 = arith.constant 0 : index
    %c0_59 = arith.constant 0 : index
    %c0_60 = arith.constant 0 : index
    %134 = vector.load %arg10[%c0_58, %c0_59, %c0_60] : memref<1x128x512xbf16, #tpu.memory_space<vmem>>, vector<1x128x512xbf16>
    %135 = vector.shape_cast %134 : vector<1x128x512xbf16> to vector<128x512xbf16>
    %cst_61 = arith.constant dense<0.000000e+00> : vector<32x512xf32>
    %136 = tpu.matmul %133, %135, %cst_61 {dimension_numbers = #tpu.dot_dimension_numbers<[1], [0], [0], [1], [0, 0, 1, 1], [], []>} : vector<32x128xbf16>, vector<128x512xbf16>, vector<32x512xf32> -> vector<32x512xf32>
    %c0_62 = arith.constant 0 : index
    %c0_63 = arith.constant 0 : index
    %c0_64 = arith.constant 0 : index
    %137 = vector.load %arg11[%c0_62, %c0_63, %c0_64] : memref<1x1x512xf32, #tpu.memory_space<vmem>>, vector<1x1x512xf32>
    %138 = vector.shape_cast %137 : vector<1x1x512xf32> to vector<1x512xf32>
    %139 = vector.broadcast %138 : vector<1x512xf32> to vector<32x512xf32>
    %140 = arith.addf %136, %139 : vector<32x512xf32>
    %cst_65 = arith.constant 5.000000e-01 : f32
    %141 = vector.broadcast %cst_65 : f32 to vector<32x512xf32>
    %142 = arith.mulf %141, %140 : vector<32x512xf32>
    %cst_66 = arith.constant 4.471500e-02 : f32
    %143 = vector.broadcast %cst_66 : f32 to vector<32x512xf32>
    %144 = arith.mulf %143, %140 : vector<32x512xf32>
    %145 = arith.mulf %144, %140 : vector<32x512xf32>
    %146 = arith.mulf %145, %140 : vector<32x512xf32>
    %147 = arith.addf %140, %146 : vector<32x512xf32>
    %cst_67 = arith.constant 0.797884583 : f32
    %148 = vector.broadcast %cst_67 : f32 to vector<32x512xf32>
    %149 = arith.mulf %148, %147 : vector<32x512xf32>
    %150 = math.tanh %149 : vector<32x512xf32>
    %cst_68 = arith.constant 1.000000e+00 : f32
    %151 = vector.broadcast %cst_68 : f32 to vector<32x512xf32>
    %152 = arith.addf %151, %150 : vector<32x512xf32>
    %153 = arith.mulf %142, %152 : vector<32x512xf32>
    %154 = arith.truncf %153 : vector<32x512xf32> to vector<32x512xbf16>
    %c0_69 = arith.constant 0 : index
    %c0_70 = arith.constant 0 : index
    %c0_71 = arith.constant 0 : index
    %155 = vector.load %arg12[%c0_69, %c0_70, %c0_71] : memref<1x512x128xbf16, #tpu.memory_space<vmem>>, vector<1x512x128xbf16>
    %156 = vector.shape_cast %155 : vector<1x512x128xbf16> to vector<512x128xbf16>
    %cst_72 = arith.constant dense<0.000000e+00> : vector<32x128xf32>
    %157 = tpu.matmul %154, %156, %cst_72 {dimension_numbers = #tpu.dot_dimension_numbers<[1], [0], [0], [1], [0, 0, 1, 1], [], []>} : vector<32x512xbf16>, vector<512x128xbf16>, vector<32x128xf32> -> vector<32x128xf32>
    %c0_73 = arith.constant 0 : index
    %c0_74 = arith.constant 0 : index
    %c0_75 = arith.constant 0 : index
    %158 = vector.load %arg13[%c0_73, %c0_74, %c0_75] : memref<1x1x128xf32, #tpu.memory_space<vmem>>, vector<1x1x128xf32>
    %159 = vector.shape_cast %158 : vector<1x1x128xf32> to vector<1x128xf32>
    %160 = vector.broadcast %159 : vector<1x128xf32> to vector<32x128xf32>
    %161 = arith.addf %157, %160 : vector<32x128xf32>
    %162 = arith.addf %106, %161 : vector<32x128xf32>
    %163 = vector.shape_cast %162 : vector<32x128xf32> to vector<4x8x128xf32>
    %c0_76 = arith.constant 0 : index
    %c0_77 = arith.constant 0 : index
    %c0_78 = arith.constant 0 : index
    %164 = vector.load %arg17[%c0_76, %c0_77, %c0_78] : memref<4x8x128xf32, #tpu.memory_space<vmem>>, vector<4x8x128xf32>
    tpu.vector_store %arg17[%c0_76, %c0_77, %c0_78], %163 {strides = array<i32>} : memref<4x8x128xf32, #tpu.memory_space<vmem>>, vector<4x8x128xf32>,
    %c1_i32 = arith.constant 1 : i32
    %165 = arith.cmpi eq, %arg1, %c1_i32 : i32
    %166 = arith.extui %165 : i1 to i32
    %c0_i32_79 = arith.constant 0 : i32
    %167 = arith.cmpi ne, %166, %c0_i32_79 : i32
    scf.if %167 {
      %168 = vector.shape_cast %162 : vector<32x128xf32> to vector<4x8x128xf32>
      %c0_80 = arith.constant 0 : index
      %c0_81 = arith.constant 0 : index
      %c0_82 = arith.constant 0 : index
      %169 = vector.load %arg16[%c0_80, %c0_81, %c0_82] : memref<4x8x128xf32, #tpu.memory_space<vmem>>, vector<4x8x128xf32>
      tpu.vector_store %arg16[%c0_80, %c0_81, %c0_82], %168 {strides = array<i32>} : memref<4x8x128xf32, #tpu.memory_space<vmem>>, vector<4x8x128xf32>,
    } else {
    }
    return
  }
  func.func @transform_0(%arg0: i32, %arg1: i32) -> (i32, i32, i32) {
    %c0_i32 = arith.constant 0 : i32
    %c0_i32_0 = arith.constant 0 : i32
    %c0_i32_1 = arith.constant 0 : i32
    return %arg0, %c0_i32, %c0_i32_0 : i32, i32, i32
  }
  func.func @transform_1(%arg0: i32, %arg1: i32) -> (i32, i32, i32) {
    %c0_i32 = arith.constant 0 : i32
    %c0_i32_0 = arith.constant 0 : i32
    %c0_i32_1 = arith.constant 0 : i32
    %c0_i32_2 = arith.constant 0 : i32
    return %c0_i32, %c0_i32_0, %c0_i32_1 : i32, i32, i32
  }
  func.func @transform_2(%arg0: i32, %arg1: i32) -> (i32, i32, i32) {
    %c0_i32 = arith.constant 0 : i32
    %c0_i32_0 = arith.constant 0 : i32
    %c0_i32_1 = arith.constant 0 : i32
    return %arg1, %c0_i32, %c0_i32_0 : i32, i32, i32
  }
  func.func @transform_3(%arg0: i32, %arg1: i32) -> (i32, i32, i32) {
    %c0_i32 = arith.constant 0 : i32
    %c0_i32_0 = arith.constant 0 : i32
    %c0_i32_1 = arith.constant 0 : i32
    return %arg1, %c0_i32, %c0_i32_0 : i32, i32, i32
  }
  func.func @transform_4(%arg0: i32, %arg1: i32) -> (i32, i32, i32) {
    %c0_i32 = arith.constant 0 : i32
    %c0_i32_0 = arith.constant 0 : i32
    %c0_i32_1 = arith.constant 0 : i32
    return %arg1, %c0_i32, %c0_i32_0 : i32, i32, i32
  }
  func.func @transform_5(%arg0: i32, %arg1: i32) -> (i32, i32, i32) {
    %c0_i32 = arith.constant 0 : i32
    %c0_i32_0 = arith.constant 0 : i32
    %c0_i32_1 = arith.constant 0 : i32
    return %arg1, %c0_i32, %c0_i32_0 : i32, i32, i32
  }
  func.func @transform_6(%arg0: i32, %arg1: i32) -> (i32, i32, i32) {
    %c0_i32 = arith.constant 0 : i32
    %c0_i32_0 = arith.constant 0 : i32
    %c0_i32_1 = arith.constant 0 : i32
    return %arg1, %c0_i32, %c0_i32_0 : i32, i32, i32
  }
  func.func @transform_7(%arg0: i32, %arg1: i32) -> (i32, i32, i32) {
    %c0_i32 = arith.constant 0 : i32
    %c0_i32_0 = arith.constant 0 : i32
    %c0_i32_1 = arith.constant 0 : i32
    return %arg1, %c0_i32, %c0_i32_0 : i32, i32, i32
  }
  func.func @transform_8(%arg0: i32, %arg1: i32) -> (i32, i32, i32) {
    %c0_i32 = arith.constant 0 : i32
    %c0_i32_0 = arith.constant 0 : i32
    %c0_i32_1 = arith.constant 0 : i32
    return %arg1, %c0_i32, %c0_i32_0 : i32, i32, i32
  }
  func.func @transform_9(%arg0: i32, %arg1: i32) -> (i32, i32, i32) {
    %c0_i32 = arith.constant 0 : i32
    %c0_i32_0 = arith.constant 0 : i32
    %c0_i32_1 = arith.constant 0 : i32
    return %arg1, %c0_i32, %c0_i32_0 : i32, i32, i32
  }
  func.func @transform_10(%arg0: i32, %arg1: i32) -> (i32, i32, i32) {
    %c0_i32 = arith.constant 0 : i32
    %c0_i32_0 = arith.constant 0 : i32
    %c0_i32_1 = arith.constant 0 : i32
    return %arg1, %c0_i32, %c0_i32_0 : i32, i32, i32
  }
  func.func @transform_11(%arg0: i32, %arg1: i32) -> (i32, i32, i32) {
    %c0_i32 = arith.constant 0 : i32
    %c0_i32_0 = arith.constant 0 : i32
    %c0_i32_1 = arith.constant 0 : i32
    return %arg1, %c0_i32, %c0_i32_0 : i32, i32, i32
  }
  func.func @transform_12(%arg0: i32, %arg1: i32) -> (i32, i32, i32) {
    %c0_i32 = arith.constant 0 : i32
    %c0_i32_0 = arith.constant 0 : i32
    %c0_i32_1 = arith.constant 0 : i32
    return %arg1, %c0_i32, %c0_i32_0 : i32, i32, i32
  }
  func.func @transform_13(%arg0: i32, %arg1: i32) -> (i32, i32, i32) {
    %c0_i32 = arith.constant 0 : i32
    %c0_i32_0 = arith.constant 0 : i32
    %c0_i32_1 = arith.constant 0 : i32
    return %arg1, %c0_i32, %c0_i32_0 : i32, i32, i32
  }
  func.func @transform_14(%arg0: i32, %arg1: i32) -> (i32, i32, i32) {
    %c0_i32 = arith.constant 0 : i32
    %c0_i32_0 = arith.constant 0 : i32
    %c0_i32_1 = arith.constant 0 : i32
    return %arg0, %c0_i32, %c0_i32_0 : i32, i32, i32
  }
}

</mosaic_0001>

<llo_original>
// kernel: tpu_custom_call.1
$region0: #{tpu_custom_call.1}
  #allocation0 [shape = 'u32[]', space=smem, size = 0x4, offset = 0x4, fixed_abs, tag = 'smem constant byte address 0x4 - core index']
  #allocation1 [shape = 'u32[144,128]{1,0:T(1,128)}', space=vmem, size = 0x12000, scoped, tag = 'internal scratch']
  #allocation2 [shape = 'f32[4,8,128]{2,1,0:T(8,128)}', space=vmem, size = 0x4000, scoped, tag = 'scratch operand']
  #allocation3 [shape = 'bf16[32,128]{1,0:T(16,128)(2,1)}', space=vmem, size = 0x2000, scoped, tag = 'scratch operand']
  %s0 = inlined_call_operand.hbm [shape: f32[8,8,128], index: 0, kind: input, shape index: {}]
  %s1 = inlined_call_operand.hbm [shape: f32[1,8,128], index: 1, kind: input, shape index: {}]
  %s2 = inlined_call_operand.hbm [shape: bf16[2,128,384], index: 2, kind: input, shape index: {}]
  %s3 = inlined_call_operand.vmem [shape: f32[2,1,384], index: 3, kind: input, shape index: {}]
  %s4 = inlined_call_operand.hbm [shape: bf16[2,128,128], index: 4, kind: input, shape index: {}]
  %s5 = inlined_call_operand.vmem [shape: f32[2,1,128], index: 5, kind: input, shape index: {}]
  %s6 = inlined_call_operand.vmem [shape: f32[2,1,128], index: 6, kind: input, shape index: {}]
  %s7 = inlined_call_operand.vmem [shape: f32[2,1,128], index: 7, kind: input, shape index: {}]
  %s8 = inlined_call_operand.hbm [shape: bf16[2,128,512], index: 8, kind: input, shape index: {}]
  %s9 = inlined_call_operand.vmem [shape: f32[2,1,512], index: 9, kind: input, shape index: {}]
  %s10 = inlined_call_operand.hbm [shape: bf16[2,512,128], index: 10, kind: input, shape index: {}]
  %s11 = inlined_call_operand.vmem [shape: f32[2,1,128], index: 11, kind: input, shape index: {}]
  %s12 = inlined_call_operand.vmem [shape: f32[2,1,128], index: 12, kind: input, shape index: {}]
  %s13 = inlined_call_operand.vmem [shape: f32[2,1,128], index: 13, kind: input, shape index: {}]
  %s14 = inlined_call_operand.hbm [shape: f32[8,8,128], index: 14, kind: output, shape index: {}]
  %s15 = sld [smem:[#allocation0]]
  $region121: #{tpu_custom_call.1} parent=0
    _
  %s17 = ssub.s32 1, %s15
  %s18 = scalar_select 0, %s17, %s15
  $region1: #{tpu_custom_call.1} parent=0
    #allocation4 [shape = 'u8[32768]{0}', space=vmem, size = 0x8000, scoped, tag = 'input window, operand 0']
    #allocation5 [shape = 's32[2]{0}', space=sflag, size = 0x8, scoped, tag = 'scoped memory for tpu_custom_call.1']
    #allocation6 [shape = 's32[2]{0}', space=sflag, size = 0x8, scoped, tag = 'scoped memory for tpu_custom_call.1']
    #allocation7 [shape = 'u8[4096]{0}', space=vmem, size = 0x1000, scoped, tag = 'input window, operand 1, single buffered']
    #allocation8 [shape = 's32[1]{0}', space=sflag, size = 0x4, scoped, tag = 'scoped memory for tpu_custom_call.1']
    #allocation9 [shape = 'u8[196608]{0}', space=vmem, size = 0x30000, scoped, tag = 'input window, operand 2']
    #allocation10 [shape = 'u8[65536]{0}', space=vmem, size = 0x10000, scoped, tag = 'input window, operand 4']
    #allocation11 [shape = 'u8[262144]{0}', space=vmem, size = 0x40000, scoped, tag = 'input window, operand 8']
    #allocation12 [shape = 'u8[262144]{0}', space=vmem, size = 0x40000, scoped, tag = 'input window, operand 10']
    #allocation13 [shape = 'u8[32768]{0}', space=vmem, size = 0x8000, scoped, tag = 'output window, operand 0']
    %19 = vsyncpa [#allocation5], 0
    %s20 = scalar_lea.sflag [#allocation5], 1
    %21 = vsyncpa %s20, 0
    %22 = vsyncpa [#allocation8], 0
    %23 = vsyncpa [#allocation6], 0
    %s24 = scalar_lea.sflag [#allocation6], 1
    %25 = vsyncpa %s24, 0
    loop: start=0, step=1, limit=6
    $region2: #{tpu_custom_call.1} parent=1 // loop_pre_header
      _
    $region3: #{tpu_custom_call.1} parent=1 // loop_header
      %s27 = sphi 0, %s31
      %p28 = scmp.ge.s32.totalorder %s27, 6
      %s34 = sphi 0, %s46
      %s35 = sphi 0, %s42
      %s36 = sphi 0, %s34
      %s37 = sphi 0, %s35
      %s38 = sphi 0, %s36
      %s39 = sphi 0, %s37
      %s49 = sphi 0, %s51
      %s52 = sphi 0, %s49
      %s53 = sphi 0, %s52
      %s69 = sphi 0, %s53
      %s73 = sphi 0, %s73
      %s75 = sphi 0, %s73
      %s76 = sphi 0, %s75
      %s90 = sphi 0, %s76
      %s96 = sphi 0, %s98
      %s99 = sphi 0, %s96
      %s100 = sphi 0, %s99
      %s116 = sphi 0, %s100
      %s122 = sphi 0, %s124
      %s125 = sphi 0, %s122
      %s126 = sphi 0, %s125
      %s142 = sphi 0, %s126
      %s148 = sphi 0, %s150
      %s151 = sphi 0, %s148
      %s152 = sphi 0, %s151
      %s168 = sphi 0, %s152
      %s174 = sphi 0, %s176
      %s177 = sphi 0, %s174
      %s178 = sphi 0, %s177
      %s194 = sphi 0, %s178
      %s200 = sphi 0, %s202
      %s203 = sphi 0, %s200
      %s204 = sphi 0, %s203
      %s220 = sphi 0, %s204
      %s226 = sphi 0, %s228
      %s229 = sphi 0, %s226
      %s230 = sphi 0, %s229
      %s246 = sphi 0, %s230
      %s252 = sphi 0, %s254
      %s255 = sphi 0, %s252
      %s256 = sphi 0, %s255
      %s272 = sphi 0, %s256
      %s278 = sphi 0, %s280
      %s281 = sphi 0, %s278
      %s282 = sphi 0, %s281
      %s298 = sphi 0, %s282
      %s304 = sphi 0, %s306
      %s307 = sphi 0, %s304
      %s308 = sphi 0, %s307
      %s324 = sphi 0, %s308
      %s330 = sphi 0, %s332
      %s333 = sphi 0, %s330
      %s334 = sphi 0, %s333
      %s350 = sphi 0, %s334
      %s356 = sphi 0, %s358
      %s359 = sphi 0, %s356
      %s360 = sphi 0, %s359
      %s376 = sphi 0, %s360
      %s382 = sphi 0, %s384
      %s385 = sphi 0, %s382
      %s386 = sphi 0, %s385
      %s402 = sphi 0, %s386
      %s408 = sphi 0, %s410
      %s411 = sphi 0, %s408
      %s412 = sphi 0, %s411
      %s428 = sphi 0, %s412
    $region4: #{tpu_custom_call.1} parent=1 // loop_header_branch
      %30 = sbr.rel (%p28) target = $region8
    $region5: #{tpu_custom_call.1} parent=1 // loop_body
      %s32 = ssub.s32 %s27, 1
      %s33 = ssub.s32 %s27, 2
      %s40 = sadd.s32 1, %s35
      %p41 = scmp.ge.s32.totalorder %s40, 2
      %s42 = scalar_select %p41, 0, %s40
      %s43 = sadd.s32 1, %s34
      %s44 = scalar_select %p41, %s43, %s34
      %p45 = scmp.ge.s32.totalorder %s44, 2
      %s46 = scalar_select %p45, 0, %s44
      %s47 = ssub.s32 %s34, %s46
      %p48 = scmp.eq.s32.totalorder %s47, 0
      %s50 = sadd.s32 %s49, 1
      %s51 = scalar_select %p48, %s49, %s50
      %p54 = pneg %p48
      %p55 = scmp.eq.s32.totalorder %s27, 3
      %p56 = por %p54, %p55
      %p57 = scmp.ne.s32.totalorder %s49, %s52
      %p58 = scmp.eq.s32.totalorder %s27, 0
      %p59 = por %p57, %p58
      %p60 = scmp.ne.s32.totalorder %s49, %s52
      %p61 = scmp.eq.s32.totalorder %s32, 3
      %p62 = por %p60, %p61
      %p63 = scmp.ne.s32.totalorder %s52, %s53
      %p64 = scmp.eq.s32.totalorder %s32, 0
      %p65 = por %p63, %p64
      %p66 = scmp.ne.s32.totalorder %s52, %s53
      %p67 = scmp.eq.s32.totalorder %s33, 3
      %p68 = por %p66, %p67
      %p70 = scmp.ne.s32.totalorder %s53, %s69
      %p71 = scmp.eq.s32.totalorder %s33, 0
      %p72 = por %p70, %p71
      %s74 = sadd.s32 %s73, 1
      %p77 = scmp.eq.s32.totalorder %s27, 3
      %p78 = scmp.ne.s32.totalorder %s73, %s75
      %p79 = scmp.eq.s32.totalorder %s27, 0
      %p80 = por %p78, %p79
      %p81 = scmp.ne.s32.totalorder %s73, %s75
      %p82 = scmp.eq.s32.totalorder %s32, 3
      %p83 = por %p81, %p82
      %p84 = scmp.ne.s32.totalorder %s75, %s76
      %p85 = scmp.eq.s32.totalorder %s32, 0
      %p86 = por %p84, %p85
      %p87 = scmp.ne.s32.totalorder %s75, %s76
      %p88 = scmp.eq.s32.totalorder %s33, 3
      %p89 = por %p87, %p88
      %p91 = scmp.ne.s32.totalorder %s76, %s90
      %p92 = scmp.eq.s32.totalorder %s33, 0
      %p93 = por %p91, %p92
      %s94 = ssub.s32 %s35, %s42
      %p95 = scmp.eq.s32.totalorder %s94, 0
      %s97 = sadd.s32 %s96, 1
      %s98 = scalar_select %p95, %s96, %s97
      %p101 = pneg %p95
      %p102 = scmp.eq.s32.totalorder %s27, 3
      %p103 = por %p101, %p102
      %p104 = scmp.ne.s32.totalorder %s96, %s99
      %p105 = scmp.eq.s32.totalorder %s27, 0
      %p106 = por %p104, %p105
      %p107 = scmp.ne.s32.totalorder %s96, %s99
      %p108 = scmp.eq.s32.totalorder %s32, 3
      %p109 = por %p107, %p108
      %p110 = scmp.ne.s32.totalorder %s99, %s100
      %p111 = scmp.eq.s32.totalorder %s32, 0
      %p112 = por %p110, %p111
      %p113 = scmp.ne.s32.totalorder %s99, %s100
      %p114 = scmp.eq.s32.totalorder %s33, 3
      %p115 = por %p113, %p114
      %p117 = scmp.ne.s32.totalorder %s100, %s116
      %p118 = scmp.eq.s32.totalorder %s33, 0
      %p119 = por %p117, %p118
      %s120 = ssub.s32 %s35, %s42
      %p121 = scmp.eq.s32.totalorder %s120, 0
      %s123 = sadd.s32 %s122, 1
      %s124 = scalar_select %p121, %s122, %s123
      %p127 = pneg %p121
      %p128 = scmp.eq.s32.totalorder %s27, 3
      %p129 = por %p127, %p128
      %p130 = scmp.ne.s32.totalorder %s122, %s125
      %p131 = scmp.eq.s32.totalorder %s27, 0
      %p132 = por %p130, %p131
      %p133 = scmp.ne.s32.totalorder %s122, %s125
      %p134 = scmp.eq.s32.totalorder %s32, 3
      %p135 = por %p133, %p134
      %p136 = scmp.ne.s32.totalorder %s125, %s126
      %p137 = scmp.eq.s32.totalorder %s32, 0
      %p138 = por %p136, %p137
      %p139 = scmp.ne.s32.totalorder %s125, %s126
      %p140 = scmp.eq.s32.totalorder %s33, 3
      %p141 = por %p139, %p140
      %p143 = scmp.ne.s32.totalorder %s126, %s142
      %p144 = scmp.eq.s32.totalorder %s33, 0
      %p145 = por %p143, %p144
      %s146 = ssub.s32 %s35, %s42
      %p147 = scmp.eq.s32.totalorder %s146, 0
      %s149 = sadd.s32 %s148, 1
      %s150 = scalar_select %p147, %s148, %s149
      %p153 = pneg %p147
      %p154 = scmp.eq.s32.totalorder %s27, 3
      %p155 = por %p153, %p154
      %p156 = scmp.ne.s32.totalorder %s148, %s151
      %p157 = scmp.eq.s32.totalorder %s27, 0
      %p158 = por %p156, %p157
      %p159 = scmp.ne.s32.totalorder %s148, %s151
      %p160 = scmp.eq.s32.totalorder %s32, 3
      %p161 = por %p159, %p160
      %p162 = scmp.ne.s32.totalorder %s151, %s152
      %p163 = scmp.eq.s32.totalorder %s32, 0
      %p164 = por %p162, %p163
      %p165 = scmp.ne.s32.totalorder %s151, %s152
      %p166 = scmp.eq.s32.totalorder %s33, 3
      %p167 = por %p165, %p166
      %p169 = scmp.ne.s32.totalorder %s152, %s168
      %p170 = scmp.eq.s32.totalorder %s33, 0
      %p171 = por %p169, %p170
      %s172 = ssub.s32 %s35, %s42
      %p173 = scmp.eq.s32.totalorder %s172, 0
      %s175 = sadd.s32 %s174, 1
      %s176 = scalar_select %p173, %s174, %s175
      %p179 = pneg %p173
      %p180 = scmp.eq.s32.totalorder %s27, 3
      %p181 = por %p179, %p180
      %p182 = scmp.ne.s32.totalorder %s174, %s177
      %p183 = scmp.eq.s32.totalorder %s27, 0
      %p184 = por %p182, %p183
      %p185 = scmp.ne.s32.totalorder %s174, %s177
      %p186 = scmp.eq.s32.totalorder %s32, 3
      %p187 = por %p185, %p186
      %p188 = scmp.ne.s32.totalorder %s177, %s178
      %p189 = scmp.eq.s32.totalorder %s32, 0
      %p190 = por %p188, %p189
      %p191 = scmp.ne.s32.totalorder %s177, %s178
      %p192 = scmp.eq.s32.totalorder %s33, 3
      %p193 = por %p191, %p192
      %p195 = scmp.ne.s32.totalorder %s178, %s194
      %p196 = scmp.eq.s32.totalorder %s33, 0
      %p197 = por %p195, %p196
      %s198 = ssub.s32 %s35, %s42
      %p199 = scmp.eq.s32.totalorder %s198, 0
      %s201 = sadd.s32 %s200, 1
      %s202 = scalar_select %p199, %s200, %s201
      %p205 = pneg %p199
      %p206 = scmp.eq.s32.totalorder %s27, 3
      %p207 = por %p205, %p206
      %p208 = scmp.ne.s32.totalorder %s200, %s203
      %p209 = scmp.eq.s32.totalorder %s27, 0
      %p210 = por %p208, %p209
      %p211 = scmp.ne.s32.totalorder %s200, %s203
      %p212 = scmp.eq.s32.totalorder %s32, 3
      %p213 = por %p211, %p212
      %p214 = scmp.ne.s32.totalorder %s203, %s204
      %p215 = scmp.eq.s32.totalorder %s32, 0
      %p216 = por %p214, %p215
      %p217 = scmp.ne.s32.totalorder %s203, %s204
      %p218 = scmp.eq.s32.totalorder %s33, 3
      %p219 = por %p217, %p218
      %p221 = scmp.ne.s32.totalorder %s204, %s220
      %p222 = scmp.eq.s32.totalorder %s33, 0
      %p223 = por %p221, %p222
      %s224 = ssub.s32 %s35, %s42
      %p225 = scmp.eq.s32.totalorder %s224, 0
      %s227 = sadd.s32 %s226, 1
      %s228 = scalar_select %p225, %s226, %s227
      %p231 = pneg %p225
      %p232 = scmp.eq.s32.totalorder %s27, 3
      %p233 = por %p231, %p232
      %p234 = scmp.ne.s32.totalorder %s226, %s229
      %p235 = scmp.eq.s32.totalorder %s27, 0
      %p236 = por %p234, %p235
      %p237 = scmp.ne.s32.totalorder %s226, %s229
      %p238 = scmp.eq.s32.totalorder %s32, 3
      %p239 = por %p237, %p238
      %p240 = scmp.ne.s32.totalorder %s229, %s230
      %p241 = scmp.eq.s32.totalorder %s32, 0
      %p242 = por %p240, %p241
      %p243 = scmp.ne.s32.totalorder %s229, %s230
      %p244 = scmp.eq.s32.totalorder %s33, 3
      %p245 = por %p243, %p244
      %p247 = scmp.ne.s32.totalorder %s230, %s246
      %p248 = scmp.eq.s32.totalorder %s33, 0
      %p249 = por %p247, %p248
      %s250 = ssub.s32 %s35, %s42
      %p251 = scmp.eq.s32.totalorder %s250, 0
      %s253 = sadd.s32 %s252, 1
      %s254 = scalar_select %p251, %s252, %s253
      %p257 = pneg %p251
      %p258 = scmp.eq.s32.totalorder %s27, 3
      %p259 = por %p257, %p258
      %p260 = scmp.ne.s32.totalorder %s252, %s255
      %p261 = scmp.eq.s32.totalorder %s27, 0
      %p262 = por %p260, %p261
      %p263 = scmp.ne.s32.totalorder %s252, %s255
      %p264 = scmp.eq.s32.totalorder %s32, 3
      %p265 = por %p263, %p264
      %p266 = scmp.ne.s32.totalorder %s255, %s256
      %p267 = scmp.eq.s32.totalorder %s32, 0
      %p268 = por %p266, %p267
      %p269 = scmp.ne.s32.totalorder %s255, %s256
      %p270 = scmp.eq.s32.totalorder %s33, 3
      %p271 = por %p269, %p270
      %p273 = scmp.ne.s32.totalorder %s256, %s272
      %p274 = scmp.eq.s32.totalorder %s33, 0
      %p275 = por %p273, %p274
      %s276 = ssub.s32 %s35, %s42
      %p277 = scmp.eq.s32.totalorder %s276, 0
      %s279 = sadd.s32 %s278, 1
      %s280 = scalar_select %p277, %s278, %s279
      %p283 = pneg %p277
      %p284 = scmp.eq.s32.totalorder %s27, 3
      %p285 = por %p283, %p284
      %p286 = scmp.ne.s32.totalorder %s278, %s281
      %p287 = scmp.eq.s32.totalorder %s27, 0
      %p288 = por %p286, %p287
      %p289 = scmp.ne.s32.totalorder %s278, %s281
      %p290 = scmp.eq.s32.totalorder %s32, 3
      %p291 = por %p289, %p290
      %p292 = scmp.ne.s32.totalorder %s281, %s282
      %p293 = scmp.eq.s32.totalorder %s32, 0
      %p294 = por %p292, %p293
      %p295 = scmp.ne.s32.totalorder %s281, %s282
      %p296 = scmp.eq.s32.totalorder %s33, 3
      %p297 = por %p295, %p296
      %p299 = scmp.ne.s32.totalorder %s282, %s298
      %p300 = scmp.eq.s32.totalorder %s33, 0
      %p301 = por %p299, %p300
      %s302 = ssub.s32 %s35, %s42
      %p303 = scmp.eq.s32.totalorder %s302, 0
      %s305 = sadd.s32 %s304, 1
      %s306 = scalar_select %p303, %s304, %s305
      %p309 = pneg %p303
      %p310 = scmp.eq.s32.totalorder %s27, 3
      %p311 = por %p309, %p310
      %p312 = scmp.ne.s32.totalorder %s304, %s307
      %p313 = scmp.eq.s32.totalorder %s27, 0
      %p314 = por %p312, %p313
      %p315 = scmp.ne.s32.totalorder %s304, %s307
      %p316 = scmp.eq.s32.totalorder %s32, 3
      %p317 = por %p315, %p316
      %p318 = scmp.ne.s32.totalorder %s307, %s308
      %p319 = scmp.eq.s32.totalorder %s32, 0
      %p320 = por %p318, %p319
      %p321 = scmp.ne.s32.totalorder %s307, %s308
      %p322 = scmp.eq.s32.totalorder %s33, 3
      %p323 = por %p321, %p322
      %p325 = scmp.ne.s32.totalorder %s308, %s324
      %p326 = scmp.eq.s32.totalorder %s33, 0
      %p327 = por %p325, %p326
      %s328 = ssub.s32 %s35, %s42
      %p329 = scmp.eq.s32.totalorder %s328, 0
      %s331 = sadd.s32 %s330, 1
      %s332 = scalar_select %p329, %s330, %s331
      %p335 = pneg %p329
      %p336 = scmp.eq.s32.totalorder %s27, 3
      %p337 = por %p335, %p336
      %p338 = scmp.ne.s32.totalorder %s330, %s333
      %p339 = scmp.eq.s32.totalorder %s27, 0
      %p340 = por %p338, %p339
      %p341 = scmp.ne.s32.totalorder %s330, %s333
      %p342 = scmp.eq.s32.totalorder %s32, 3
      %p343 = por %p341, %p342
      %p344 = scmp.ne.s32.totalorder %s333, %s334
      %p345 = scmp.eq.s32.totalorder %s32, 0
      %p346 = por %p344, %p345
      %p347 = scmp.ne.s32.totalorder %s333, %s334
      %p348 = scmp.eq.s32.totalorder %s33, 3
      %p349 = por %p347, %p348
      %p351 = scmp.ne.s32.totalorder %s334, %s350
      %p352 = scmp.eq.s32.totalorder %s33, 0
      %p353 = por %p351, %p352
      %s354 = ssub.s32 %s35, %s42
      %p355 = scmp.eq.s32.totalorder %s354, 0
      %s357 = sadd.s32 %s356, 1
      %s358 = scalar_select %p355, %s356, %s357
      %p361 = pneg %p355
      %p362 = scmp.eq.s32.totalorder %s27, 3
      %p363 = por %p361, %p362
      %p364 = scmp.ne.s32.totalorder %s356, %s359
      %p365 = scmp.eq.s32.totalorder %s27, 0
      %p366 = por %p364, %p365
      %p367 = scmp.ne.s32.totalorder %s356, %s359
      %p368 = scmp.eq.s32.totalorder %s32, 3
      %p369 = por %p367, %p368
      %p370 = scmp.ne.s32.totalorder %s359, %s360
      %p371 = scmp.eq.s32.totalorder %s32, 0
      %p372 = por %p370, %p371
      %p373 = scmp.ne.s32.totalorder %s359, %s360
      %p374 = scmp.eq.s32.totalorder %s33, 3
      %p375 = por %p373, %p374
      %p377 = scmp.ne.s32.totalorder %s360, %s376
      %p378 = scmp.eq.s32.totalorder %s33, 0
      %p379 = por %p377, %p378
      %s380 = ssub.s32 %s35, %s42
      %p381 = scmp.eq.s32.totalorder %s380, 0
      %s383 = sadd.s32 %s382, 1
      %s384 = scalar_select %p381, %s382, %s383
      %p387 = pneg %p381
      %p388 = scmp.eq.s32.totalorder %s27, 3
      %p389 = por %p387, %p388
      %p390 = scmp.ne.s32.totalorder %s382, %s385
      %p391 = scmp.eq.s32.totalorder %s27, 0
      %p392 = por %p390, %p391
      %p393 = scmp.ne.s32.totalorder %s382, %s385
      %p394 = scmp.eq.s32.totalorder %s32, 3
      %p395 = por %p393, %p394
      %p396 = scmp.ne.s32.totalorder %s385, %s386
      %p397 = scmp.eq.s32.totalorder %s32, 0
      %p398 = por %p396, %p397
      %p399 = scmp.ne.s32.totalorder %s385, %s386
      %p400 = scmp.eq.s32.totalorder %s33, 3
      %p401 = por %p399, %p400
      %p403 = scmp.ne.s32.totalorder %s386, %s402
      %p404 = scmp.eq.s32.totalorder %s33, 0
      %p405 = por %p403, %p404
      %s406 = ssub.s32 %s34, %s46
      %p407 = scmp.eq.s32.totalorder %s406, 0
      %s409 = sadd.s32 %s408, 1
      %s410 = scalar_select %p407, %s408, %s409
      %p413 = pneg %p407
      %p414 = scmp.eq.s32.totalorder %s27, 3
      %p415 = por %p413, %p414
      %p416 = scmp.ne.s32.totalorder %s408, %s411
      %p417 = scmp.eq.s32.totalorder %s27, 0
      %p418 = por %p416, %p417
      %p419 = scmp.ne.s32.totalorder %s408, %s411
      %p420 = scmp.eq.s32.totalorder %s32, 3
      %p421 = por %p419, %p420
      %p422 = scmp.ne.s32.totalorder %s411, %s412
      %p423 = scmp.eq.s32.totalorder %s32, 0
      %p424 = por %p422, %p423
      %p425 = scmp.ne.s32.totalorder %s411, %s412
      %p426 = scmp.eq.s32.totalorder %s33, 3
      %p427 = por %p425, %p426
      %p429 = scmp.ne.s32.totalorder %s412, %s428
      %p430 = scmp.eq.s32.totalorder %s33, 0
      %p431 = por %p429, %p430
      %p432 = scmp.le.s32.totalorder 1, %s27
      %p433 = scmp.lt.s32.totalorder %s27, 5
      %p434 = pnand %p432, %p433
      %p435 = pneg %p434
      // Predicated region
      $region9: #{tpu_custom_call.1} parent=5 // pred_check
        _
      $region10: #{tpu_custom_call.1} parent=5 // pred_check_branch
        %437 = sbr.rel (%p434) target = $region12
      $region11: #{tpu_custom_call.1} parent=5 // pred_region
        %s438 = ssub.s32 %s27, 1
        // Predicated region
        $region13: #{tpu_custom_call.1} parent=11 // pred_check
          %p439 = pneg %p86
        $region14: #{tpu_custom_call.1} parent=11 // pred_check_branch
          %441 = sbr.rel (%p439) target = $region16
        $region15: #{tpu_custom_call.1} parent=11 // pred_region
          %s443 = ssub.s32 128, 128
          %444 = vsyncadd [#allocation8], %s443
          %s446 = sshll.u32 [#allocation7], 4
          %s447 = int_to_ptr.vmem [resolvable:$true] %s446
          %449 = dma.hbm_to_vmem [thread:$0]  %s1, 128, %s447, [#allocation8]
        $region16: #{tpu_custom_call.1} parent=11 // pred_fallthru
          _
      $region12: #{tpu_custom_call.1} parent=5 // pred_fallthru
        _
      %p450 = scmp.lt.s32.totalorder %s27, 4
      // Predicated region
      $region17: #{tpu_custom_call.1} parent=5 // pred_check
        %p451 = pneg %p450
      $region18: #{tpu_custom_call.1} parent=5 // pred_check_branch
        %453 = sbr.rel (%p451) target = $region20
      $region19: #{tpu_custom_call.1} parent=5 // pred_region
        // Predicated region
        $region21: #{tpu_custom_call.1} parent=19 // pred_check
          %p454 = pneg %p59
        $region22: #{tpu_custom_call.1} parent=19 // pred_check_branch
          %456 = sbr.rel (%p454) target = $region24
        $region23: #{tpu_custom_call.1} parent=19 // pred_region
          %s457 = sand.u32 %s27, 1
          %s458 = scalar_lea.sflag [#allocation5], %s457
          %s459 = sand.u32 %s49, 1
          %s460 = smul.addr %s459, 32
          %s461 = scalar_lea.vmem [#allocation4], %s460
          %s462 = smul.u32 4, %s34
          %s464 = ssub.s32 512, 512
          %465 = vsyncadd %s458, %s464
          %s466 = smul.addr %s462, 128
          %s467 = scalar_lea.hbm %s0, %s466
          %s468 = sshll.u32 %s461, 4
          %s469 = int_to_ptr.vmem [resolvable:$true] %s468
          %474 = dma.hbm_to_vmem [thread:$0]  %s467, 512, %s469, %s458, 128, 128, 8
        $region24: #{tpu_custom_call.1} parent=19 // pred_fallthru
          _
        // Predicated region
        $region25: #{tpu_custom_call.1} parent=19 // pred_check
          %p475 = pneg %p106
        $region26: #{tpu_custom_call.1} parent=19 // pred_check_branch
          %477 = sbr.rel (%p475) target = $region28
        $region27: #{tpu_custom_call.1} parent=19 // pred_region
          %s478 = sand.u32 %s27, 1
          %s479 = scalar_lea.sflag [#allocation5], %s478
          %s480 = sand.u32 %s96, 1
          %s481 = smul.addr %s480, 192
          %s482 = scalar_lea.vmem [#allocation9], %s481
          %s484 = ssub.s32 3072, 3072
          %485 = vsyncadd %s479, %s484
          %s486 = smul.addr %s35, 48
          %s487 = smul.addr %s486, 64
          %s488 = scalar_lea.hbm %s2, %s487
          %s489 = sshll.u32 %s482, 4
          %s490 = int_to_ptr.vmem [resolvable:$true] %s489
          %495 = dma.hbm_to_vmem [thread:$0]  %s488, 3072, %s490, %s479, 192, 192, 12
        $region28: #{tpu_custom_call.1} parent=19 // pred_fallthru
          _
        // Predicated region
        $region29: #{tpu_custom_call.1} parent=19 // pred_check
          %p496 = pneg %p132
        $region30: #{tpu_custom_call.1} parent=19 // pred_check_branch
          %498 = sbr.rel (%p496) target = $region32
        $region31: #{tpu_custom_call.1} parent=19 // pred_region
          %p499 = scmp.lt.s32.totalorder %s35, 1
          %s500 = scalar_select %p499, %s35, 1
          %s501 = smul.addr %s500, 3
          %s502 = scalar_lea.vmem %s3, %s501
        $region32: #{tpu_custom_call.1} parent=19 // pred_fallthru
          _
        // Predicated region
        $region33: #{tpu_custom_call.1} parent=19 // pred_check
          %p503 = pneg %p158
        $region34: #{tpu_custom_call.1} parent=19 // pred_check_branch
          %505 = sbr.rel (%p503) target = $region36
        $region35: #{tpu_custom_call.1} parent=19 // pred_region
          %s506 = sand.u32 %s27, 1
          %s507 = scalar_lea.sflag [#allocation5], %s506
          %s508 = sand.u32 %s148, 1
          %s509 = smul.addr %s508, 64
          %s510 = scalar_lea.vmem [#allocation10], %s509
          %s512 = ssub.s32 1024, 1024
          %513 = vsyncadd %s507, %s512
          %s514 = smul.addr %s35, 16
          %s515 = smul.addr %s514, 64
          %s516 = scalar_lea.hbm %s4, %s515
          %s517 = sshll.u32 %s510, 4
          %s518 = int_to_ptr.vmem [resolvable:$true] %s517
          %523 = dma.hbm_to_vmem [thread:$0]  %s516, 1024, %s518, %s507, 64, 64, 4
        $region36: #{tpu_custom_call.1} parent=19 // pred_fallthru
          _
        // Predicated region
        $region37: #{tpu_custom_call.1} parent=19 // pred_check
          %p524 = pneg %p184
        $region38: #{tpu_custom_call.1} parent=19 // pred_check_branch
          %526 = sbr.rel (%p524) target = $region40
        $region39: #{tpu_custom_call.1} parent=19 // pred_region
          %p527 = scmp.lt.s32.totalorder %s35, 1
          %s528 = scalar_select %p527, %s35, 1
          %s529 = scalar_lea.vmem %s5, %s528
        $region40: #{tpu_custom_call.1} parent=19 // pred_fallthru
          _
        // Predicated region
        $region41: #{tpu_custom_call.1} parent=19 // pred_check
          %p530 = pneg %p210
        $region42: #{tpu_custom_call.1} parent=19 // pred_check_branch
          %532 = sbr.rel (%p530) target = $region44
        $region43: #{tpu_custom_call.1} parent=19 // pred_region
          %p533 = scmp.lt.s32.totalorder %s35, 1
          %s534 = scalar_select %p533, %s35, 1
          %s535 = scalar_lea.vmem %s6, %s534
        $region44: #{tpu_custom_call.1} parent=19 // pred_fallthru
          _
        // Predicated region
        $region45: #{tpu_custom_call.1} parent=19 // pred_check
          %p536 = pneg %p236
        $region46: #{tpu_custom_call.1} parent=19 // pred_check_branch
          %538 = sbr.rel (%p536) target = $region48
        $region47: #{tpu_custom_call.1} parent=19 // pred_region
          %p539 = scmp.lt.s32.totalorder %s35, 1
          %s540 = scalar_select %p539, %s35, 1
          %s541 = scalar_lea.vmem %s7, %s540
        $region48: #{tpu_custom_call.1} parent=19 // pred_fallthru
          _
        // Predicated region
        $region49: #{tpu_custom_call.1} parent=19 // pred_check
          %p542 = pneg %p262
        $region50: #{tpu_custom_call.1} parent=19 // pred_check_branch
          %544 = sbr.rel (%p542) target = $region52
        $region51: #{tpu_custom_call.1} parent=19 // pred_region
          %s545 = sand.u32 %s27, 1
          %s546 = scalar_lea.sflag [#allocation5], %s545
          %s547 = sand.u32 %s252, 1
          %s548 = smul.addr %s547, 256
          %s549 = scalar_lea.vmem [#allocation11], %s548
          %s551 = ssub.s32 4096, 4096
          %552 = vsyncadd %s546, %s551
          %s553 = smul.addr %s35, 64
          %s554 = smul.addr %s553, 64
          %s555 = scalar_lea.hbm %s8, %s554
          %s556 = sshll.u32 %s549, 4
          %s557 = int_to_ptr.vmem [resolvable:$true] %s556
          %562 = dma.hbm_to_vmem [thread:$0]  %s555, 4096, %s557, %s546, 256, 256, 16
        $region52: #{tpu_custom_call.1} parent=19 // pred_fallthru
          _
        // Predicated region
        $region53: #{tpu_custom_call.1} parent=19 // pred_check
          %p563 = pneg %p288
        $region54: #{tpu_custom_call.1} parent=19 // pred_check_branch
          %565 = sbr.rel (%p563) target = $region56
        $region55: #{tpu_custom_call.1} parent=19 // pred_region
          %p566 = scmp.lt.s32.totalorder %s35, 1
          %s567 = scalar_select %p566, %s35, 1
          %s568 = smul.addr %s567, 4
          %s569 = scalar_lea.vmem %s9, %s568
        $region56: #{tpu_custom_call.1} parent=19 // pred_fallthru
          _
        // Predicated region
        $region57: #{tpu_custom_call.1} parent=19 // pred_check
          %p570 = pneg %p314
        $region58: #{tpu_custom_call.1} parent=19 // pred_check_branch
          %572 = sbr.rel (%p570) target = $region60
        $region59: #{tpu_custom_call.1} parent=19 // pred_region
          %s573 = sand.u32 %s27, 1
          %s574 = scalar_lea.sflag [#allocation5], %s573
          %s575 = sand.u32 %s304, 1
          %s576 = smul.addr %s575, 256
          %s577 = scalar_lea.vmem [#allocation12], %s576
          %s579 = ssub.s32 4096, 4096
          %580 = vsyncadd %s574, %s579
          %s581 = smul.addr %s35, 64
          %s582 = smul.addr %s581, 64
          %s583 = scalar_lea.hbm %s10, %s582
          %s584 = sshll.u32 %s577, 4
          %s585 = int_to_ptr.vmem [resolvable:$true] %s584
          %590 = dma.hbm_to_vmem [thread:$0]  %s583, 4096, %s585, %s574, 64, 64, 4
        $region60: #{tpu_custom_call.1} parent=19 // pred_fallthru
          _
        // Predicated region
        $region61: #{tpu_custom_call.1} parent=19 // pred_check
          %p591 = pneg %p340
        $region62: #{tpu_custom_call.1} parent=19 // pred_check_branch
          %593 = sbr.rel (%p591) target = $region64
        $region63: #{tpu_custom_call.1} parent=19 // pred_region
          %p594 = scmp.lt.s32.totalorder %s35, 1
          %s595 = scalar_select %p594, %s35, 1
          %s596 = scalar_lea.vmem %s11, %s595
        $region64: #{tpu_custom_call.1} parent=19 // pred_fallthru
          _
        // Predicated region
        $region65: #{tpu_custom_call.1} parent=19 // pred_check
          %p597 = pneg %p366
        $region66: #{tpu_custom_call.1} parent=19 // pred_check_branch
          %599 = sbr.rel (%p597) target = $region68
        $region67: #{tpu_custom_call.1} parent=19 // pred_region
          %p600 = scmp.lt.s32.totalorder %s35, 1
          %s601 = scalar_select %p600, %s35, 1
          %s602 = scalar_lea.vmem %s12, %s601
        $region68: #{tpu_custom_call.1} parent=19 // pred_fallthru
          _
        // Predicated region
        $region69: #{tpu_custom_call.1} parent=19 // pred_check
          %p603 = pneg %p392
        $region70: #{tpu_custom_call.1} parent=19 // pred_check_branch
          %605 = sbr.rel (%p603) target = $region72
        $region71: #{tpu_custom_call.1} parent=19 // pred_region
          %p606 = scmp.lt.s32.totalorder %s35, 1
          %s607 = scalar_select %p606, %s35, 1
          %s608 = scalar_lea.vmem %s13, %s607
        $region72: #{tpu_custom_call.1} parent=19 // pred_fallthru
          _
      $region20: #{tpu_custom_call.1} parent=5 // pred_fallthru
        _
      %p609 = scmp.le.s32.totalorder 1, %s27
      %p610 = scmp.lt.s32.totalorder %s27, 5
      %p611 = pnand %p609, %p610
      %p612 = pneg %p611
      // Predicated region
      $region73: #{tpu_custom_call.1} parent=5 // pred_check
        _
      $region74: #{tpu_custom_call.1} parent=5 // pred_check_branch
        %614 = sbr.rel (%p611) target = $region76
      $region75: #{tpu_custom_call.1} parent=5 // pred_region
        %s615 = ssub.s32 %s27, 1
        %s616 = sand.u32 %s32, 1
        %s617 = scalar_lea.sflag [#allocation5], %s616
        %s618 = sand.u32 %s52, 1
        %s619 = smul.addr %s618, 32
        %s620 = scalar_lea.vmem [#allocation4], %s619
        // Predicated region
        $region77: #{tpu_custom_call.1} parent=75 // pred_check
          %p621 = pneg %p65
        $region78: #{tpu_custom_call.1} parent=75 // pred_check_branch
          %623 = sbr.rel (%p621) target = $region80
        $region79: #{tpu_custom_call.1} parent=75 // pred_region
          %624 = dma.done %s617, 512
        $region80: #{tpu_custom_call.1} parent=75 // pred_fallthru
          _
        // Predicated region
        $region81: #{tpu_custom_call.1} parent=75 // pred_check
          %p625 = pneg %p86
        $region82: #{tpu_custom_call.1} parent=75 // pred_check_branch
          %627 = sbr.rel (%p625) target = $region84
        $region83: #{tpu_custom_call.1} parent=75 // pred_region
          %628 = dma.done [#allocation8], 128
        $region84: #{tpu_custom_call.1} parent=75 // pred_fallthru
          _
        %s629 = sand.u32 %s32, 1
        %s630 = scalar_lea.sflag [#allocation5], %s629
        %s631 = sand.u32 %s99, 1
        %s632 = smul.addr %s631, 192
        %s633 = scalar_lea.vmem [#allocation9], %s632
        // Predicated region
        $region85: #{tpu_custom_call.1} parent=75 // pred_check
          %p634 = pneg %p112
        $region86: #{tpu_custom_call.1} parent=75 // pred_check_branch
          %636 = sbr.rel (%p634) target = $region88
        $region87: #{tpu_custom_call.1} parent=75 // pred_region
          %637 = dma.done %s630, 3072
        $region88: #{tpu_custom_call.1} parent=75 // pred_fallthru
          _
        %s638 = sand.u32 %s32, 1
        %s639 = scalar_lea.sflag [#allocation5], %s638
        %s640 = sand.u32 %s151, 1
        %s641 = smul.addr %s640, 64
        %s642 = scalar_lea.vmem [#allocation10], %s641
        // Predicated region
        $region89: #{tpu_custom_call.1} parent=75 // pred_check
          %p643 = pneg %p164
        $region90: #{tpu_custom_call.1} parent=75 // pred_check_branch
          %645 = sbr.rel (%p643) target = $region92
        $region91: #{tpu_custom_call.1} parent=75 // pred_region
          %646 = dma.done %s639, 1024
        $region92: #{tpu_custom_call.1} parent=75 // pred_fallthru
          _
        %s647 = sand.u32 %s32, 1
        %s648 = scalar_lea.sflag [#allocation5], %s647
        %s649 = sand.u32 %s255, 1
        %s650 = smul.addr %s649, 256
        %s651 = scalar_lea.vmem [#allocation11], %s650
        // Predicated region
        $region93: #{tpu_custom_call.1} parent=75 // pred_check
          %p652 = pneg %p268
        $region94: #{tpu_custom_call.1} parent=75 // pred_check_branch
          %654 = sbr.rel (%p652) target = $region96
        $region95: #{tpu_custom_call.1} parent=75 // pred_region
          %655 = dma.done %s648, 4096
        $region96: #{tpu_custom_call.1} parent=75 // pred_fallthru
          _
        %s656 = sand.u32 %s32, 1
        %s657 = scalar_lea.sflag [#allocation5], %s656
        %s658 = sand.u32 %s307, 1
        %s659 = smul.addr %s658, 256
        %s660 = scalar_lea.vmem [#allocation12], %s659
        // Predicated region
        $region97: #{tpu_custom_call.1} parent=75 // pred_check
          %p661 = pneg %p320
        $region98: #{tpu_custom_call.1} parent=75 // pred_check_branch
          %663 = sbr.rel (%p661) target = $region100
        $region99: #{tpu_custom_call.1} parent=75 // pred_region
          %664 = dma.done %s657, 4096
        $region100: #{tpu_custom_call.1} parent=75 // pred_fallthru
          _
        %s665 = sand.u32 %s32, 1
        %s666 = scalar_lea.sflag [#allocation5], %s665
        %s667 = sand.u32 %s52, 1
        %s668 = smul.addr %s667, 32
        %s669 = scalar_lea.vmem [#allocation4], %s668
        %p670 = pneg %p65
        %p671 = pneg %p62
        %p672 = pneg %p86
        %p673 = pneg %p83
        %s674 = sand.u32 %s32, 1
        %s675 = scalar_lea.sflag [#allocation5], %s674
        %s676 = sand.u32 %s99, 1
        %s677 = smul.addr %s676, 192
        %s678 = scalar_lea.vmem [#allocation9], %s677
        %p679 = pneg %p112
        %p680 = pneg %p109
        %p681 = scmp.lt.s32.totalorder %s37, 1
        %s682 = scalar_select %p681, %s37, 1
        %s683 = smul.addr %s682, 3
        %s684 = scalar_lea.vmem %s3, %s683
        %p685 = pneg %p138
        %p686 = pneg %p135
        %s687 = sand.u32 %s32, 1
        %s688 = scalar_lea.sflag [#allocation5], %s687
        %s689 = sand.u32 %s151, 1
        %s690 = smul.addr %s689, 64
        %s691 = scalar_lea.vmem [#allocation10], %s690
        %p692 = pneg %p164
        %p693 = pneg %p161
        %p694 = scmp.lt.s32.totalorder %s37, 1
        %s695 = scalar_select %p694, %s37, 1
        %s696 = scalar_lea.vmem %s5, %s695
        %p697 = pneg %p190
        %p698 = pneg %p187
        %p699 = scmp.lt.s32.totalorder %s37, 1
        %s700 = scalar_select %p699, %s37, 1
        %s701 = scalar_lea.vmem %s6, %s700
        %p702 = pneg %p216
        %p703 = pneg %p213
        %p704 = scmp.lt.s32.totalorder %s37, 1
        %s705 = scalar_select %p704, %s37, 1
        %s706 = scalar_lea.vmem %s7, %s705
        %p707 = pneg %p242
        %p708 = pneg %p239
        %s709 = sand.u32 %s32, 1
        %s710 = scalar_lea.sflag [#allocation5], %s709
        %s711 = sand.u32 %s255, 1
        %s712 = smul.addr %s711, 256
        %s713 = scalar_lea.vmem [#allocation11], %s712
        %p714 = pneg %p268
        %p715 = pneg %p265
        %p716 = scmp.lt.s32.totalorder %s37, 1
        %s717 = scalar_select %p716, %s37, 1
        %s718 = smul.addr %s717, 4
        %s719 = scalar_lea.vmem %s9, %s718
        %p720 = pneg %p294
        %p721 = pneg %p291
        %s722 = sand.u32 %s32, 1
        %s723 = scalar_lea.sflag [#allocation5], %s722
        %s724 = sand.u32 %s307, 1
        %s725 = smul.addr %s724, 256
        %s726 = scalar_lea.vmem [#allocation12], %s725
        %p727 = pneg %p320
        %p728 = pneg %p317
        %p729 = scmp.lt.s32.totalorder %s37, 1
        %s730 = scalar_select %p729, %s37, 1
        %s731 = scalar_lea.vmem %s11, %s730
        %p732 = pneg %p346
        %p733 = pneg %p343
        %p734 = scmp.lt.s32.totalorder %s37, 1
        %s735 = scalar_select %p734, %s37, 1
        %s736 = scalar_lea.vmem %s12, %s735
        %p737 = pneg %p372
        %p738 = pneg %p369
        %p739 = scmp.lt.s32.totalorder %s37, 1
        %s740 = scalar_select %p739, %s37, 1
        %s741 = scalar_lea.vmem %s13, %s740
        %p742 = pneg %p398
        %p743 = pneg %p395
        %p744 = pneg %p424
        %p745 = pneg %p421
        %s746 = sand.u32 %s411, 1
        %s747 = scalar_lea.sflag [#allocation6], %s746
        %s748 = sand.u32 %s411, 1
        %s749 = smul.addr %s748, 32
        %s750 = scalar_lea.vmem [#allocation13], %s749
        %s751 = smul.u32 4, %s36
        %p752 = scmp.lt.s32.totalorder %s37, 1
        %s753 = scalar_select %p752, %s37, 1
        %s754 = smul.addr %s753, 3
        %s755 = scalar_lea.vmem %s3, %s754
        %p756 = scmp.lt.s32.totalorder %s37, 1
        %s757 = scalar_select %p756, %s37, 1
        %s758 = scalar_lea.vmem %s5, %s757
        %p759 = scmp.lt.s32.totalorder %s37, 1
        %s760 = scalar_select %p759, %s37, 1
        %s761 = scalar_lea.vmem %s6, %s760
        %p762 = scmp.lt.s32.totalorder %s37, 1
        %s763 = scalar_select %p762, %s37, 1
        %s764 = scalar_lea.vmem %s7, %s763
        %p765 = scmp.lt.s32.totalorder %s37, 1
        %s766 = scalar_select %p765, %s37, 1
        %s767 = smul.addr %s766, 4
        %s768 = scalar_lea.vmem %s9, %s767
        %p769 = scmp.lt.s32.totalorder %s37, 1
        %s770 = scalar_select %p769, %s37, 1
        %s771 = scalar_lea.vmem %s11, %s770
        %p772 = scmp.lt.s32.totalorder %s37, 1
        %s773 = scalar_select %p772, %s37, 1
        %s774 = scalar_lea.vmem %s12, %s773
        %p775 = scmp.lt.s32.totalorder %s37, 1
        %s776 = scalar_select %p775, %s37, 1
        %s777 = scalar_lea.vmem %s13, %s776
        %s778 = smul.u32 4, %s36
        %p780 = scmp.eq.s32.totalorder %s37, 0
        // Predicated region
        $region101: #{tpu_custom_call.1} parent=75 // pred_check
          %p781 = pneg %p780
        $region102: #{tpu_custom_call.1} parent=75 // pred_check_branch
          %783 = sbr.rel (%p781) target = $region104
        $region103: #{tpu_custom_call.1} parent=75 // pred_region
          %v784 = vld [vmem:[%s620] sm:$0xff]
          %v785 = vld [vmem:[%s620 + $0x8] sm:$0xff]
          %v786 = vld [vmem:[%s620 + $0x10] sm:$0xff]
          %v787 = vld [vmem:[%s620 + $0x18] sm:$0xff]
          %v788 = vld [vmem:[#allocation7] sm:$0xff]
          %v789 = vadd.f32 %v784, %v788
          %v790 = vadd.f32 %v785, %v788
          %v791 = vadd.f32 %v786, %v788
          %v792 = vadd.f32 %v787, %v788
          %793 = vst [vmem:[#allocation2] sm:$0xff] %v789
          %794 = vst [vmem:[#allocation2 + $0x8] sm:$0xff] %v790
          %795 = vst [vmem:[#allocation2 + $0x10] sm:$0xff] %v791
          %796 = vst [vmem:[#allocation2 + $0x18] sm:$0xff] %v792
        $region104: #{tpu_custom_call.1} parent=75 // pred_fallthru
          _
        %v797 = vld [vmem:[#allocation2] sm:$0xff]
        %v798 = vld [vmem:[#allocation2 + $0x8] sm:$0xff]
        %v799 = vld [vmem:[#allocation2 + $0x10] sm:$0xff]
        %v800 = vld [vmem:[#allocation2 + $0x18] sm:$0xff]
        %v801 = vld [vmem:[%s761] sm:$0x1]
        %v802 = vld [vmem:[%s764] sm:$0x1]
        %803 = vadd.xlane.f32.xlu0 %v797
        %v804 = vpop.xlane.xlu0 %803
        %805 = vadd.xlane.f32.xlu0 %v798
        %v806 = vpop.xlane.xlu0 %805
        %807 = vadd.xlane.f32.xlu0 %v799
        %v808 = vpop.xlane.xlu0 %807
        %809 = vadd.xlane.f32.xlu0 %v800
        %v810 = vpop.xlane.xlu0 %809
        %v811 = vrcp.pop 128.0
        %v812 = vmul.f32 %v804, %v811
        %v813 = vmul.f32 %v806, %v811
        %v814 = vmul.f32 %v808, %v811
        %v815 = vmul.f32 %v810, %v811
        %v816 = vsub.f32 %v797, %v812
        %v817 = vsub.f32 %v798, %v813
        %v818 = vsub.f32 %v799, %v814
        %v819 = vsub.f32 %v800, %v815
        %v820 = vmul.f32 %v816, %v816
        %v821 = vmul.f32 %v817, %v817
        %v822 = vmul.f32 %v818, %v818
        %v823 = vmul.f32 %v819, %v819
        %824 = vadd.xlane.f32.xlu0 %v820
        %v825 = vpop.xlane.xlu0 %824
        %826 = vadd.xlane.f32.xlu0 %v821
        %v827 = vpop.xlane.xlu0 %826
        %828 = vadd.xlane.f32.xlu0 %v822
        %v829 = vpop.xlane.xlu0 %828
        %830 = vadd.xlane.f32.xlu0 %v823
        %v831 = vpop.xlane.xlu0 %830
        %v832 = vmul.f32 %v825, 0.007874016
        %v833 = vmul.f32 %v827, 0.007874016
        %v834 = vmul.f32 %v829, 0.007874016
        %v835 = vmul.f32 %v831, 0.007874016
        %v836 = vrsqrt.pop %v832
        %v837 = vmul.f32 %v832, %v836
        %vm838 = vcmp.eq.f32.partialorder %v832, inf
        %v839 = vsel %vm838, %v832, %v837
        %vm840 = vcmp.eq.f32.partialorder %v832, 0.0
        %v841 = vand.u32 %v832, 2147483648
        %v842 = vsel %vm840, %v841, %v839
        %v843 = vrsqrt.pop %v833
        %v844 = vmul.f32 %v833, %v843
        %vm845 = vcmp.eq.f32.partialorder %v833, inf
        %v846 = vsel %vm845, %v833, %v844
        %vm847 = vcmp.eq.f32.partialorder %v833, 0.0
        %v848 = vand.u32 %v833, 2147483648
        %v849 = vsel %vm847, %v848, %v846
        %v850 = vrsqrt.pop %v834
        %v851 = vmul.f32 %v834, %v850
        %vm852 = vcmp.eq.f32.partialorder %v834, inf
        %v853 = vsel %vm852, %v834, %v851
        %vm854 = vcmp.eq.f32.partialorder %v834, 0.0
        %v855 = vand.u32 %v834, 2147483648
        %v856 = vsel %vm854, %v855, %v853
        %v857 = vrsqrt.pop %v835
        %v858 = vmul.f32 %v835, %v857
        %vm859 = vcmp.eq.f32.partialorder %v835, inf
        %v860 = vsel %vm859, %v835, %v858
        %vm861 = vcmp.eq.f32.partialorder %v835, 0.0
        %v862 = vand.u32 %v835, 2147483648
        %v863 = vsel %vm861, %v862, %v860
        %v864 = vadd.f32 %v842, 1e-06
        %v865 = vadd.f32 %v849, 1e-06
        %v866 = vadd.f32 %v856, 1e-06
        %v867 = vadd.f32 %v863, 1e-06
        %v868 = vrcp.pop %v864
        %v869 = vmul.f32 1.0, %v868
        %v870 = vrcp.pop %v865
        %v871 = vmul.f32 1.0, %v870
        %v872 = vrcp.pop %v866
        %v873 = vmul.f32 1.0, %v872
        %v874 = vrcp.pop %v867
        %v875 = vmul.f32 1.0, %v874
        %v876 = vmul.f32 %v816, %v869
        %v877 = vmul.f32 %v817, %v871
        %v878 = vmul.f32 %v818, %v873
        %v879 = vmul.f32 %v819, %v875
        %v881 = vlaneseq
        %v882 = vshrl.u32 %v881, 7
        %v883 = vsub.s32 0, %v882
        %v884 = vrot.slane %v801, %v883
        %v886 = vmul.f32 %v876, %v884
        %v887 = vmul.f32 %v877, %v884
        %v888 = vmul.f32 %v878, %v884
        %v889 = vmul.f32 %v879, %v884
        %v891 = vlaneseq
        %v892 = vshrl.u32 %v891, 7
        %v893 = vsub.s32 0, %v892
        %v894 = vrot.slane %v802, %v893
        %v896 = vadd.f32 %v886, %v894
        %v897 = vadd.f32 %v887, %v894
        %v898 = vadd.f32 %v888, %v894
        %v899 = vadd.f32 %v889, %v894
        %v900 = vpack.c.bf16 %v897, %v896
        %v901 = vpack.c.bf16 %v899, %v898
        %v902 = vld [vmem:[%s633] sm:$0xff]
        %v903 = vld [vmem:[%s633 + $0x8] sm:$0xf]
        %v904 = vld [vmem:[%s633 + $0xc] sm:$0xff]
        %v905 = vld [vmem:[%s633 + $0x14] sm:$0xf]
        %v906 = vld [vmem:[%s633 + $0x18] sm:$0xff]
        %v907 = vld [vmem:[%s633 + $0x20] sm:$0xf]
        %v908 = vld [vmem:[%s633 + $0x24] sm:$0xff]
        %v909 = vld [vmem:[%s633 + $0x2c] sm:$0xf]
        %v910 = vld [vmem:[%s633 + $0x30] sm:$0xff]
        %v911 = vld [vmem:[%s633 + $0x38] sm:$0xf]
        %v912 = vld [vmem:[%s633 + $0x3c] sm:$0xff]
        %v913 = vld [vmem:[%s633 + $0x44] sm:$0xf]
        %v914 = vld [vmem:[%s633 + $0x48] sm:$0xff]
        %v915 = vld [vmem:[%s633 + $0x50] sm:$0xf]
        %v916 = vld [vmem:[%s633 + $0x54] sm:$0xff]
        %v917 = vld [vmem:[%s633 + $0x5c] sm:$0xf]
        %v918 = vld [vmem:[%s633 + $0x60] sm:$0xff]
        %v919 = vld [vmem:[%s633 + $0x68] sm:$0xf]
        %v920 = vld [vmem:[%s633 + $0x6c] sm:$0xff]
        %v921 = vld [vmem:[%s633 + $0x74] sm:$0xf]
        %v922 = vld [vmem:[%s633 + $0x78] sm:$0xff]
        %v923 = vld [vmem:[%s633 + $0x80] sm:$0xf]
        %v924 = vld [vmem:[%s633 + $0x84] sm:$0xff]
        %v925 = vld [vmem:[%s633 + $0x8c] sm:$0xf]
        %v926 = vld [vmem:[%s633 + $0x90] sm:$0xff]
        %v927 = vld [vmem:[%s633 + $0x98] sm:$0xf]
        %v928 = vld [vmem:[%s633 + $0x9c] sm:$0xff]
        %v929 = vld [vmem:[%s633 + $0xa4] sm:$0xf]
        %v930 = vld [vmem:[%s633 + $0xa8] sm:$0xff]
        %v931 = vld [vmem:[%s633 + $0xb0] sm:$0xf]
        %v932 = vld [vmem:[%s633 + $0xb4] sm:$0xff]
        %v933 = vld [vmem:[%s633 + $0xbc] sm:$0xf]
        %v934 = vld [vmem:[%s755] sm:$0x7]
        %v936 = vlaneseq
        %v937 = vshrl.u32 %v936, 7
        %v938 = vsub.s32 0, %v937
        %v939 = vrot.slane %v934, %v938
        %v940 = vlaneseq
        %v941 = vshrl.u32 %v940, 7
        %v942 = vsub.s32 1, %v941
        %v943 = vrot.slane %v934, %v942
        %v944 = vlaneseq
        %v945 = vshrl.u32 %v944, 7
        %v946 = vsub.s32 2, %v945
        %v947 = vrot.slane %v934, %v946
        %v983 = vunpack.c.l.b16 %v902
        %v984 = vunpack.c.h.b16 %v902
        %v985 = vunpack.c.l.b16 %v903
        %v986 = vunpack.c.l.b16 %v904
        %v987 = vunpack.c.h.b16 %v904
        %v988 = vunpack.c.l.b16 %v905
        %v989 = vunpack.c.l.b16 %v906
        %v990 = vunpack.c.h.b16 %v906
        %v991 = vunpack.c.l.b16 %v907
        %v992 = vunpack.c.l.b16 %v908
        %v993 = vunpack.c.h.b16 %v908
        %v994 = vunpack.c.l.b16 %v909
        %v995 = vunpack.c.l.b16 %v910
        %v996 = vunpack.c.h.b16 %v910
        %v997 = vunpack.c.l.b16 %v911
        %v998 = vunpack.c.l.b16 %v912
        %v999 = vunpack.c.h.b16 %v912
        %v1000 = vunpack.c.l.b16 %v913
        %v1001 = vunpack.c.l.b16 %v914
        %v1002 = vunpack.c.h.b16 %v914
        %v1003 = vunpack.c.l.b16 %v915
        %v1004 = vunpack.c.l.b16 %v916
        %v1005 = vunpack.c.h.b16 %v916
        %v1006 = vunpack.c.l.b16 %v917
        %v1007 = vunpack.c.l.b16 %v918
        %v1008 = vunpack.c.h.b16 %v918
        %v1009 = vunpack.c.l.b16 %v919
        %v1010 = vunpack.c.l.b16 %v920
        %v1011 = vunpack.c.h.b16 %v920
        %v1012 = vunpack.c.l.b16 %v921
        %v1013 = vunpack.c.l.b16 %v922
        %v1014 = vunpack.c.h.b16 %v922
        %v1015 = vunpack.c.l.b16 %v923
        %v1016 = vunpack.c.l.b16 %v924
        %v1017 = vunpack.c.h.b16 %v924
        %v1018 = vunpack.c.l.b16 %v925
        %v1019 = vunpack.c.l.b16 %v926
        %v1020 = vunpack.c.h.b16 %v926
        %v1021 = vunpack.c.l.b16 %v927
        %v1022 = vunpack.c.l.b16 %v928
        %v1023 = vunpack.c.h.b16 %v928
        %v1024 = vunpack.c.l.b16 %v929
        %v1025 = vunpack.c.l.b16 %v930
        %v1026 = vunpack.c.h.b16 %v930
        %v1027 = vunpack.c.l.b16 %v931
        %v1028 = vunpack.c.l.b16 %v932
        %v1029 = vunpack.c.h.b16 %v932
        %v1030 = vunpack.c.l.b16 %v933
        %v1031 = vpack.c.b16 %v986, %v983
        %v1032 = vpack.c.b16 %v987, %v984
        %v1033 = vpack.c.b16 %v988, %v985
        %v1034 = vpack.c.b16 %v992, %v989
        %v1035 = vpack.c.b16 %v993, %v990
        %v1036 = vpack.c.b16 %v994, %v991
        %v1037 = vpack.c.b16 %v998, %v995
        %v1038 = vpack.c.b16 %v999, %v996
        %v1039 = vpack.c.b16 %v1000, %v997
        %v1040 = vpack.c.b16 %v1004, %v1001
        %v1041 = vpack.c.b16 %v1005, %v1002
        %v1042 = vpack.c.b16 %v1006, %v1003
        %v1043 = vpack.c.b16 %v1010, %v1007
        %v1044 = vpack.c.b16 %v1011, %v1008
        %v1045 = vpack.c.b16 %v1012, %v1009
        %v1046 = vpack.c.b16 %v1016, %v1013
        %v1047 = vpack.c.b16 %v1017, %v1014
        %v1048 = vpack.c.b16 %v1018, %v1015
        %v1049 = vpack.c.b16 %v1022, %v1019
        %v1050 = vpack.c.b16 %v1023, %v1020
        %v1051 = vpack.c.b16 %v1024, %v1021
        %v1052 = vpack.c.b16 %v1028, %v1025
        %v1053 = vpack.c.b16 %v1029, %v1026
        %v1054 = vpack.c.b16 %v1030, %v1027
        %1079 = vmatprep.subr.bf16.mxu0 %v1032
        %1080 = vmatpush1.bf16.msra.mxu0 %v1031
        %1081 = vmatprep.subr.bf16.mxu0 %v1035
        %1082 = vmatpush1.bf16.msra.mxu0 %v1034
        %1083 = vmatprep.subr.bf16.mxu0 %v1038
        %1084 = vmatpush1.bf16.msra.mxu0 %v1037
        %1085 = vmatprep.subr.bf16.mxu0 %v1041
        %1086 = vmatpush1.bf16.msra.mxu0 %v1040
        %1087 = vmatprep.subr.bf16.mxu0 %v1044
        %1088 = vmatpush1.bf16.msra.mxu0 %v1043
        %1089 = vmatprep.subr.bf16.mxu0 %v1047
        %1090 = vmatpush1.bf16.msra.mxu0 %v1046
        %1091 = vmatprep.subr.bf16.mxu0 %v1050
        %1092 = vmatpush1.bf16.msra.mxu0 %v1049
        %1093 = vmatprep.subr.bf16.mxu0 %v1053
        %1094 = vmatpush1.bf16.msra.mxu0 %v1052
        %1095 = vmatprep.subr.bf16.mxu0 0
        %1096 = vmatpush1.bf16.msra.mxu0 0
        %1097 = vmatprep.subr.bf16.mxu0 0
        %1098 = vmatpush1.bf16.msra.mxu0 0
        %1099 = vmatprep.subr.bf16.mxu0 0
        %1100 = vmatpush1.bf16.msra.mxu0 0
        %1101 = vmatprep.subr.bf16.mxu0 0
        %1102 = vmatpush1.bf16.msra.mxu0 0
        %1103 = vmatprep.subr.bf16.mxu0 0
        %1104 = vmatpush1.bf16.msra.mxu0 0
        %1105 = vmatprep.subr.bf16.mxu0 0
        %1106 = vmatpush1.bf16.msra.mxu0 0
        %1107 = vmatprep.subr.bf16.mxu0 0
        %1108 = vmatpush1.bf16.msra.mxu0 0
        %1109 = vmatprep.subr.bf16.mxu0 0
        %1110 = vmatpush1.bf16.msra.mxu0 0
        %1111 = vmatprep.mubr.bf16.mxu0 0
        %1112 = vmatmul.mubr.bf16.gmra.mrb[0].mxu0 %v900
        %v1113 = vpop.f32.mrb[0].mxu0
        %v1114 = vadd.f32 %v939, %v1113
        %v1115 = vpop.f32.mrb[0].mxu0
        %v1116 = vadd.f32 %v943, %v1115
        %v1117 = vpop.f32.mrb[0].mxu0
        %v1118 = vadd.f32 %v939, %v1117
        %v1119 = vpop.f32.mrb[0].mxu0
        %v1120 = vadd.f32 %v943, %v1119
        %1121 = vmatprep.mubr.bf16.mxu0 0
        %1122 = vmatmul.mubr.bf16.gmra.mrb[0].mxu0 %v901
        %v1123 = vpop.f32.mrb[0].mxu0
        %v1124 = vadd.f32 %v939, %v1123
        %v1125 = vpop.f32.mrb[0].mxu0
        %v1126 = vadd.f32 %v943, %v1125
        %v1127 = vpop.f32.mrb[0].mxu0
        %v1128 = vadd.f32 %v939, %v1127
        %v1129 = vpop.f32.mrb[0].mxu0
        %v1130 = vadd.f32 %v943, %v1129
        %1131 = vdwg.mxu0
        %1132 = vmatprep.subr.bf16.mxu0 0
        %1133 = vmatpush1.bf16.msra.mxu0 %v1033
        %1134 = vmatprep.subr.bf16.mxu0 0
        %1135 = vmatpush1.bf16.msra.mxu0 %v1036
        %1136 = vmatprep.subr.bf16.mxu0 0
        %1137 = vmatpush1.bf16.msra.mxu0 %v1039
        %1138 = vmatprep.subr.bf16.mxu0 0
        %1139 = vmatpush1.bf16.msra.mxu0 %v1042
        %1140 = vmatprep.subr.bf16.mxu0 0
        %1141 = vmatpush1.bf16.msra.mxu0 %v1045
        %1142 = vmatprep.subr.bf16.mxu0 0
        %1143 = vmatpush1.bf16.msra.mxu0 %v1048
        %1144 = vmatprep.subr.bf16.mxu0 0
        %1145 = vmatpush1.bf16.msra.mxu0 %v1051
        %1146 = vmatprep.subr.bf16.mxu0 0
        %1147 = vmatpush1.bf16.msra.mxu0 %v1054
        %1148 = vmatprep.subr.bf16.mxu0 0
        %1149 = vmatpush1.bf16.msra.mxu0 0
        %1150 = vmatprep.subr.bf16.mxu0 0
        %1151 = vmatpush1.bf16.msra.mxu0 0
        %1152 = vmatprep.subr.bf16.mxu0 0
        %1153 = vmatpush1.bf16.msra.mxu0 0
        %1154 = vmatprep.subr.bf16.mxu0 0
        %1155 = vmatpush1.bf16.msra.mxu0 0
        %1156 = vmatprep.subr.bf16.mxu0 0
        %1157 = vmatpush1.bf16.msra.mxu0 0
        %1158 = vmatprep.subr.bf16.mxu0 0
        %1159 = vmatpush1.bf16.msra.mxu0 0
        %1160 = vmatprep.subr.bf16.mxu0 0
        %1161 = vmatpush1.bf16.msra.mxu0 0
        %1162 = vmatprep.subr.bf16.mxu0 0
        %1163 = vmatpush1.bf16.msra.mxu0 0
        %1164 = vmatprep.mubr.bf16.mxu0 0
        %1165 = vmatmul.mubr.bf16.gmra.mrb[0].mxu0 %v900
        %v1166 = vpop.f32.mrb[0].mxu0
        %v1167 = vadd.f32 %v947, %v1166
        %v1168 = vpop.f32.mrb[0].mxu0
        %v1169 = vpop.f32.mrb[0].mxu0
        %v1170 = vadd.f32 %v947, %v1169
        %v1171 = vpop.f32.mrb[0].mxu0
        %1172 = vmatprep.mubr.bf16.mxu0 0
        %1173 = vmatmul.mubr.bf16.gmra.mrb[0].mxu0 %v901
        %v1174 = vpop.f32.mrb[0].mxu0
        %v1175 = vadd.f32 %v947, %v1174
        %v1176 = vpop.f32.mrb[0].mxu0
        %v1177 = vpop.f32.mrb[0].mxu0
        %v1178 = vadd.f32 %v947, %v1177
        %v1179 = vpop.f32.mrb[0].mxu0
        %1180 = vdwg.mxu0
        %v1181 = vpack.c.bf16 %v1118, %v1114
        %v1182 = vpack.c.bf16 %v1128, %v1124
        %v1185 = vunpack.c.l.b16 %v1181
        %v1186 = vunpack.c.h.b16 %v1181
        %v1187 = vunpack.c.l.b16 %v1182
        %v1188 = vunpack.c.h.b16 %v1182
        %v1189 = vpack.c.b16 %v1185, %v1185
        %v1190 = vpack.c.b16 %v1186, %v1186
        %v1191 = vpack.c.b16 %v1187, %v1187
        %v1192 = vpack.c.b16 %v1188, %v1188
        %v1193 = vpack.c.bf16 %v1120, %v1116
        %v1194 = vpack.c.bf16 %v1130, %v1126
        %v1197 = vunpack.c.l.b16 %v1193
        %v1198 = vunpack.c.h.b16 %v1193
        %v1199 = vunpack.c.l.b16 %v1194
        %v1200 = vunpack.c.h.b16 %v1194
        %v1201 = vpack.c.b16 %v1197, %v1197
        %v1202 = vpack.c.b16 %v1198, %v1198
        %v1203 = vpack.c.b16 %v1199, %v1199
        %v1204 = vpack.c.b16 %v1200, %v1200
        %v1205 = vpack.c.bf16 %v1170, %v1167
        %v1206 = vpack.c.bf16 %v1178, %v1175
        %v1209 = vunpack.c.l.b16 %v1205
        %v1210 = vunpack.c.h.b16 %v1205
        %v1211 = vunpack.c.l.b16 %v1206
        %v1212 = vunpack.c.h.b16 %v1206
        %v1213 = vpack.c.b16 %v1209, %v1209
        %v1214 = vpack.c.b16 %v1210, %v1210
        %v1215 = vpack.c.b16 %v1211, %v1211
        %v1216 = vpack.c.b16 %v1212, %v1212
        %vm1217 = vcmask 261120
        %v1219 = vsel %vm1217, %v1189, 0
        %v1222 = vsel %vm1217, %v1201, 0
        %1224 = vmatprep.subr.bf16.mxu0 0
        %1225 = vmatpush1.bf16.xpose.msra.mxu0 %v1222
        %1226 = vmatprep.subr.bf16.mxu0 0
        %1227 = vmatpush1.bf16.xpose.msra.mxu0 0
        %1228 = vmatprep.subr.bf16.mxu0 0
        %1229 = vmatpush1.bf16.xpose.msra.mxu0 0
        %1230 = vmatprep.subr.bf16.mxu0 0
        %1231 = vmatpush1.bf16.xpose.msra.mxu0 0
        %1232 = vmatprep.subr.bf16.mxu0 0
        %1233 = vmatpush1.bf16.xpose.msra.mxu0 0
        %1234 = vmatprep.subr.bf16.mxu0 0
        %1235 = vmatpush1.bf16.xpose.msra.mxu0 0
        %1236 = vmatprep.subr.bf16.mxu0 0
        %1237 = vmatpush1.bf16.xpose.msra.mxu0 0
        %1238 = vmatprep.subr.bf16.mxu0 0
        %1239 = vmatpush1.bf16.xpose.msra.mxu0 0
        %1240 = vmatprep.subr.bf16.mxu0 0
        %1241 = vmatpush1.bf16.xpose.msra.mxu0 0
        %1242 = vmatprep.subr.bf16.mxu0 0
        %1243 = vmatpush1.bf16.xpose.msra.mxu0 0
        %1244 = vmatprep.subr.bf16.mxu0 0
        %1245 = vmatpush1.bf16.xpose.msra.mxu0 0
        %1246 = vmatprep.subr.bf16.mxu0 0
        %1247 = vmatpush1.bf16.xpose.msra.mxu0 0
        %1248 = vmatprep.subr.bf16.mxu0 0
        %1249 = vmatpush1.bf16.xpose.msra.mxu0 0
        %1250 = vmatprep.subr.bf16.mxu0 0
        %1251 = vmatpush1.bf16.xpose.msra.mxu0 0
        %1252 = vmatprep.subr.bf16.mxu0 0
        %1253 = vmatpush1.bf16.xpose.msra.mxu0 0
        %1254 = vmatprep.subr.bf16.mxu0 0
        %1255 = vmatpush1.bf16.xpose.msra.mxu0 0
        %1256 = vmatprep.mubr.bf16.mxu0 0
        %1257 = vmatmul.mubr.bf16.gmra.mrb[0].mxu0 %v1219
        %v1258 = vpop.f32.mrb[0].mxu0
        %v1259 = vadd.f32 0.0, %v1258
        %v1260 = vpop.f32.mrb[0].mxu0
        %v1261 = vpop.f32.mrb[0].mxu0
        %v1262 = vpop.f32.mrb[0].mxu0
        %1263 = vdwg.mxu0
        %v1265 = vsel %vm1217, %v1190, 0
        %v1268 = vsel %vm1217, %v1202, 0
        %1270 = vmatprep.subr.bf16.mxu0 0
        %1271 = vmatpush1.bf16.xpose.msra.mxu0 %v1268
        %1272 = vmatprep.subr.bf16.mxu0 0
        %1273 = vmatpush1.bf16.xpose.msra.mxu0 0
        %1274 = vmatprep.subr.bf16.mxu0 0
        %1275 = vmatpush1.bf16.xpose.msra.mxu0 0
        %1276 = vmatprep.subr.bf16.mxu0 0
        %1277 = vmatpush1.bf16.xpose.msra.mxu0 0
        %1278 = vmatprep.subr.bf16.mxu0 0
        %1279 = vmatpush1.bf16.xpose.msra.mxu0 0
        %1280 = vmatprep.subr.bf16.mxu0 0
        %1281 = vmatpush1.bf16.xpose.msra.mxu0 0
        %1282 = vmatprep.subr.bf16.mxu0 0
        %1283 = vmatpush1.bf16.xpose.msra.mxu0 0
        %1284 = vmatprep.subr.bf16.mxu0 0
        %1285 = vmatpush1.bf16.xpose.msra.mxu0 0
        %1286 = vmatprep.subr.bf16.mxu0 0
        %1287 = vmatpush1.bf16.xpose.msra.mxu0 0
        %1288 = vmatprep.subr.bf16.mxu0 0
        %1289 = vmatpush1.bf16.xpose.msra.mxu0 0
        %1290 = vmatprep.subr.bf16.mxu0 0
        %1291 = vmatpush1.bf16.xpose.msra.mxu0 0
        %1292 = vmatprep.subr.bf16.mxu0 0
        %1293 = vmatpush1.bf16.xpose.msra.mxu0 0
        %1294 = vmatprep.subr.bf16.mxu0 0
        %1295 = vmatpush1.bf16.xpose.msra.mxu0 0
        %1296 = vmatprep.subr.bf16.mxu0 0
        %1297 = vmatpush1.bf16.xpose.msra.mxu0 0
        %1298 = vmatprep.subr.bf16.mxu0 0
        %1299 = vmatpush1.bf16.xpose.msra.mxu0 0
        %1300 = vmatprep.subr.bf16.mxu0 0
        %1301 = vmatpush1.bf16.xpose.msra.mxu0 0
        %1302 = vmatprep.mubr.bf16.mxu0 0
        %1303 = vmatmul.mubr.bf16.gmra.mrb[0].mxu0 %v1265
        %v1304 = vpop.f32.mrb[0].mxu0
        %v1305 = vadd.f32 0.0, %v1304
        %v1306 = vpop.f32.mrb[0].mxu0
        %v1307 = vpop.f32.mrb[0].mxu0
        %v1308 = vpop.f32.mrb[0].mxu0
        %1309 = vdwg.mxu0
        %v1311 = vsel %vm1217, %v1191, 0
        %v1314 = vsel %vm1217, %v1203, 0
        %1316 = vmatprep.subr.bf16.mxu0 0
        %1317 = vmatpush1.bf16.xpose.msra.mxu0 %v1314
        %1318 = vmatprep.subr.bf16.mxu0 0
        %1319 = vmatpush1.bf16.xpose.msra.mxu0 0
        %1320 = vmatprep.subr.bf16.mxu0 0
        %1321 = vmatpush1.bf16.xpose.msra.mxu0 0
        %1322 = vmatprep.subr.bf16.mxu0 0
        %1323 = vmatpush1.bf16.xpose.msra.mxu0 0
        %1324 = vmatprep.subr.bf16.mxu0 0
        %1325 = vmatpush1.bf16.xpose.msra.mxu0 0
        %1326 = vmatprep.subr.bf16.mxu0 0
        %1327 = vmatpush1.bf16.xpose.msra.mxu0 0
        %1328 = vmatprep.subr.bf16.mxu0 0
        %1329 = vmatpush1.bf16.xpose.msra.mxu0 0
        %1330 = vmatprep.subr.bf16.mxu0 0
        %1331 = vmatpush1.bf16.xpose.msra.mxu0 0
        %1332 = vmatprep.subr.bf16.mxu0 0
        %1333 = vmatpush1.bf16.xpose.msra.mxu0 0
        %1334 = vmatprep.subr.bf16.mxu0 0
        %1335 = vmatpush1.bf16.xpose.msra.mxu0 0
        %1336 = vmatprep.subr.bf16.mxu0 0
        %1337 = vmatpush1.bf16.xpose.msra.mxu0 0
        %1338 = vmatprep.subr.bf16.mxu0 0
        %1339 = vmatpush1.bf16.xpose.msra.mxu0 0
        %1340 = vmatprep.subr.bf16.mxu0 0
        %1341 = vmatpush1.bf16.xpose.msra.mxu0 0
        %1342 = vmatprep.subr.bf16.mxu0 0
        %1343 = vmatpush1.bf16.xpose.msra.mxu0 0
        %1344 = vmatprep.subr.bf16.mxu0 0
        %1345 = vmatpush1.bf16.xpose.msra.mxu0 0
        %1346 = vmatprep.subr.bf16.mxu0 0
        %1347 = vmatpush1.bf16.xpose.msra.mxu0 0
        %1348 = vmatprep.mubr.bf16.mxu0 0
        %1349 = vmatmul.mubr.bf16.gmra.mrb[0].mxu0 %v1311
        %v1350 = vpop.f32.mrb[0].mxu0
        %v1351 = vadd.f32 0.0, %v1350
        %v1352 = vpop.f32.mrb[0].mxu0
        %v1353 = vpop.f32.mrb[0].mxu0
        %v1354 = vpop.f32.mrb[0].mxu0
        %1355 = vdwg.mxu0
        %v1357 = vsel %vm1217, %v1192, 0
        %v1360 = vsel %vm1217, %v1204, 0
        %1362 = vmatprep.subr.bf16.mxu0 0
        %1363 = vmatpush1.bf16.xpose.msra.mxu0 %v1360
        %1364 = vmatprep.subr.bf16.mxu0 0
        %1365 = vmatpush1.bf16.xpose.msra.mxu0 0
        %1366 = vmatprep.subr.bf16.mxu0 0
        %1367 = vmatpush1.bf16.xpose.msra.mxu0 0
        %1368 = vmatprep.subr.bf16.mxu0 0
        %1369 = vmatpush1.bf16.xpose.msra.mxu0 0
        %1370 = vmatprep.subr.bf16.mxu0 0
        %1371 = vmatpush1.bf16.xpose.msra.mxu0 0
        %1372 = vmatprep.subr.bf16.mxu0 0
        %1373 = vmatpush1.bf16.xpose.msra.mxu0 0
        %1374 = vmatprep.subr.bf16.mxu0 0
        %1375 = vmatpush1.bf16.xpose.msra.mxu0 0
        %1376 = vmatprep.subr.bf16.mxu0 0
        %1377 = vmatpush1.bf16.xpose.msra.mxu0 0
        %1378 = vmatprep.subr.bf16.mxu0 0
        %1379 = vmatpush1.bf16.xpose.msra.mxu0 0
        %1380 = vmatprep.subr.bf16.mxu0 0
        %1381 = vmatpush1.bf16.xpose.msra.mxu0 0
        %1382 = vmatprep.subr.bf16.mxu0 0
        %1383 = vmatpush1.bf16.xpose.msra.mxu0 0
        %1384 = vmatprep.subr.bf16.mxu0 0
        %1385 = vmatpush1.bf16.xpose.msra.mxu0 0
        %1386 = vmatprep.subr.bf16.mxu0 0
        %1387 = vmatpush1.bf16.xpose.msra.mxu0 0
        %1388 = vmatprep.subr.bf16.mxu0 0
        %1389 = vmatpush1.bf16.xpose.msra.mxu0 0
        %1390 = vmatprep.subr.bf16.mxu0 0
        %1391 = vmatpush1.bf16.xpose.msra.mxu0 0
        %1392 = vmatprep.subr.bf16.mxu0 0
        %1393 = vmatpush1.bf16.xpose.msra.mxu0 0
        %1394 = vmatprep.mubr.bf16.mxu0 0
        %1395 = vmatmul.mubr.bf16.gmra.mrb[0].mxu0 %v1357
        %v1396 = vpop.f32.mrb[0].mxu0
        %v1397 = vadd.f32 0.0, %v1396
        %v1398 = vpop.f32.mrb[0].mxu0
        %v1399 = vpop.f32.mrb[0].mxu0
        %v1400 = vpop.f32.mrb[0].mxu0
        %1401 = vdwg.mxu0
        %1402 = vrot.lane.b32.xlu0 %v1189, 96
        %v1403 = vpop.permute.xlu0 %1402
        %1404 = vrot.lane.b32.xlu0 %v1201, 96
        %v1405 = vpop.permute.xlu0 %1404
        %v1407 = vsel %vm1217, %v1403, 0
        %v1410 = vsel %vm1217, %v1405, 0
        %1412 = vmatprep.subr.bf16.mxu0 0
        %1413 = vmatpush1.bf16.xpose.msra.mxu0 %v1410
        %1414 = vmatprep.subr.bf16.mxu0 0
        %1415 = vmatpush1.bf16.xpose.msra.mxu0 0
        %1416 = vmatprep.subr.bf16.mxu0 0
        %1417 = vmatpush1.bf16.xpose.msra.mxu0 0
        %1418 = vmatprep.subr.bf16.mxu0 0
        %1419 = vmatpush1.bf16.xpose.msra.mxu0 0
        %1420 = vmatprep.subr.bf16.mxu0 0
        %1421 = vmatpush1.bf16.xpose.msra.mxu0 0
        %1422 = vmatprep.subr.bf16.mxu0 0
        %1423 = vmatpush1.bf16.xpose.msra.mxu0 0
        %1424 = vmatprep.subr.bf16.mxu0 0
        %1425 = vmatpush1.bf16.xpose.msra.mxu0 0
        %1426 = vmatprep.subr.bf16.mxu0 0
        %1427 = vmatpush1.bf16.xpose.msra.mxu0 0
        %1428 = vmatprep.subr.bf16.mxu0 0
        %1429 = vmatpush1.bf16.xpose.msra.mxu0 0
        %1430 = vmatprep.subr.bf16.mxu0 0
        %1431 = vmatpush1.bf16.xpose.msra.mxu0 0
        %1432 = vmatprep.subr.bf16.mxu0 0
        %1433 = vmatpush1.bf16.xpose.msra.mxu0 0
        %1434 = vmatprep.subr.bf16.mxu0 0
        %1435 = vmatpush1.bf16.xpose.msra.mxu0 0
        %1436 = vmatprep.subr.bf16.mxu0 0
        %1437 = vmatpush1.bf16.xpose.msra.mxu0 0
        %1438 = vmatprep.subr.bf16.mxu0 0
        %1439 = vmatpush1.bf16.xpose.msra.mxu0 0
        %1440 = vmatprep.subr.bf16.mxu0 0
        %1441 = vmatpush1.bf16.xpose.msra.mxu0 0
        %1442 = vmatprep.subr.bf16.mxu0 0
        %1443 = vmatpush1.bf16.xpose.msra.mxu0 0
        %1444 = vmatprep.mubr.bf16.mxu0 0
        %1445 = vmatmul.mubr.bf16.gmra.mrb[0].mxu0 %v1407
        %v1446 = vpop.f32.mrb[0].mxu0
        %v1447 = vadd.f32 0.0, %v1446
        %v1448 = vpop.f32.mrb[0].mxu0
        %v1449 = vpop.f32.mrb[0].mxu0
        %v1450 = vpop.f32.mrb[0].mxu0
        %1451 = vdwg.mxu0
        %1452 = vrot.lane.b32.xlu0 %v1190, 96
        %v1453 = vpop.permute.xlu0 %1452
        %1454 = vrot.lane.b32.xlu0 %v1202, 96
        %v1455 = vpop.permute.xlu0 %1454
        %v1457 = vsel %vm1217, %v1453, 0
        %v1460 = vsel %vm1217, %v1455, 0
        %1462 = vmatprep.subr.bf16.mxu0 0
        %1463 = vmatpush1.bf16.xpose.msra.mxu0 %v1460
        %1464 = vmatprep.subr.bf16.mxu0 0
        %1465 = vmatpush1.bf16.xpose.msra.mxu0 0
        %1466 = vmatprep.subr.bf16.mxu0 0
        %1467 = vmatpush1.bf16.xpose.msra.mxu0 0
        %1468 = vmatprep.subr.bf16.mxu0 0
        %1469 = vmatpush1.bf16.xpose.msra.mxu0 0
        %1470 = vmatprep.subr.bf16.mxu0 0
        %1471 = vmatpush1.bf16.xpose.msra.mxu0 0
        %1472 = vmatprep.subr.bf16.mxu0 0
        %1473 = vmatpush1.bf16.xpose.msra.mxu0 0
        %1474 = vmatprep.subr.bf16.mxu0 0
        %1475 = vmatpush1.bf16.xpose.msra.mxu0 0
        %1476 = vmatprep.subr.bf16.mxu0 0
        %1477 = vmatpush1.bf16.xpose.msra.mxu0 0
        %1478 = vmatprep.subr.bf16.mxu0 0
        %1479 = vmatpush1.bf16.xpose.msra.mxu0 0
        %1480 = vmatprep.subr.bf16.mxu0 0
        %1481 = vmatpush1.bf16.xpose.msra.mxu0 0
        %1482 = vmatprep.subr.bf16.mxu0 0
        %1483 = vmatpush1.bf16.xpose.msra.mxu0 0
        %1484 = vmatprep.subr.bf16.mxu0 0
        %1485 = vmatpush1.bf16.xpose.msra.mxu0 0
        %1486 = vmatprep.subr.bf16.mxu0 0
        %1487 = vmatpush1.bf16.xpose.msra.mxu0 0
        %1488 = vmatprep.subr.bf16.mxu0 0
        %1489 = vmatpush1.bf16.xpose.msra.mxu0 0
        %1490 = vmatprep.subr.bf16.mxu0 0
        %1491 = vmatpush1.bf16.xpose.msra.mxu0 0
        %1492 = vmatprep.subr.bf16.mxu0 0
        %1493 = vmatpush1.bf16.xpose.msra.mxu0 0
        %1494 = vmatprep.mubr.bf16.mxu0 0
        %1495 = vmatmul.mubr.bf16.gmra.mrb[0].mxu0 %v1457
        %v1496 = vpop.f32.mrb[0].mxu0
        %v1497 = vadd.f32 0.0, %v1496
        %v1498 = vpop.f32.mrb[0].mxu0
        %v1499 = vpop.f32.mrb[0].mxu0
        %v1500 = vpop.f32.mrb[0].mxu0
        %1501 = vdwg.mxu0
        %1502 = vrot.lane.b32.xlu0 %v1191, 96
        %v1503 = vpop.permute.xlu0 %1502
        %1504 = vrot.lane.b32.xlu0 %v1203, 96
        %v1505 = vpop.permute.xlu0 %1504
        %v1507 = vsel %vm1217, %v1503, 0
        %v1510 = vsel %vm1217, %v1505, 0
        %1512 = vmatprep.subr.bf16.mxu0 0
        %1513 = vmatpush1.bf16.xpose.msra.mxu0 %v1510
        %1514 = vmatprep.subr.bf16.mxu0 0
        %1515 = vmatpush1.bf16.xpose.msra.mxu0 0
        %1516 = vmatprep.subr.bf16.mxu0 0
        %1517 = vmatpush1.bf16.xpose.msra.mxu0 0
        %1518 = vmatprep.subr.bf16.mxu0 0
        %1519 = vmatpush1.bf16.xpose.msra.mxu0 0
        %1520 = vmatprep.subr.bf16.mxu0 0
        %1521 = vmatpush1.bf16.xpose.msra.mxu0 0
        %1522 = vmatprep.subr.bf16.mxu0 0
        %1523 = vmatpush1.bf16.xpose.msra.mxu0 0
        %1524 = vmatprep.subr.bf16.mxu0 0
        %1525 = vmatpush1.bf16.xpose.msra.mxu0 0
        %1526 = vmatprep.subr.bf16.mxu0 0
        %1527 = vmatpush1.bf16.xpose.msra.mxu0 0
        %1528 = vmatprep.subr.bf16.mxu0 0
        %1529 = vmatpush1.bf16.xpose.msra.mxu0 0
        %1530 = vmatprep.subr.bf16.mxu0 0
        %1531 = vmatpush1.bf16.xpose.msra.mxu0 0
        %1532 = vmatprep.subr.bf16.mxu0 0
        %1533 = vmatpush1.bf16.xpose.msra.mxu0 0
        %1534 = vmatprep.subr.bf16.mxu0 0
        %1535 = vmatpush1.bf16.xpose.msra.mxu0 0
        %1536 = vmatprep.subr.bf16.mxu0 0
        %1537 = vmatpush1.bf16.xpose.msra.mxu0 0
        %1538 = vmatprep.subr.bf16.mxu0 0
        %1539 = vmatpush1.bf16.xpose.msra.mxu0 0
        %1540 = vmatprep.subr.bf16.mxu0 0
        %1541 = vmatpush1.bf16.xpose.msra.mxu0 0
        %1542 = vmatprep.subr.bf16.mxu0 0
        %1543 = vmatpush1.bf16.xpose.msra.mxu0 0
        %1544 = vmatprep.mubr.bf16.mxu0 0
        %1545 = vmatmul.mubr.bf16.gmra.mrb[0].mxu0 %v1507
        %v1546 = vpop.f32.mrb[0].mxu0
        %v1547 = vadd.f32 0.0, %v1546
        %v1548 = vpop.f32.mrb[0].mxu0
        %v1549 = vpop.f32.mrb[0].mxu0
        %v1550 = vpop.f32.mrb[0].mxu0
        %1551 = vdwg.mxu0
        %1552 = vrot.lane.b32.xlu0 %v1192, 96
        %v1553 = vpop.permute.xlu0 %1552
        %1554 = vrot.lane.b32.xlu0 %v1204, 96
        %v1555 = vpop.permute.xlu0 %1554
        %v1557 = vsel %vm1217, %v1553, 0
        %v1560 = vsel %vm1217, %v1555, 0
        %1562 = vmatprep.subr.bf16.mxu0 0
        %1563 = vmatpush1.bf16.xpose.msra.mxu0 %v1560
        %1564 = vmatprep.subr.bf16.mxu0 0
        %1565 = vmatpush1.bf16.xpose.msra.mxu0 0
        %1566 = vmatprep.subr.bf16.mxu0 0
        %1567 = vmatpush1.bf16.xpose.msra.mxu0 0
        %1568 = vmatprep.subr.bf16.mxu0 0
        %1569 = vmatpush1.bf16.xpose.msra.mxu0 0
        %1570 = vmatprep.subr.bf16.mxu0 0
        %1571 = vmatpush1.bf16.xpose.msra.mxu0 0
        %1572 = vmatprep.subr.bf16.mxu0 0
        %1573 = vmatpush1.bf16.xpose.msra.mxu0 0
        %1574 = vmatprep.subr.bf16.mxu0 0
        %1575 = vmatpush1.bf16.xpose.msra.mxu0 0
        %1576 = vmatprep.subr.bf16.mxu0 0
        %1577 = vmatpush1.bf16.xpose.msra.mxu0 0
        %1578 = vmatprep.subr.bf16.mxu0 0
        %1579 = vmatpush1.bf16.xpose.msra.mxu0 0
        %1580 = vmatprep.subr.bf16.mxu0 0
        %1581 = vmatpush1.bf16.xpose.msra.mxu0 0
        %1582 = vmatprep.subr.bf16.mxu0 0
        %1583 = vmatpush1.bf16.xpose.msra.mxu0 0
        %1584 = vmatprep.subr.bf16.mxu0 0
        %1585 = vmatpush1.bf16.xpose.msra.mxu0 0
        %1586 = vmatprep.subr.bf16.mxu0 0
        %1587 = vmatpush1.bf16.xpose.msra.mxu0 0
        %1588 = vmatprep.subr.bf16.mxu0 0
        %1589 = vmatpush1.bf16.xpose.msra.mxu0 0
        %1590 = vmatprep.subr.bf16.mxu0 0
        %1591 = vmatpush1.bf16.xpose.msra.mxu0 0
        %1592 = vmatprep.subr.bf16.mxu0 0
        %1593 = vmatpush1.bf16.xpose.msra.mxu0 0
        %1594 = vmatprep.mubr.bf16.mxu0 0
        %1595 = vmatmul.mubr.bf16.gmra.mrb[0].mxu0 %v1557
        %v1596 = vpop.f32.mrb[0].mxu0
        %v1597 = vadd.f32 0.0, %v1596
        %v1598 = vpop.f32.mrb[0].mxu0
        %v1599 = vpop.f32.mrb[0].mxu0
        %v1600 = vpop.f32.mrb[0].mxu0
        %1601 = vdwg.mxu0
        %1602 = vrot.lane.b32.xlu0 %v1189, 64
        %v1603 = vpop.permute.xlu0 %1602
        %1604 = vrot.lane.b32.xlu0 %v1201, 64
        %v1605 = vpop.permute.xlu0 %1604
        %v1607 = vsel %vm1217, %v1603, 0
        %v1610 = vsel %vm1217, %v1605, 0
        %1612 = vmatprep.subr.bf16.mxu0 0
        %1613 = vmatpush1.bf16.xpose.msra.mxu0 %v1610
        %1614 = vmatprep.subr.bf16.mxu0 0
        %1615 = vmatpush1.bf16.xpose.msra.mxu0 0
        %1616 = vmatprep.subr.bf16.mxu0 0
        %1617 = vmatpush1.bf16.xpose.msra.mxu0 0
        %1618 = vmatprep.subr.bf16.mxu0 0
        %1619 = vmatpush1.bf16.xpose.msra.mxu0 0
        %1620 = vmatprep.subr.bf16.mxu0 0
        %1621 = vmatpush1.bf16.xpose.msra.mxu0 0
        %1622 = vmatprep.subr.bf16.mxu0 0
        %1623 = vmatpush1.bf16.xpose.msra.mxu0 0
        %1624 = vmatprep.subr.bf16.mxu0 0
        %1625 = vmatpush1.bf16.xpose.msra.mxu0 0
        %1626 = vmatprep.subr.bf16.mxu0 0
        %1627 = vmatpush1.bf16.xpose.msra.mxu0 0
        %1628 = vmatprep.subr.bf16.mxu0 0
        %1629 = vmatpush1.bf16.xpose.msra.mxu0 0
        %1630 = vmatprep.subr.bf16.mxu0 0
        %1631 = vmatpush1.bf16.xpose.msra.mxu0 0
        %1632 = vmatprep.subr.bf16.mxu0 0
        %1633 = vmatpush1.bf16.xpose.msra.mxu0 0
        %1634 = vmatprep.subr.bf16.mxu0 0
        %1635 = vmatpush1.bf16.xpose.msra.mxu0 0
        %1636 = vmatprep.subr.bf16.mxu0 0
        %1637 = vmatpush1.bf16.xpose.msra.mxu0 0
        %1638 = vmatprep.subr.bf16.mxu0 0
        %1639 = vmatpush1.bf16.xpose.msra.mxu0 0
        %1640 = vmatprep.subr.bf16.mxu0 0
        %1641 = vmatpush1.bf16.xpose.msra.mxu0 0
        %1642 = vmatprep.subr.bf16.mxu0 0
        %1643 = vmatpush1.bf16.xpose.msra.mxu0 0
        %1644 = vmatprep.mubr.bf16.mxu0 0
        %1645 = vmatmul.mubr.bf16.gmra.mrb[0].mxu0 %v1607
        %v1646 = vpop.f32.mrb[0].mxu0
        %v1647 = vadd.f32 0.0, %v1646
        %v1648 = vpop.f32.mrb[0].mxu0
        %v1649 = vpop.f32.mrb[0].mxu0
        %v1650 = vpop.f32.mrb[0].mxu0
        %1651 = vdwg.mxu0
        %1652 = vrot.lane.b32.xlu0 %v1190, 64
        %v1653 = vpop.permute.xlu0 %1652
        %1654 = vrot.lane.b32.xlu0 %v1202, 64
        %v1655 = vpop.permute.xlu0 %1654
        %v1657 = vsel %vm1217, %v1653, 0
        %v1660 = vsel %vm1217, %v1655, 0
        %1662 = vmatprep.subr.bf16.mxu0 0
        %1663 = vmatpush1.bf16.xpose.msra.mxu0 %v1660
        %1664 = vmatprep.subr.bf16.mxu0 0
        %1665 = vmatpush1.bf16.xpose.msra.mxu0 0
        %1666 = vmatprep.subr.bf16.mxu0 0
        %1667 = vmatpush1.bf16.xpose.msra.mxu0 0
        %1668 = vmatprep.subr.bf16.mxu0 0
        %1669 = vmatpush1.bf16.xpose.msra.mxu0 0
        %1670 = vmatprep.subr.bf16.mxu0 0
        %1671 = vmatpush1.bf16.xpose.msra.mxu0 0
        %1672 = vmatprep.subr.bf16.mxu0 0
        %1673 = vmatpush1.bf16.xpose.msra.mxu0 0
        %1674 = vmatprep.subr.bf16.mxu0 0
        %1675 = vmatpush1.bf16.xpose.msra.mxu0 0
        %1676 = vmatprep.subr.bf16.mxu0 0
        %1677 = vmatpush1.bf16.xpose.msra.mxu0 0
        %1678 = vmatprep.subr.bf16.mxu0 0
        %1679 = vmatpush1.bf16.xpose.msra.mxu0 0
        %1680 = vmatprep.subr.bf16.mxu0 0
        %1681 = vmatpush1.bf16.xpose.msra.mxu0 0
        %1682 = vmatprep.subr.bf16.mxu0 0
        %1683 = vmatpush1.bf16.xpose.msra.mxu0 0
        %1684 = vmatprep.subr.bf16.mxu0 0
        %1685 = vmatpush1.bf16.xpose.msra.mxu0 0
        %1686 = vmatprep.subr.bf16.mxu0 0
        %1687 = vmatpush1.bf16.xpose.msra.mxu0 0
        %1688 = vmatprep.subr.bf16.mxu0 0
        %1689 = vmatpush1.bf16.xpose.msra.mxu0 0
        %1690 = vmatprep.subr.bf16.mxu0 0
        %1691 = vmatpush1.bf16.xpose.msra.mxu0 0
        %1692 = vmatprep.subr.bf16.mxu0 0
        %1693 = vmatpush1.bf16.xpose.msra.mxu0 0
        %1694 = vmatprep.mubr.bf16.mxu0 0
        %1695 = vmatmul.mubr.bf16.gmra.mrb[0].mxu0 %v1657
        %v1696 = vpop.f32.mrb[0].mxu0
        %v1697 = vadd.f32 0.0, %v1696
        %v1698 = vpop.f32.mrb[0].mxu0
        %v1699 = vpop.f32.mrb[0].mxu0
        %v1700 = vpop.f32.mrb[0].mxu0
        %1701 = vdwg.mxu0
        %1702 = vrot.lane.b32.xlu0 %v1191, 64
        %v1703 = vpop.permute.xlu0 %1702
        %1704 = vrot.lane.b32.xlu0 %v1203, 64
        %v1705 = vpop.permute.xlu0 %1704
        %v1707 = vsel %vm1217, %v1703, 0
        %v1710 = vsel %vm1217, %v1705, 0
        %1712 = vmatprep.subr.bf16.mxu0 0
        %1713 = vmatpush1.bf16.xpose.msra.mxu0 %v1710
        %1714 = vmatprep.subr.bf16.mxu0 0
        %1715 = vmatpush1.bf16.xpose.msra.mxu0 0
        %1716 = vmatprep.subr.bf16.mxu0 0
        %1717 = vmatpush1.bf16.xpose.msra.mxu0 0
        %1718 = vmatprep.subr.bf16.mxu0 0
        %1719 = vmatpush1.bf16.xpose.msra.mxu0 0
        %1720 = vmatprep.subr.bf16.mxu0 0
        %1721 = vmatpush1.bf16.xpose.msra.mxu0 0
        %1722 = vmatprep.subr.bf16.mxu0 0
        %1723 = vmatpush1.bf16.xpose.msra.mxu0 0
        %1724 = vmatprep.subr.bf16.mxu0 0
        %1725 = vmatpush1.bf16.xpose.msra.mxu0 0
        %1726 = vmatprep.subr.bf16.mxu0 0
        %1727 = vmatpush1.bf16.xpose.msra.mxu0 0
        %1728 = vmatprep.subr.bf16.mxu0 0
        %1729 = vmatpush1.bf16.xpose.msra.mxu0 0
        %1730 = vmatprep.subr.bf16.mxu0 0
        %1731 = vmatpush1.bf16.xpose.msra.mxu0 0
        %1732 = vmatprep.subr.bf16.mxu0 0
        %1733 = vmatpush1.bf16.xpose.msra.mxu0 0
        %1734 = vmatprep.subr.bf16.mxu0 0
        %1735 = vmatpush1.bf16.xpose.msra.mxu0 0
        %1736 = vmatprep.subr.bf16.mxu0 0
        %1737 = vmatpush1.bf16.xpose.msra.mxu0 0
        %1738 = vmatprep.subr.bf16.mxu0 0
        %1739 = vmatpush1.bf16.xpose.msra.mxu0 0
        %1740 = vmatprep.subr.bf16.mxu0 0
        %1741 = vmatpush1.bf16.xpose.msra.mxu0 0
        %1742 = vmatprep.subr.bf16.mxu0 0
        %1743 = vmatpush1.bf16.xpose.msra.mxu0 0
        %1744 = vmatprep.mubr.bf16.mxu0 0
        %1745 = vmatmul.mubr.bf16.gmra.mrb[0].mxu0 %v1707
        %v1746 = vpop.f32.mrb[0].mxu0
        %v1747 = vadd.f32 0.0, %v1746
        %v1748 = vpop.f32.mrb[0].mxu0
        %v1749 = vpop.f32.mrb[0].mxu0
        %v1750 = vpop.f32.mrb[0].mxu0
        %1751 = vdwg.mxu0
        %1752 = vrot.lane.b32.xlu0 %v1192, 64
        %v1753 = vpop.permute.xlu0 %1752
        %1754 = vrot.lane.b32.xlu0 %v1204, 64
        %v1755 = vpop.permute.xlu0 %1754
        %v1757 = vsel %vm1217, %v1753, 0
        %v1760 = vsel %vm1217, %v1755, 0
        %1762 = vmatprep.subr.bf16.mxu0 0
        %1763 = vmatpush1.bf16.xpose.msra.mxu0 %v1760
        %1764 = vmatprep.subr.bf16.mxu0 0
        %1765 = vmatpush1.bf16.xpose.msra.mxu0 0
        %1766 = vmatprep.subr.bf16.mxu0 0
        %1767 = vmatpush1.bf16.xpose.msra.mxu0 0
        %1768 = vmatprep.subr.bf16.mxu0 0
        %1769 = vmatpush1.bf16.xpose.msra.mxu0 0
        %1770 = vmatprep.subr.bf16.mxu0 0
        %1771 = vmatpush1.bf16.xpose.msra.mxu0 0
        %1772 = vmatprep.subr.bf16.mxu0 0
        %1773 = vmatpush1.bf16.xpose.msra.mxu0 0
        %1774 = vmatprep.subr.bf16.mxu0 0
        %1775 = vmatpush1.bf16.xpose.msra.mxu0 0
        %1776 = vmatprep.subr.bf16.mxu0 0
        %1777 = vmatpush1.bf16.xpose.msra.mxu0 0
        %1778 = vmatprep.subr.bf16.mxu0 0
        %1779 = vmatpush1.bf16.xpose.msra.mxu0 0
        %1780 = vmatprep.subr.bf16.mxu0 0
        %1781 = vmatpush1.bf16.xpose.msra.mxu0 0
        %1782 = vmatprep.subr.bf16.mxu0 0
        %1783 = vmatpush1.bf16.xpose.msra.mxu0 0
        %1784 = vmatprep.subr.bf16.mxu0 0
        %1785 = vmatpush1.bf16.xpose.msra.mxu0 0
        %1786 = vmatprep.subr.bf16.mxu0 0
        %1787 = vmatpush1.bf16.xpose.msra.mxu0 0
        %1788 = vmatprep.subr.bf16.mxu0 0
        %1789 = vmatpush1.bf16.xpose.msra.mxu0 0
        %1790 = vmatprep.subr.bf16.mxu0 0
        %1791 = vmatpush1.bf16.xpose.msra.mxu0 0
        %1792 = vmatprep.subr.bf16.mxu0 0
        %1793 = vmatpush1.bf16.xpose.msra.mxu0 0
        %1794 = vmatprep.mubr.bf16.mxu0 0
        %1795 = vmatmul.mubr.bf16.gmra.mrb[0].mxu0 %v1757
        %v1796 = vpop.f32.mrb[0].mxu0
        %v1797 = vadd.f32 0.0, %v1796
        %v1798 = vpop.f32.mrb[0].mxu0
        %v1799 = vpop.f32.mrb[0].mxu0
        %v1800 = vpop.f32.mrb[0].mxu0
        %1801 = vdwg.mxu0
        %1802 = vrot.lane.b32.xlu0 %v1189, 32
        %v1803 = vpop.permute.xlu0 %1802
        %1804 = vrot.lane.b32.xlu0 %v1201, 32
        %v1805 = vpop.permute.xlu0 %1804
        %v1807 = vsel %vm1217, %v1803, 0
        %v1810 = vsel %vm1217, %v1805, 0
        %1812 = vmatprep.subr.bf16.mxu0 0
        %1813 = vmatpush1.bf16.xpose.msra.mxu0 %v1810
        %1814 = vmatprep.subr.bf16.mxu0 0
        %1815 = vmatpush1.bf16.xpose.msra.mxu0 0
        %1816 = vmatprep.subr.bf16.mxu0 0
        %1817 = vmatpush1.bf16.xpose.msra.mxu0 0
        %1818 = vmatprep.subr.bf16.mxu0 0
        %1819 = vmatpush1.bf16.xpose.msra.mxu0 0
        %1820 = vmatprep.subr.bf16.mxu0 0
        %1821 = vmatpush1.bf16.xpose.msra.mxu0 0
        %1822 = vmatprep.subr.bf16.mxu0 0
        %1823 = vmatpush1.bf16.xpose.msra.mxu0 0
        %1824 = vmatprep.subr.bf16.mxu0 0
        %1825 = vmatpush1.bf16.xpose.msra.mxu0 0
        %1826 = vmatprep.subr.bf16.mxu0 0
        %1827 = vmatpush1.bf16.xpose.msra.mxu0 0
        %1828 = vmatprep.subr.bf16.mxu0 0
        %1829 = vmatpush1.bf16.xpose.msra.mxu0 0
        %1830 = vmatprep.subr.bf16.mxu0 0
        %1831 = vmatpush1.bf16.xpose.msra.mxu0 0
        %1832 = vmatprep.subr.bf16.mxu0 0
        %1833 = vmatpush1.bf16.xpose.msra.mxu0 0
        %1834 = vmatprep.subr.bf16.mxu0 0
        %1835 = vmatpush1.bf16.xpose.msra.mxu0 0
        %1836 = vmatprep.subr.bf16.mxu0 0
        %1837 = vmatpush1.bf16.xpose.msra.mxu0 0
        %1838 = vmatprep.subr.bf16.mxu0 0
        %1839 = vmatpush1.bf16.xpose.msra.mxu0 0
        %1840 = vmatprep.subr.bf16.mxu0 0
        %1841 = vmatpush1.bf16.xpose.msra.mxu0 0
        %1842 = vmatprep.subr.bf16.mxu0 0
        %1843 = vmatpush1.bf16.xpose.msra.mxu0 0
        %1844 = vmatprep.mubr.bf16.mxu0 0
        %1845 = vmatmul.mubr.bf16.gmra.mrb[0].mxu0 %v1807
        %v1846 = vpop.f32.mrb[0].mxu0
        %v1847 = vadd.f32 0.0, %v1846
        %v1848 = vpop.f32.mrb[0].mxu0
        %v1849 = vpop.f32.mrb[0].mxu0
        %v1850 = vpop.f32.mrb[0].mxu0
        %1851 = vdwg.mxu0
        %1852 = vrot.lane.b32.xlu0 %v1190, 32
        %v1853 = vpop.permute.xlu0 %1852
        %1854 = vrot.lane.b32.xlu0 %v1202, 32
        %v1855 = vpop.permute.xlu0 %1854
        %v1857 = vsel %vm1217, %v1853, 0
        %v1860 = vsel %vm1217, %v1855, 0
        %1862 = vmatprep.subr.bf16.mxu0 0
        %1863 = vmatpush1.bf16.xpose.msra.mxu0 %v1860
        %1864 = vmatprep.subr.bf16.mxu0 0
        %1865 = vmatpush1.bf16.xpose.msra.mxu0 0
        %1866 = vmatprep.subr.bf16.mxu0 0
        %1867 = vmatpush1.bf16.xpose.msra.mxu0 0
        %1868 = vmatprep.subr.bf16.mxu0 0
        %1869 = vmatpush1.bf16.xpose.msra.mxu0 0
        %1870 = vmatprep.subr.bf16.mxu0 0
        %1871 = vmatpush1.bf16.xpose.msra.mxu0 0
        %1872 = vmatprep.subr.bf16.mxu0 0
        %1873 = vmatpush1.bf16.xpose.msra.mxu0 0
        %1874 = vmatprep.subr.bf16.mxu0 0
        %1875 = vmatpush1.bf16.xpose.msra.mxu0 0
        %1876 = vmatprep.subr.bf16.mxu0 0
        %1877 = vmatpush1.bf16.xpose.msra.mxu0 0
        %1878 = vmatprep.subr.bf16.mxu0 0
        %1879 = vmatpush1.bf16.xpose.msra.mxu0 0
        %1880 = vmatprep.subr.bf16.mxu0 0
        %1881 = vmatpush1.bf16.xpose.msra.mxu0 0
        %1882 = vmatprep.subr.bf16.mxu0 0
        %1883 = vmatpush1.bf16.xpose.msra.mxu0 0
        %1884 = vmatprep.subr.bf16.mxu0 0
        %1885 = vmatpush1.bf16.xpose.msra.mxu0 0
        %1886 = vmatprep.subr.bf16.mxu0 0
        %1887 = vmatpush1.bf16.xpose.msra.mxu0 0
        %1888 = vmatprep.subr.bf16.mxu0 0
        %1889 = vmatpush1.bf16.xpose.msra.mxu0 0
        %1890 = vmatprep.subr.bf16.mxu0 0
        %1891 = vmatpush1.bf16.xpose.msra.mxu0 0
        %1892 = vmatprep.subr.bf16.mxu0 0
        %1893 = vmatpush1.bf16.xpose.msra.mxu0 0
        %1894 = vmatprep.mubr.bf16.mxu0 0
        %1895 = vmatmul.mubr.bf16.gmra.mrb[0].mxu0 %v1857
        %v1896 = vpop.f32.mrb[0].mxu0
        %v1897 = vadd.f32 0.0, %v1896
        %v1898 = vpop.f32.mrb[0].mxu0
        %v1899 = vpop.f32.mrb[0].mxu0
        %v1900 = vpop.f32.mrb[0].mxu0
        %1901 = vdwg.mxu0
        %1902 = vrot.lane.b32.xlu0 %v1191, 32
        %v1903 = vpop.permute.xlu0 %1902
        %1904 = vrot.lane.b32.xlu0 %v1203, 32
        %v1905 = vpop.permute.xlu0 %1904
        %v1907 = vsel %vm1217, %v1903, 0
        %v1910 = vsel %vm1217, %v1905, 0
        %1912 = vmatprep.subr.bf16.mxu0 0
        %1913 = vmatpush1.bf16.xpose.msra.mxu0 %v1910
        %1914 = vmatprep.subr.bf16.mxu0 0
        %1915 = vmatpush1.bf16.xpose.msra.mxu0 0
        %1916 = vmatprep.subr.bf16.mxu0 0
        %1917 = vmatpush1.bf16.xpose.msra.mxu0 0
        %1918 = vmatprep.subr.bf16.mxu0 0
        %1919 = vmatpush1.bf16.xpose.msra.mxu0 0
        %1920 = vmatprep.subr.bf16.mxu0 0
        %1921 = vmatpush1.bf16.xpose.msra.mxu0 0
        %1922 = vmatprep.subr.bf16.mxu0 0
        %1923 = vmatpush1.bf16.xpose.msra.mxu0 0
        %1924 = vmatprep.subr.bf16.mxu0 0
        %1925 = vmatpush1.bf16.xpose.msra.mxu0 0
        %1926 = vmatprep.subr.bf16.mxu0 0
        %1927 = vmatpush1.bf16.xpose.msra.mxu0 0
        %1928 = vmatprep.subr.bf16.mxu0 0
        %1929 = vmatpush1.bf16.xpose.msra.mxu0 0
        %1930 = vmatprep.subr.bf16.mxu0 0
        %1931 = vmatpush1.bf16.xpose.msra.mxu0 0
        %1932 = vmatprep.subr.bf16.mxu0 0
        %1933 = vmatpush1.bf16.xpose.msra.mxu0 0
        %1934 = vmatprep.subr.bf16.mxu0 0
        %1935 = vmatpush1.bf16.xpose.msra.mxu0 0
        %1936 = vmatprep.subr.bf16.mxu0 0
        %1937 = vmatpush1.bf16.xpose.msra.mxu0 0
        %1938 = vmatprep.subr.bf16.mxu0 0
        %1939 = vmatpush1.bf16.xpose.msra.mxu0 0
        %1940 = vmatprep.subr.bf16.mxu0 0
        %1941 = vmatpush1.bf16.xpose.msra.mxu0 0
        %1942 = vmatprep.subr.bf16.mxu0 0
        %1943 = vmatpush1.bf16.xpose.msra.mxu0 0
        %1944 = vmatprep.mubr.bf16.mxu0 0
        %1945 = vmatmul.mubr.bf16.gmra.mrb[0].mxu0 %v1907
        %v1946 = vpop.f32.mrb[0].mxu0
        %v1947 = vadd.f32 0.0, %v1946
        %v1948 = vpop.f32.mrb[0].mxu0
        %v1949 = vpop.f32.mrb[0].mxu0
        %v1950 = vpop.f32.mrb[0].mxu0
        %1951 = vdwg.mxu0
        %1952 = vrot.lane.b32.xlu0 %v1192, 32
        %v1953 = vpop.permute.xlu0 %1952
        %1954 = vrot.lane.b32.xlu0 %v1204, 32
        %v1955 = vpop.permute.xlu0 %1954
        %v1957 = vsel %vm1217, %v1953, 0
        %v1960 = vsel %vm1217, %v1955, 0
        %1962 = vmatprep.subr.bf16.mxu0 0
        %1963 = vmatpush1.bf16.xpose.msra.mxu0 %v1960
        %1964 = vmatprep.subr.bf16.mxu0 0
        %1965 = vmatpush1.bf16.xpose.msra.mxu0 0
        %1966 = vmatprep.subr.bf16.mxu0 0
        %1967 = vmatpush1.bf16.xpose.msra.mxu0 0
        %1968 = vmatprep.subr.bf16.mxu0 0
        %1969 = vmatpush1.bf16.xpose.msra.mxu0 0
        %1970 = vmatprep.subr.bf16.mxu0 0
        %1971 = vmatpush1.bf16.xpose.msra.mxu0 0
        %1972 = vmatprep.subr.bf16.mxu0 0
        %1973 = vmatpush1.bf16.xpose.msra.mxu0 0
        %1974 = vmatprep.subr.bf16.mxu0 0
        %1975 = vmatpush1.bf16.xpose.msra.mxu0 0
        %1976 = vmatprep.subr.bf16.mxu0 0
        %1977 = vmatpush1.bf16.xpose.msra.mxu0 0
        %1978 = vmatprep.subr.bf16.mxu0 0
        %1979 = vmatpush1.bf16.xpose.msra.mxu0 0
        %1980 = vmatprep.subr.bf16.mxu0 0
        %1981 = vmatpush1.bf16.xpose.msra.mxu0 0
        %1982 = vmatprep.subr.bf16.mxu0 0
        %1983 = vmatpush1.bf16.xpose.msra.mxu0 0
        %1984 = vmatprep.subr.bf16.mxu0 0
        %1985 = vmatpush1.bf16.xpose.msra.mxu0 0
        %1986 = vmatprep.subr.bf16.mxu0 0
        %1987 = vmatpush1.bf16.xpose.msra.mxu0 0
        %1988 = vmatprep.subr.bf16.mxu0 0
        %1989 = vmatpush1.bf16.xpose.msra.mxu0 0
        %1990 = vmatprep.subr.bf16.mxu0 0
        %1991 = vmatpush1.bf16.xpose.msra.mxu0 0
        %1992 = vmatprep.subr.bf16.mxu0 0
        %1993 = vmatpush1.bf16.xpose.msra.mxu0 0
        %1994 = vmatprep.mubr.bf16.mxu0 0
        %1995 = vmatmul.mubr.bf16.gmra.mrb[0].mxu0 %v1957
        %v1996 = vpop.f32.mrb[0].mxu0
        %v1997 = vadd.f32 0.0, %v1996
        %v1998 = vpop.f32.mrb[0].mxu0
        %v1999 = vpop.f32.mrb[0].mxu0
        %v2000 = vpop.f32.mrb[0].mxu0
        %2001 = vdwg.mxu0
        %v2002 = vmul.f32 %v1259, 0.17677669
        %v2003 = vmul.f32 %v1447, 0.17677669
        %v2004 = vmul.f32 %v1647, 0.17677669
        %v2005 = vmul.f32 %v1847, 0.17677669
        %v2006 = vmul.f32 %v1305, 0.17677669
        %v2007 = vmul.f32 %v1497, 0.17677669
        %v2008 = vmul.f32 %v1697, 0.17677669
        %v2009 = vmul.f32 %v1897, 0.17677669
        %v2010 = vmul.f32 %v1351, 0.17677669
        %v2011 = vmul.f32 %v1547, 0.17677669
        %v2012 = vmul.f32 %v1747, 0.17677669
        %v2013 = vmul.f32 %v1947, 0.17677669
        %v2014 = vmul.f32 %v1397, 0.17677669
        %v2015 = vmul.f32 %v1597, 0.17677669
        %v2016 = vmul.f32 %v1797, 0.17677669
        %v2017 = vmul.f32 %v1997, 0.17677669
        %vm2018 = vcmask 64512
        %v2019 = vsel %vm2018, %v2002, -inf
        %2020 = vmax.xlane.f32.xlu0 %v2019
        %v2021 = vpop.xlane.xlu0 %2020
        %v2022 = vsel %vm2018, %v2003, -inf
        %2023 = vmax.xlane.f32.xlu0 %v2022
        %v2024 = vpop.xlane.xlu0 %2023
        %v2025 = vsel %vm2018, %v2004, -inf
        %2026 = vmax.xlane.f32.xlu0 %v2025
        %v2027 = vpop.xlane.xlu0 %2026
        %v2028 = vsel %vm2018, %v2005, -inf
        %2029 = vmax.xlane.f32.xlu0 %v2028
        %v2030 = vpop.xlane.xlu0 %2029
        %v2031 = vsel %vm2018, %v2006, -inf
        %2032 = vmax.xlane.f32.xlu0 %v2031
        %v2033 = vpop.xlane.xlu0 %2032
        %v2034 = vsel %vm2018, %v2007, -inf
        %2035 = vmax.xlane.f32.xlu0 %v2034
        %v2036 = vpop.xlane.xlu0 %2035
        %v2037 = vsel %vm2018, %v2008, -inf
        %2038 = vmax.xlane.f32.xlu0 %v2037
        %v2039 = vpop.xlane.xlu0 %2038
        %v2040 = vsel %vm2018, %v2009, -inf
        %2041 = vmax.xlane.f32.xlu0 %v2040
        %v2042 = vpop.xlane.xlu0 %2041
        %v2043 = vsel %vm2018, %v2010, -inf
        %2044 = vmax.xlane.f32.xlu0 %v2043
        %v2045 = vpop.xlane.xlu0 %2044
        %v2046 = vsel %vm2018, %v2011, -inf
        %2047 = vmax.xlane.f32.xlu0 %v2046
        %v2048 = vpop.xlane.xlu0 %2047
        %v2049 = vsel %vm2018, %v2012, -inf
        %2050 = vmax.xlane.f32.xlu0 %v2049
        %v2051 = vpop.xlane.xlu0 %2050
        %v2052 = vsel %vm2018, %v2013, -inf
        %2053 = vmax.xlane.f32.xlu0 %v2052
        %v2054 = vpop.xlane.xlu0 %2053
        %v2055 = vsel %vm2018, %v2014, -inf
        %2056 = vmax.xlane.f32.xlu0 %v2055
        %v2057 = vpop.xlane.xlu0 %2056
        %v2058 = vsel %vm2018, %v2015, -inf
        %2059 = vmax.xlane.f32.xlu0 %v2058
        %v2060 = vpop.xlane.xlu0 %2059
        %v2061 = vsel %vm2018, %v2016, -inf
        %2062 = vmax.xlane.f32.xlu0 %v2061
        %v2063 = vpop.xlane.xlu0 %2062
        %v2064 = vsel %vm2018, %v2017, -inf
        %2065 = vmax.xlane.f32.xlu0 %v2064
        %v2066 = vpop.xlane.xlu0 %2065
        %v2067 = vsub.f32 %v2002, %v2021
        %v2068 = vsub.f32 %v2003, %v2024
        %v2069 = vsub.f32 %v2004, %v2027
        %v2070 = vsub.f32 %v2005, %v2030
        %v2071 = vsub.f32 %v2006, %v2033
        %v2072 = vsub.f32 %v2007, %v2036
        %v2073 = vsub.f32 %v2008, %v2039
        %v2074 = vsub.f32 %v2009, %v2042
        %v2075 = vsub.f32 %v2010, %v2045
        %v2076 = vsub.f32 %v2011, %v2048
        %v2077 = vsub.f32 %v2012, %v2051
        %v2078 = vsub.f32 %v2013, %v2054
        %v2079 = vsub.f32 %v2014, %v2057
        %v2080 = vsub.f32 %v2015, %v2060
        %v2081 = vsub.f32 %v2016, %v2063
        %v2082 = vsub.f32 %v2017, %v2066
        %v2083 = vmul.f32 %v2067, 1.442695
        %v2084 = vpow.pop %v2083
        %v2085 = vmul.f32 %v2068, 1.442695
        %v2086 = vpow.pop %v2085
        %v2087 = vmul.f32 %v2069, 1.442695
        %v2088 = vpow.pop %v2087
        %v2089 = vmul.f32 %v2070, 1.442695
        %v2090 = vpow.pop %v2089
        %v2091 = vmul.f32 %v2071, 1.442695
        %v2092 = vpow.pop %v2091
        %v2093 = vmul.f32 %v2072, 1.442695
        %v2094 = vpow.pop %v2093
        %v2095 = vmul.f32 %v2073, 1.442695
        %v2096 = vpow.pop %v2095
        %v2097 = vmul.f32 %v2074, 1.442695
        %v2098 = vpow.pop %v2097
        %v2099 = vmul.f32 %v2075, 1.442695
        %v2100 = vpow.pop %v2099
        %v2101 = vmul.f32 %v2076, 1.442695
        %v2102 = vpow.pop %v2101
        %v2103 = vmul.f32 %v2077, 1.442695
        %v2104 = vpow.pop %v2103
        %v2105 = vmul.f32 %v2078, 1.442695
        %v2106 = vpow.pop %v2105
        %v2107 = vmul.f32 %v2079, 1.442695
        %v2108 = vpow.pop %v2107
        %v2109 = vmul.f32 %v2080, 1.442695
        %v2110 = vpow.pop %v2109
        %v2111 = vmul.f32 %v2081, 1.442695
        %v2112 = vpow.pop %v2111
        %v2113 = vmul.f32 %v2082, 1.442695
        %v2114 = vpow.pop %v2113
        %v2115 = vsel %vm2018, %v2084, 0.0
        %2116 = vadd.xlane.f32.xlu0 %v2115
        %v2117 = vpop.xlane.xlu0 %2116
        %v2118 = vsel %vm2018, %v2086, 0.0
        %2119 = vadd.xlane.f32.xlu0 %v2118
        %v2120 = vpop.xlane.xlu0 %2119
        %v2121 = vsel %vm2018, %v2088, 0.0
        %2122 = vadd.xlane.f32.xlu0 %v2121
        %v2123 = vpop.xlane.xlu0 %2122
        %v2124 = vsel %vm2018, %v2090, 0.0
        %2125 = vadd.xlane.f32.xlu0 %v2124
        %v2126 = vpop.xlane.xlu0 %2125
        %v2127 = vsel %vm2018, %v2092, 0.0
        %2128 = vadd.xlane.f32.xlu0 %v2127
        %v2129 = vpop.xlane.xlu0 %2128
        %v2130 = vsel %vm2018, %v2094, 0.0
        %2131 = vadd.xlane.f32.xlu0 %v2130
        %v2132 = vpop.xlane.xlu0 %2131
        %v2133 = vsel %vm2018, %v2096, 0.0
        %2134 = vadd.xlane.f32.xlu0 %v2133
        %v2135 = vpop.xlane.xlu0 %2134
        %v2136 = vsel %vm2018, %v2098, 0.0
        %2137 = vadd.xlane.f32.xlu0 %v2136
        %v2138 = vpop.xlane.xlu0 %2137
        %v2139 = vsel %vm2018, %v2100, 0.0
        %2140 = vadd.xlane.f32.xlu0 %v2139
        %v2141 = vpop.xlane.xlu0 %2140
        %v2142 = vsel %vm2018, %v2102, 0.0
        %2143 = vadd.xlane.f32.xlu0 %v2142
        %v2144 = vpop.xlane.xlu0 %2143
        %v2145 = vsel %vm2018, %v2104, 0.0
        %2146 = vadd.xlane.f32.xlu0 %v2145
        %v2147 = vpop.xlane.xlu0 %2146
        %v2148 = vsel %vm2018, %v2106, 0.0
        %2149 = vadd.xlane.f32.xlu0 %v2148
        %v2150 = vpop.xlane.xlu0 %2149
        %v2151 = vsel %vm2018, %v2108, 0.0
        %2152 = vadd.xlane.f32.xlu0 %v2151
        %v2153 = vpop.xlane.xlu0 %2152
        %v2154 = vsel %vm2018, %v2110, 0.0
        %2155 = vadd.xlane.f32.xlu0 %v2154
        %v2156 = vpop.xlane.xlu0 %2155
        %v2157 = vsel %vm2018, %v2112, 0.0
        %2158 = vadd.xlane.f32.xlu0 %v2157
        %v2159 = vpop.xlane.xlu0 %2158
        %v2160 = vsel %vm2018, %v2114, 0.0
        %2161 = vadd.xlane.f32.xlu0 %v2160
        %v2162 = vpop.xlane.xlu0 %2161
        %v2163 = vrcp.pop %v2117
        %v2164 = vrcp.pop %v2120
        %v2165 = vrcp.pop %v2123
        %v2166 = vrcp.pop %v2126
        %v2167 = vrcp.pop %v2129
        %v2168 = vrcp.pop %v2132
        %v2169 = vrcp.pop %v2135
        %v2170 = vrcp.pop %v2138
        %v2171 = vrcp.pop %v2141
        %v2172 = vrcp.pop %v2144
        %v2173 = vrcp.pop %v2147
        %v2174 = vrcp.pop %v2150
        %v2175 = vrcp.pop %v2153
        %v2176 = vrcp.pop %v2156
        %v2177 = vrcp.pop %v2159
        %v2178 = vrcp.pop %v2162
        %v2179 = vmul.f32 %v2084, %v2163
        %v2180 = vmul.f32 %v2086, %v2164
        %v2181 = vmul.f32 %v2088, %v2165
        %v2182 = vmul.f32 %v2090, %v2166
        %v2183 = vmul.f32 %v2092, %v2167
        %v2184 = vmul.f32 %v2094, %v2168
        %v2185 = vmul.f32 %v2096, %v2169
        %v2186 = vmul.f32 %v2098, %v2170
        %v2187 = vmul.f32 %v2100, %v2171
        %v2188 = vmul.f32 %v2102, %v2172
        %v2189 = vmul.f32 %v2104, %v2173
        %v2190 = vmul.f32 %v2106, %v2174
        %v2191 = vmul.f32 %v2108, %v2175
        %v2192 = vmul.f32 %v2110, %v2176
        %v2193 = vmul.f32 %v2112, %v2177
        %v2194 = vmul.f32 %v2114, %v2178
        %v2195 = vpack.c.bf16 %v2180, %v2179
        %v2196 = vpack.c.bf16 %v2182, %v2181
        %v2197 = vpack.c.bf16 %v2184, %v2183
        %v2198 = vpack.c.bf16 %v2186, %v2185
        %v2199 = vpack.c.bf16 %v2188, %v2187
        %v2200 = vpack.c.bf16 %v2190, %v2189
        %v2201 = vpack.c.bf16 %v2192, %v2191
        %v2202 = vpack.c.bf16 %v2194, %v2193
        %v2204 = vsel %vm2018, %v2195, 0
        %vm2206 = vcmask 1043456
        %v2208 = vsel %vm2206, %v1213, 0
        %2210 = vmatprep.subr.bf16.mxu0 0
        %2211 = vmatpush1.bf16.msra.mxu0 %v2208
        %2212 = vmatprep.subr.bf16.mxu0 0
        %2213 = vmatpush1.bf16.msra.mxu0 0
        %2214 = vmatprep.subr.bf16.mxu0 0
        %2215 = vmatpush1.bf16.msra.mxu0 0
        %2216 = vmatprep.subr.bf16.mxu0 0
        %2217 = vmatpush1.bf16.msra.mxu0 0
        %2218 = vmatprep.subr.bf16.mxu0 0
        %2219 = vmatpush1.bf16.msra.mxu0 0
        %2220 = vmatprep.subr.bf16.mxu0 0
        %2221 = vmatpush1.bf16.msra.mxu0 0
        %2222 = vmatprep.subr.bf16.mxu0 0
        %2223 = vmatpush1.bf16.msra.mxu0 0
        %2224 = vmatprep.subr.bf16.mxu0 0
        %2225 = vmatpush1.bf16.msra.mxu0 0
        %2226 = vmatprep.subr.bf16.mxu0 0
        %2227 = vmatpush1.bf16.msra.mxu0 0
        %2228 = vmatprep.subr.bf16.mxu0 0
        %2229 = vmatpush1.bf16.msra.mxu0 0
        %2230 = vmatprep.subr.bf16.mxu0 0
        %2231 = vmatpush1.bf16.msra.mxu0 0
        %2232 = vmatprep.subr.bf16.mxu0 0
        %2233 = vmatpush1.bf16.msra.mxu0 0
        %2234 = vmatprep.subr.bf16.mxu0 0
        %2235 = vmatpush1.bf16.msra.mxu0 0
        %2236 = vmatprep.subr.bf16.mxu0 0
        %2237 = vmatpush1.bf16.msra.mxu0 0
        %2238 = vmatprep.subr.bf16.mxu0 0
        %2239 = vmatpush1.bf16.msra.mxu0 0
        %2240 = vmatprep.subr.bf16.mxu0 0
        %2241 = vmatpush1.bf16.msra.mxu0 0
        %2242 = vmatprep.mubr.bf16.mxu0 0
        %2243 = vmatmul.mubr.bf16.gmra.mrb[0].mxu0 %v2204
        %v2244 = vpop.f32.mrb[0].mxu0
        %v2245 = vadd.f32 0.0, %v2244
        %v2246 = vpop.f32.mrb[0].mxu0
        %v2247 = vpop.f32.mrb[0].mxu0
        %v2248 = vpop.f32.mrb[0].mxu0
        %2249 = vdwg.mxu0
        %v2251 = vsel %vm2018, %v2197, 0
        %v2254 = vsel %vm2206, %v1214, 0
        %2256 = vmatprep.subr.bf16.mxu0 0
        %2257 = vmatpush1.bf16.msra.mxu0 %v2254
        %2258 = vmatprep.subr.bf16.mxu0 0
        %2259 = vmatpush1.bf16.msra.mxu0 0
        %2260 = vmatprep.subr.bf16.mxu0 0
        %2261 = vmatpush1.bf16.msra.mxu0 0
        %2262 = vmatprep.subr.bf16.mxu0 0
        %2263 = vmatpush1.bf16.msra.mxu0 0
        %2264 = vmatprep.subr.bf16.mxu0 0
        %2265 = vmatpush1.bf16.msra.mxu0 0
        %2266 = vmatprep.subr.bf16.mxu0 0
        %2267 = vmatpush1.bf16.msra.mxu0 0
        %2268 = vmatprep.subr.bf16.mxu0 0
        %2269 = vmatpush1.bf16.msra.mxu0 0
        %2270 = vmatprep.subr.bf16.mxu0 0
        %2271 = vmatpush1.bf16.msra.mxu0 0
        %2272 = vmatprep.subr.bf16.mxu0 0
        %2273 = vmatpush1.bf16.msra.mxu0 0
        %2274 = vmatprep.subr.bf16.mxu0 0
        %2275 = vmatpush1.bf16.msra.mxu0 0
        %2276 = vmatprep.subr.bf16.mxu0 0
        %2277 = vmatpush1.bf16.msra.mxu0 0
        %2278 = vmatprep.subr.bf16.mxu0 0
        %2279 = vmatpush1.bf16.msra.mxu0 0
        %2280 = vmatprep.subr.bf16.mxu0 0
        %2281 = vmatpush1.bf16.msra.mxu0 0
        %2282 = vmatprep.subr.bf16.mxu0 0
        %2283 = vmatpush1.bf16.msra.mxu0 0
        %2284 = vmatprep.subr.bf16.mxu0 0
        %2285 = vmatpush1.bf16.msra.mxu0 0
        %2286 = vmatprep.subr.bf16.mxu0 0
        %2287 = vmatpush1.bf16.msra.mxu0 0
        %2288 = vmatprep.mubr.bf16.mxu0 0
        %2289 = vmatmul.mubr.bf16.gmra.mrb[0].mxu0 %v2251
        %v2290 = vpop.f32.mrb[0].mxu0
        %v2291 = vadd.f32 0.0, %v2290
        %v2292 = vpop.f32.mrb[0].mxu0
        %v2293 = vpop.f32.mrb[0].mxu0
        %v2294 = vpop.f32.mrb[0].mxu0
        %2295 = vdwg.mxu0
        %v2297 = vsel %vm2018, %v2199, 0
        %v2300 = vsel %vm2206, %v1215, 0
        %2302 = vmatprep.subr.bf16.mxu0 0
        %2303 = vmatpush1.bf16.msra.mxu0 %v2300
        %2304 = vmatprep.subr.bf16.mxu0 0
        %2305 = vmatpush1.bf16.msra.mxu0 0
        %2306 = vmatprep.subr.bf16.mxu0 0
        %2307 = vmatpush1.bf16.msra.mxu0 0
        %2308 = vmatprep.subr.bf16.mxu0 0
        %2309 = vmatpush1.bf16.msra.mxu0 0
        %2310 = vmatprep.subr.bf16.mxu0 0
        %2311 = vmatpush1.bf16.msra.mxu0 0
        %2312 = vmatprep.subr.bf16.mxu0 0
        %2313 = vmatpush1.bf16.msra.mxu0 0
        %2314 = vmatprep.subr.bf16.mxu0 0
        %2315 = vmatpush1.bf16.msra.mxu0 0
        %2316 = vmatprep.subr.bf16.mxu0 0
        %2317 = vmatpush1.bf16.msra.mxu0 0
        %2318 = vmatprep.subr.bf16.mxu0 0
        %2319 = vmatpush1.bf16.msra.mxu0 0
        %2320 = vmatprep.subr.bf16.mxu0 0
        %2321 = vmatpush1.bf16.msra.mxu0 0
        %2322 = vmatprep.subr.bf16.mxu0 0
        %2323 = vmatpush1.bf16.msra.mxu0 0
        %2324 = vmatprep.subr.bf16.mxu0 0
        %2325 = vmatpush1.bf16.msra.mxu0 0
        %2326 = vmatprep.subr.bf16.mxu0 0
        %2327 = vmatpush1.bf16.msra.mxu0 0
        %2328 = vmatprep.subr.bf16.mxu0 0
        %2329 = vmatpush1.bf16.msra.mxu0 0
        %2330 = vmatprep.subr.bf16.mxu0 0
        %2331 = vmatpush1.bf16.msra.mxu0 0
        %2332 = vmatprep.subr.bf16.mxu0 0
        %2333 = vmatpush1.bf16.msra.mxu0 0
        %2334 = vmatprep.mubr.bf16.mxu0 0
        %2335 = vmatmul.mubr.bf16.gmra.mrb[0].mxu0 %v2297
        %v2336 = vpop.f32.mrb[0].mxu0
        %v2337 = vadd.f32 0.0, %v2336
        %v2338 = vpop.f32.mrb[0].mxu0
        %v2339 = vpop.f32.mrb[0].mxu0
        %v2340 = vpop.f32.mrb[0].mxu0
        %2341 = vdwg.mxu0
        %v2343 = vsel %vm2018, %v2201, 0
        %v2346 = vsel %vm2206, %v1216, 0
        %2348 = vmatprep.subr.bf16.mxu0 0
        %2349 = vmatpush1.bf16.msra.mxu0 %v2346
        %2350 = vmatprep.subr.bf16.mxu0 0
        %2351 = vmatpush1.bf16.msra.mxu0 0
        %2352 = vmatprep.subr.bf16.mxu0 0
        %2353 = vmatpush1.bf16.msra.mxu0 0
        %2354 = vmatprep.subr.bf16.mxu0 0
        %2355 = vmatpush1.bf16.msra.mxu0 0
        %2356 = vmatprep.subr.bf16.mxu0 0
        %2357 = vmatpush1.bf16.msra.mxu0 0
        %2358 = vmatprep.subr.bf16.mxu0 0
        %2359 = vmatpush1.bf16.msra.mxu0 0
        %2360 = vmatprep.subr.bf16.mxu0 0
        %2361 = vmatpush1.bf16.msra.mxu0 0
        %2362 = vmatprep.subr.bf16.mxu0 0
        %2363 = vmatpush1.bf16.msra.mxu0 0
        %2364 = vmatprep.subr.bf16.mxu0 0
        %2365 = vmatpush1.bf16.msra.mxu0 0
        %2366 = vmatprep.subr.bf16.mxu0 0
        %2367 = vmatpush1.bf16.msra.mxu0 0
        %2368 = vmatprep.subr.bf16.mxu0 0
        %2369 = vmatpush1.bf16.msra.mxu0 0
        %2370 = vmatprep.subr.bf16.mxu0 0
        %2371 = vmatpush1.bf16.msra.mxu0 0
        %2372 = vmatprep.subr.bf16.mxu0 0
        %2373 = vmatpush1.bf16.msra.mxu0 0
        %2374 = vmatprep.subr.bf16.mxu0 0
        %2375 = vmatpush1.bf16.msra.mxu0 0
        %2376 = vmatprep.subr.bf16.mxu0 0
        %2377 = vmatpush1.bf16.msra.mxu0 0
        %2378 = vmatprep.subr.bf16.mxu0 0
        %2379 = vmatpush1.bf16.msra.mxu0 0
        %2380 = vmatprep.mubr.bf16.mxu0 0
        %2381 = vmatmul.mubr.bf16.gmra.mrb[0].mxu0 %v2343
        %v2382 = vpop.f32.mrb[0].mxu0
        %v2383 = vadd.f32 0.0, %v2382
        %v2384 = vpop.f32.mrb[0].mxu0
        %v2385 = vpop.f32.mrb[0].mxu0
        %v2386 = vpop.f32.mrb[0].mxu0
        %2387 = vdwg.mxu0
        %v2388 = vpack.c.bf16 %v2291, %v2245
        %v2389 = vpack.c.bf16 %v2383, %v2337
        %2390 = vst.msk [vmem:[#allocation3] sm:$0xff] %vm1217, %v2388
        %2391 = vst.msk [vmem:[#allocation3 + $0x8] sm:$0xff] %vm1217, %v2389
        %v2393 = vrot.slane %v2195, 4
        %2394 = vrot.lane.b32.xlu0 %v1213, 96
        %v2395 = vpop.permute.xlu0 %2394
        %v2397 = vsel %vm2018, %v2393, 0
        %v2400 = vsel %vm2206, %v2395, 0
        %2402 = vmatprep.subr.bf16.mxu0 0
        %2403 = vmatpush1.bf16.msra.mxu0 %v2400
        %2404 = vmatprep.subr.bf16.mxu0 0
        %2405 = vmatpush1.bf16.msra.mxu0 0
        %2406 = vmatprep.subr.bf16.mxu0 0
        %2407 = vmatpush1.bf16.msra.mxu0 0
        %2408 = vmatprep.subr.bf16.mxu0 0
        %2409 = vmatpush1.bf16.msra.mxu0 0
        %2410 = vmatprep.subr.bf16.mxu0 0
        %2411 = vmatpush1.bf16.msra.mxu0 0
        %2412 = vmatprep.subr.bf16.mxu0 0
        %2413 = vmatpush1.bf16.msra.mxu0 0
        %2414 = vmatprep.subr.bf16.mxu0 0
        %2415 = vmatpush1.bf16.msra.mxu0 0
        %2416 = vmatprep.subr.bf16.mxu0 0
        %2417 = vmatpush1.bf16.msra.mxu0 0
        %2418 = vmatprep.subr.bf16.mxu0 0
        %2419 = vmatpush1.bf16.msra.mxu0 0
        %2420 = vmatprep.subr.bf16.mxu0 0
        %2421 = vmatpush1.bf16.msra.mxu0 0
        %2422 = vmatprep.subr.bf16.mxu0 0
        %2423 = vmatpush1.bf16.msra.mxu0 0
        %2424 = vmatprep.subr.bf16.mxu0 0
        %2425 = vmatpush1.bf16.msra.mxu0 0
        %2426 = vmatprep.subr.bf16.mxu0 0
        %2427 = vmatpush1.bf16.msra.mxu0 0
        %2428 = vmatprep.subr.bf16.mxu0 0
        %2429 = vmatpush1.bf16.msra.mxu0 0
        %2430 = vmatprep.subr.bf16.mxu0 0
        %2431 = vmatpush1.bf16.msra.mxu0 0
        %2432 = vmatprep.subr.bf16.mxu0 0
        %2433 = vmatpush1.bf16.msra.mxu0 0
        %2434 = vmatprep.mubr.bf16.mxu0 0
        %2435 = vmatmul.mubr.bf16.gmra.mrb[0].mxu0 %v2397
        %v2436 = vpop.f32.mrb[0].mxu0
        %v2437 = vadd.f32 0.0, %v2436
        %v2438 = vpop.f32.mrb[0].mxu0
        %v2439 = vpop.f32.mrb[0].mxu0
        %v2440 = vpop.f32.mrb[0].mxu0
        %2441 = vdwg.mxu0
        %v2443 = vrot.slane %v2197, 4
        %2444 = vrot.lane.b32.xlu0 %v1214, 96
        %v2445 = vpop.permute.xlu0 %2444
        %v2447 = vsel %vm2018, %v2443, 0
        %v2450 = vsel %vm2206, %v2445, 0
        %2452 = vmatprep.subr.bf16.mxu0 0
        %2453 = vmatpush1.bf16.msra.mxu0 %v2450
        %2454 = vmatprep.subr.bf16.mxu0 0
        %2455 = vmatpush1.bf16.msra.mxu0 0
        %2456 = vmatprep.subr.bf16.mxu0 0
        %2457 = vmatpush1.bf16.msra.mxu0 0
        %2458 = vmatprep.subr.bf16.mxu0 0
        %2459 = vmatpush1.bf16.msra.mxu0 0
        %2460 = vmatprep.subr.bf16.mxu0 0
        %2461 = vmatpush1.bf16.msra.mxu0 0
        %2462 = vmatprep.subr.bf16.mxu0 0
        %2463 = vmatpush1.bf16.msra.mxu0 0
        %2464 = vmatprep.subr.bf16.mxu0 0
        %2465 = vmatpush1.bf16.msra.mxu0 0
        %2466 = vmatprep.subr.bf16.mxu0 0
        %2467 = vmatpush1.bf16.msra.mxu0 0
        %2468 = vmatprep.subr.bf16.mxu0 0
        %2469 = vmatpush1.bf16.msra.mxu0 0
        %2470 = vmatprep.subr.bf16.mxu0 0
        %2471 = vmatpush1.bf16.msra.mxu0 0
        %2472 = vmatprep.subr.bf16.mxu0 0
        %2473 = vmatpush1.bf16.msra.mxu0 0
        %2474 = vmatprep.subr.bf16.mxu0 0
        %2475 = vmatpush1.bf16.msra.mxu0 0
        %2476 = vmatprep.subr.bf16.mxu0 0
        %2477 = vmatpush1.bf16.msra.mxu0 0
        %2478 = vmatprep.subr.bf16.mxu0 0
        %2479 = vmatpush1.bf16.msra.mxu0 0
        %2480 = vmatprep.subr.bf16.mxu0 0
        %2481 = vmatpush1.bf16.msra.mxu0 0
        %2482 = vmatprep.subr.bf16.mxu0 0
        %2483 = vmatpush1.bf16.msra.mxu0 0
        %2484 = vmatprep.mubr.bf16.mxu0 0
        %2485 = vmatmul.mubr.bf16.gmra.mrb[0].mxu0 %v2447
        %v2486 = vpop.f32.mrb[0].mxu0
        %v2487 = vadd.f32 0.0, %v2486
        %v2488 = vpop.f32.mrb[0].mxu0
        %v2489 = vpop.f32.mrb[0].mxu0
        %v2490 = vpop.f32.mrb[0].mxu0
        %2491 = vdwg.mxu0
        %v2493 = vrot.slane %v2199, 4
        %2494 = vrot.lane.b32.xlu0 %v1215, 96
        %v2495 = vpop.permute.xlu0 %2494
        %v2497 = vsel %vm2018, %v2493, 0
        %v2500 = vsel %vm2206, %v2495, 0
        %2502 = vmatprep.subr.bf16.mxu0 0
        %2503 = vmatpush1.bf16.msra.mxu0 %v2500
        %2504 = vmatprep.subr.bf16.mxu0 0
        %2505 = vmatpush1.bf16.msra.mxu0 0
        %2506 = vmatprep.subr.bf16.mxu0 0
        %2507 = vmatpush1.bf16.msra.mxu0 0
        %2508 = vmatprep.subr.bf16.mxu0 0
        %2509 = vmatpush1.bf16.msra.mxu0 0
        %2510 = vmatprep.subr.bf16.mxu0 0
        %2511 = vmatpush1.bf16.msra.mxu0 0
        %2512 = vmatprep.subr.bf16.mxu0 0
        %2513 = vmatpush1.bf16.msra.mxu0 0
        %2514 = vmatprep.subr.bf16.mxu0 0
        %2515 = vmatpush1.bf16.msra.mxu0 0
        %2516 = vmatprep.subr.bf16.mxu0 0
        %2517 = vmatpush1.bf16.msra.mxu0 0
        %2518 = vmatprep.subr.bf16.mxu0 0
        %2519 = vmatpush1.bf16.msra.mxu0 0
        %2520 = vmatprep.subr.bf16.mxu0 0
        %2521 = vmatpush1.bf16.msra.mxu0 0
        %2522 = vmatprep.subr.bf16.mxu0 0
        %2523 = vmatpush1.bf16.msra.mxu0 0
        %2524 = vmatprep.subr.bf16.mxu0 0
        %2525 = vmatpush1.bf16.msra.mxu0 0
        %2526 = vmatprep.subr.bf16.mxu0 0
        %2527 = vmatpush1.bf16.msra.mxu0 0
        %2528 = vmatprep.subr.bf16.mxu0 0
        %2529 = vmatpush1.bf16.msra.mxu0 0
        %2530 = vmatprep.subr.bf16.mxu0 0
        %2531 = vmatpush1.bf16.msra.mxu0 0
        %2532 = vmatprep.subr.bf16.mxu0 0
        %2533 = vmatpush1.bf16.msra.mxu0 0
        %2534 = vmatprep.mubr.bf16.mxu0 0
        %2535 = vmatmul.mubr.bf16.gmra.mrb[0].mxu0 %v2497
        %v2536 = vpop.f32.mrb[0].mxu0
        %v2537 = vadd.f32 0.0, %v2536
        %v2538 = vpop.f32.mrb[0].mxu0
        %v2539 = vpop.f32.mrb[0].mxu0
        %v2540 = vpop.f32.mrb[0].mxu0
        %2541 = vdwg.mxu0
        %v2543 = vrot.slane %v2201, 4
        %2544 = vrot.lane.b32.xlu0 %v1216, 96
        %v2545 = vpop.permute.xlu0 %2544
        %v2547 = vsel %vm2018, %v2543, 0
        %v2550 = vsel %vm2206, %v2545, 0
        %2552 = vmatprep.subr.bf16.mxu0 0
        %2553 = vmatpush1.bf16.msra.mxu0 %v2550
        %2554 = vmatprep.subr.bf16.mxu0 0
        %2555 = vmatpush1.bf16.msra.mxu0 0
        %2556 = vmatprep.subr.bf16.mxu0 0
        %2557 = vmatpush1.bf16.msra.mxu0 0
        %2558 = vmatprep.subr.bf16.mxu0 0
        %2559 = vmatpush1.bf16.msra.mxu0 0
        %2560 = vmatprep.subr.bf16.mxu0 0
        %2561 = vmatpush1.bf16.msra.mxu0 0
        %2562 = vmatprep.subr.bf16.mxu0 0
        %2563 = vmatpush1.bf16.msra.mxu0 0
        %2564 = vmatprep.subr.bf16.mxu0 0
        %2565 = vmatpush1.bf16.msra.mxu0 0
        %2566 = vmatprep.subr.bf16.mxu0 0
        %2567 = vmatpush1.bf16.msra.mxu0 0
        %2568 = vmatprep.subr.bf16.mxu0 0
        %2569 = vmatpush1.bf16.msra.mxu0 0
        %2570 = vmatprep.subr.bf16.mxu0 0
        %2571 = vmatpush1.bf16.msra.mxu0 0
        %2572 = vmatprep.subr.bf16.mxu0 0
        %2573 = vmatpush1.bf16.msra.mxu0 0
        %2574 = vmatprep.subr.bf16.mxu0 0
        %2575 = vmatpush1.bf16.msra.mxu0 0
        %2576 = vmatprep.subr.bf16.mxu0 0
        %2577 = vmatpush1.bf16.msra.mxu0 0
        %2578 = vmatprep.subr.bf16.mxu0 0
        %2579 = vmatpush1.bf16.msra.mxu0 0
        %2580 = vmatprep.subr.bf16.mxu0 0
        %2581 = vmatpush1.bf16.msra.mxu0 0
        %2582 = vmatprep.subr.bf16.mxu0 0
        %2583 = vmatpush1.bf16.msra.mxu0 0
        %2584 = vmatprep.mubr.bf16.mxu0 0
        %2585 = vmatmul.mubr.bf16.gmra.mrb[0].mxu0 %v2547
        %v2586 = vpop.f32.mrb[0].mxu0
        %v2587 = vadd.f32 0.0, %v2586
        %v2588 = vpop.f32.mrb[0].mxu0
        %v2589 = vpop.f32.mrb[0].mxu0
        %v2590 = vpop.f32.mrb[0].mxu0
        %2591 = vdwg.mxu0
        %v2592 = vpack.c.bf16 %v2487, %v2437
        %v2593 = vpack.c.bf16 %v2587, %v2537
        %2596 = vrot.lane.b32.xlu0 %v2592, 32
        %v2597 = vpop.permute.xlu0 %2596
        %2598 = vrot.lane.b32.xlu0 %v2593, 32
        %v2599 = vpop.permute.xlu0 %2598
        %vm2602 = vcmask 523520
        %2603 = vst.msk [vmem:[#allocation3] sm:$0xff] %vm2602, %v2597
        %2604 = vst.msk [vmem:[#allocation3 + $0x8] sm:$0xff] %vm2602, %v2599
        %2605 = vrot.lane.b32.xlu0 %v1213, 64
        %v2606 = vpop.permute.xlu0 %2605
        %v2608 = vsel %vm2018, %v2196, 0
        %v2611 = vsel %vm2206, %v2606, 0
        %2613 = vmatprep.subr.bf16.mxu0 0
        %2614 = vmatpush1.bf16.msra.mxu0 %v2611
        %2615 = vmatprep.subr.bf16.mxu0 0
        %2616 = vmatpush1.bf16.msra.mxu0 0
        %2617 = vmatprep.subr.bf16.mxu0 0
        %2618 = vmatpush1.bf16.msra.mxu0 0
        %2619 = vmatprep.subr.bf16.mxu0 0
        %2620 = vmatpush1.bf16.msra.mxu0 0
        %2621 = vmatprep.subr.bf16.mxu0 0
        %2622 = vmatpush1.bf16.msra.mxu0 0
        %2623 = vmatprep.subr.bf16.mxu0 0
        %2624 = vmatpush1.bf16.msra.mxu0 0
        %2625 = vmatprep.subr.bf16.mxu0 0
        %2626 = vmatpush1.bf16.msra.mxu0 0
        %2627 = vmatprep.subr.bf16.mxu0 0
        %2628 = vmatpush1.bf16.msra.mxu0 0
        %2629 = vmatprep.subr.bf16.mxu0 0
        %2630 = vmatpush1.bf16.msra.mxu0 0
        %2631 = vmatprep.subr.bf16.mxu0 0
        %2632 = vmatpush1.bf16.msra.mxu0 0
        %2633 = vmatprep.subr.bf16.mxu0 0
        %2634 = vmatpush1.bf16.msra.mxu0 0
        %2635 = vmatprep.subr.bf16.mxu0 0
        %2636 = vmatpush1.bf16.msra.mxu0 0
        %2637 = vmatprep.subr.bf16.mxu0 0
        %2638 = vmatpush1.bf16.msra.mxu0 0
        %2639 = vmatprep.subr.bf16.mxu0 0
        %2640 = vmatpush1.bf16.msra.mxu0 0
        %2641 = vmatprep.subr.bf16.mxu0 0
        %2642 = vmatpush1.bf16.msra.mxu0 0
        %2643 = vmatprep.subr.bf16.mxu0 0
        %2644 = vmatpush1.bf16.msra.mxu0 0
        %2645 = vmatprep.mubr.bf16.mxu0 0
        %2646 = vmatmul.mubr.bf16.gmra.mrb[0].mxu0 %v2608
        %v2647 = vpop.f32.mrb[0].mxu0
        %v2648 = vadd.f32 0.0, %v2647
        %v2649 = vpop.f32.mrb[0].mxu0
        %v2650 = vpop.f32.mrb[0].mxu0
        %v2651 = vpop.f32.mrb[0].mxu0
        %2652 = vdwg.mxu0
        %2653 = vrot.lane.b32.xlu0 %v1214, 64
        %v2654 = vpop.permute.xlu0 %2653
        %v2656 = vsel %vm2018, %v2198, 0
        %v2659 = vsel %vm2206, %v2654, 0
        %2661 = vmatprep.subr.bf16.mxu0 0
        %2662 = vmatpush1.bf16.msra.mxu0 %v2659
        %2663 = vmatprep.subr.bf16.mxu0 0
        %2664 = vmatpush1.bf16.msra.mxu0 0
        %2665 = vmatprep.subr.bf16.mxu0 0
        %2666 = vmatpush1.bf16.msra.mxu0 0
        %2667 = vmatprep.subr.bf16.mxu0 0
        %2668 = vmatpush1.bf16.msra.mxu0 0
        %2669 = vmatprep.subr.bf16.mxu0 0
        %2670 = vmatpush1.bf16.msra.mxu0 0
        %2671 = vmatprep.subr.bf16.mxu0 0
        %2672 = vmatpush1.bf16.msra.mxu0 0
        %2673 = vmatprep.subr.bf16.mxu0 0
        %2674 = vmatpush1.bf16.msra.mxu0 0
        %2675 = vmatprep.subr.bf16.mxu0 0
        %2676 = vmatpush1.bf16.msra.mxu0 0
        %2677 = vmatprep.subr.bf16.mxu0 0
        %2678 = vmatpush1.bf16.msra.mxu0 0
        %2679 = vmatprep.subr.bf16.mxu0 0
        %2680 = vmatpush1.bf16.msra.mxu0 0
        %2681 = vmatprep.subr.bf16.mxu0 0
        %2682 = vmatpush1.bf16.msra.mxu0 0
        %2683 = vmatprep.subr.bf16.mxu0 0
        %2684 = vmatpush1.bf16.msra.mxu0 0
        %2685 = vmatprep.subr.bf16.mxu0 0
        %2686 = vmatpush1.bf16.msra.mxu0 0
        %2687 = vmatprep.subr.bf16.mxu0 0
        %2688 = vmatpush1.bf16.msra.mxu0 0
        %2689 = vmatprep.subr.bf16.mxu0 0
        %2690 = vmatpush1.bf16.msra.mxu0 0
        %2691 = vmatprep.subr.bf16.mxu0 0
        %2692 = vmatpush1.bf16.msra.mxu0 0
        %2693 = vmatprep.mubr.bf16.mxu0 0
        %2694 = vmatmul.mubr.bf16.gmra.mrb[0].mxu0 %v2656
        %v2695 = vpop.f32.mrb[0].mxu0
        %v2696 = vadd.f32 0.0, %v2695
        %v2697 = vpop.f32.mrb[0].mxu0
        %v2698 = vpop.f32.mrb[0].mxu0
        %v2699 = vpop.f32.mrb[0].mxu0
        %2700 = vdwg.mxu0
        %2701 = vrot.lane.b32.xlu0 %v1215, 64
        %v2702 = vpop.permute.xlu0 %2701
        %v2704 = vsel %vm2018, %v2200, 0
        %v2707 = vsel %vm2206, %v2702, 0
        %2709 = vmatprep.subr.bf16.mxu0 0
        %2710 = vmatpush1.bf16.msra.mxu0 %v2707
        %2711 = vmatprep.subr.bf16.mxu0 0
        %2712 = vmatpush1.bf16.msra.mxu0 0
        %2713 = vmatprep.subr.bf16.mxu0 0
        %2714 = vmatpush1.bf16.msra.mxu0 0
        %2715 = vmatprep.subr.bf16.mxu0 0
        %2716 = vmatpush1.bf16.msra.mxu0 0
        %2717 = vmatprep.subr.bf16.mxu0 0
        %2718 = vmatpush1.bf16.msra.mxu0 0
        %2719 = vmatprep.subr.bf16.mxu0 0
        %2720 = vmatpush1.bf16.msra.mxu0 0
        %2721 = vmatprep.subr.bf16.mxu0 0
        %2722 = vmatpush1.bf16.msra.mxu0 0
        %2723 = vmatprep.subr.bf16.mxu0 0
        %2724 = vmatpush1.bf16.msra.mxu0 0
        %2725 = vmatprep.subr.bf16.mxu0 0
        %2726 = vmatpush1.bf16.msra.mxu0 0
        %2727 = vmatprep.subr.bf16.mxu0 0
        %2728 = vmatpush1.bf16.msra.mxu0 0
        %2729 = vmatprep.subr.bf16.mxu0 0
        %2730 = vmatpush1.bf16.msra.mxu0 0
        %2731 = vmatprep.subr.bf16.mxu0 0
        %2732 = vmatpush1.bf16.msra.mxu0 0
        %2733 = vmatprep.subr.bf16.mxu0 0
        %2734 = vmatpush1.bf16.msra.mxu0 0
        %2735 = vmatprep.subr.bf16.mxu0 0
        %2736 = vmatpush1.bf16.msra.mxu0 0
        %2737 = vmatprep.subr.bf16.mxu0 0
        %2738 = vmatpush1.bf16.msra.mxu0 0
        %2739 = vmatprep.subr.bf16.mxu0 0
        %2740 = vmatpush1.bf16.msra.mxu0 0
        %2741 = vmatprep.mubr.bf16.mxu0 0
        %2742 = vmatmul.mubr.bf16.gmra.mrb[0].mxu0 %v2704
        %v2743 = vpop.f32.mrb[0].mxu0
        %v2744 = vadd.f32 0.0, %v2743
        %v2745 = vpop.f32.mrb[0].mxu0
        %v2746 = vpop.f32.mrb[0].mxu0
        %v2747 = vpop.f32.mrb[0].mxu0
        %2748 = vdwg.mxu0
        %2749 = vrot.lane.b32.xlu0 %v1216, 64
        %v2750 = vpop.permute.xlu0 %2749
        %v2752 = vsel %vm2018, %v2202, 0
        %v2755 = vsel %vm2206, %v2750, 0
        %2757 = vmatprep.subr.bf16.mxu0 0
        %2758 = vmatpush1.bf16.msra.mxu0 %v2755
        %2759 = vmatprep.subr.bf16.mxu0 0
        %2760 = vmatpush1.bf16.msra.mxu0 0
        %2761 = vmatprep.subr.bf16.mxu0 0
        %2762 = vmatpush1.bf16.msra.mxu0 0
        %2763 = vmatprep.subr.bf16.mxu0 0
        %2764 = vmatpush1.bf16.msra.mxu0 0
        %2765 = vmatprep.subr.bf16.mxu0 0
        %2766 = vmatpush1.bf16.msra.mxu0 0
        %2767 = vmatprep.subr.bf16.mxu0 0
        %2768 = vmatpush1.bf16.msra.mxu0 0
        %2769 = vmatprep.subr.bf16.mxu0 0
        %2770 = vmatpush1.bf16.msra.mxu0 0
        %2771 = vmatprep.subr.bf16.mxu0 0
        %2772 = vmatpush1.bf16.msra.mxu0 0
        %2773 = vmatprep.subr.bf16.mxu0 0
        %2774 = vmatpush1.bf16.msra.mxu0 0
        %2775 = vmatprep.subr.bf16.mxu0 0
        %2776 = vmatpush1.bf16.msra.mxu0 0
        %2777 = vmatprep.subr.bf16.mxu0 0
        %2778 = vmatpush1.bf16.msra.mxu0 0
        %2779 = vmatprep.subr.bf16.mxu0 0
        %2780 = vmatpush1.bf16.msra.mxu0 0
        %2781 = vmatprep.subr.bf16.mxu0 0
        %2782 = vmatpush1.bf16.msra.mxu0 0
        %2783 = vmatprep.subr.bf16.mxu0 0
        %2784 = vmatpush1.bf16.msra.mxu0 0
        %2785 = vmatprep.subr.bf16.mxu0 0
        %2786 = vmatpush1.bf16.msra.mxu0 0
        %2787 = vmatprep.subr.bf16.mxu0 0
        %2788 = vmatpush1.bf16.msra.mxu0 0
        %2789 = vmatprep.mubr.bf16.mxu0 0
        %2790 = vmatmul.mubr.bf16.gmra.mrb[0].mxu0 %v2752
        %v2791 = vpop.f32.mrb[0].mxu0
        %v2792 = vadd.f32 0.0, %v2791
        %v2793 = vpop.f32.mrb[0].mxu0
        %v2794 = vpop.f32.mrb[0].mxu0
        %v2795 = vpop.f32.mrb[0].mxu0
        %2796 = vdwg.mxu0
        %v2797 = vpack.c.bf16 %v2696, %v2648
        %v2798 = vpack.c.bf16 %v2792, %v2744
        %2801 = vrot.lane.b32.xlu0 %v2797, 64
        %v2802 = vpop.permute.xlu0 %2801
        %2803 = vrot.lane.b32.xlu0 %v2798, 64
        %v2804 = vpop.permute.xlu0 %2803
        %vm2807 = vcmask 785920
        %2808 = vst.msk [vmem:[#allocation3] sm:$0xff] %vm2807, %v2802
        %2809 = vst.msk [vmem:[#allocation3 + $0x8] sm:$0xff] %vm2807, %v2804
        %v2811 = vrot.slane %v2196, 4
        %2812 = vrot.lane.b32.xlu0 %v1213, 32
        %v2813 = vpop.permute.xlu0 %2812
        %v2815 = vsel %vm2018, %v2811, 0
        %v2818 = vsel %vm2206, %v2813, 0
        %2820 = vmatprep.subr.bf16.mxu0 0
        %2821 = vmatpush1.bf16.msra.mxu0 %v2818
        %2822 = vmatprep.subr.bf16.mxu0 0
        %2823 = vmatpush1.bf16.msra.mxu0 0
        %2824 = vmatprep.subr.bf16.mxu0 0
        %2825 = vmatpush1.bf16.msra.mxu0 0
        %2826 = vmatprep.subr.bf16.mxu0 0
        %2827 = vmatpush1.bf16.msra.mxu0 0
        %2828 = vmatprep.subr.bf16.mxu0 0
        %2829 = vmatpush1.bf16.msra.mxu0 0
        %2830 = vmatprep.subr.bf16.mxu0 0
        %2831 = vmatpush1.bf16.msra.mxu0 0
        %2832 = vmatprep.subr.bf16.mxu0 0
        %2833 = vmatpush1.bf16.msra.mxu0 0
        %2834 = vmatprep.subr.bf16.mxu0 0
        %2835 = vmatpush1.bf16.msra.mxu0 0
        %2836 = vmatprep.subr.bf16.mxu0 0
        %2837 = vmatpush1.bf16.msra.mxu0 0
        %2838 = vmatprep.subr.bf16.mxu0 0
        %2839 = vmatpush1.bf16.msra.mxu0 0
        %2840 = vmatprep.subr.bf16.mxu0 0
        %2841 = vmatpush1.bf16.msra.mxu0 0
        %2842 = vmatprep.subr.bf16.mxu0 0
        %2843 = vmatpush1.bf16.msra.mxu0 0
        %2844 = vmatprep.subr.bf16.mxu0 0
        %2845 = vmatpush1.bf16.msra.mxu0 0
        %2846 = vmatprep.subr.bf16.mxu0 0
        %2847 = vmatpush1.bf16.msra.mxu0 0
        %2848 = vmatprep.subr.bf16.mxu0 0
        %2849 = vmatpush1.bf16.msra.mxu0 0
        %2850 = vmatprep.subr.bf16.mxu0 0
        %2851 = vmatpush1.bf16.msra.mxu0 0
        %2852 = vmatprep.mubr.bf16.mxu0 0
        %2853 = vmatmul.mubr.bf16.gmra.mrb[0].mxu0 %v2815
        %v2854 = vpop.f32.mrb[0].mxu0
        %v2855 = vadd.f32 0.0, %v2854
        %v2856 = vpop.f32.mrb[0].mxu0
        %v2857 = vpop.f32.mrb[0].mxu0
        %v2858 = vpop.f32.mrb[0].mxu0
        %2859 = vdwg.mxu0
        %v2861 = vrot.slane %v2198, 4
        %2862 = vrot.lane.b32.xlu0 %v1214, 32
        %v2863 = vpop.permute.xlu0 %2862
        %v2865 = vsel %vm2018, %v2861, 0
        %v2868 = vsel %vm2206, %v2863, 0
        %2870 = vmatprep.subr.bf16.mxu0 0
        %2871 = vmatpush1.bf16.msra.mxu0 %v2868
        %2872 = vmatprep.subr.bf16.mxu0 0
        %2873 = vmatpush1.bf16.msra.mxu0 0
        %2874 = vmatprep.subr.bf16.mxu0 0
        %2875 = vmatpush1.bf16.msra.mxu0 0
        %2876 = vmatprep.subr.bf16.mxu0 0
        %2877 = vmatpush1.bf16.msra.mxu0 0
        %2878 = vmatprep.subr.bf16.mxu0 0
        %2879 = vmatpush1.bf16.msra.mxu0 0
        %2880 = vmatprep.subr.bf16.mxu0 0
        %2881 = vmatpush1.bf16.msra.mxu0 0
        %2882 = vmatprep.subr.bf16.mxu0 0
        %2883 = vmatpush1.bf16.msra.mxu0 0
        %2884 = vmatprep.subr.bf16.mxu0 0
        %2885 = vmatpush1.bf16.msra.mxu0 0
        %2886 = vmatprep.subr.bf16.mxu0 0
        %2887 = vmatpush1.bf16.msra.mxu0 0
        %2888 = vmatprep.subr.bf16.mxu0 0
        %2889 = vmatpush1.bf16.msra.mxu0 0
        %2890 = vmatprep.subr.bf16.mxu0 0
        %2891 = vmatpush1.bf16.msra.mxu0 0
        %2892 = vmatprep.subr.bf16.mxu0 0
        %2893 = vmatpush1.bf16.msra.mxu0 0
        %2894 = vmatprep.subr.bf16.mxu0 0
        %2895 = vmatpush1.bf16.msra.mxu0 0
        %2896 = vmatprep.subr.bf16.mxu0 0
        %2897 = vmatpush1.bf16.msra.mxu0 0
        %2898 = vmatprep.subr.bf16.mxu0 0
        %2899 = vmatpush1.bf16.msra.mxu0 0
        %2900 = vmatprep.subr.bf16.mxu0 0
        %2901 = vmatpush1.bf16.msra.mxu0 0
        %2902 = vmatprep.mubr.bf16.mxu0 0
        %2903 = vmatmul.mubr.bf16.gmra.mrb[0].mxu0 %v2865
        %v2904 = vpop.f32.mrb[0].mxu0
        %v2905 = vadd.f32 0.0, %v2904
        %v2906 = vpop.f32.mrb[0].mxu0
        %v2907 = vpop.f32.mrb[0].mxu0
        %v2908 = vpop.f32.mrb[0].mxu0
        %2909 = vdwg.mxu0
        %v2911 = vrot.slane %v2200, 4
        %2912 = vrot.lane.b32.xlu0 %v1215, 32
        %v2913 = vpop.permute.xlu0 %2912
        %v2915 = vsel %vm2018, %v2911, 0
        %v2918 = vsel %vm2206, %v2913, 0
        %2920 = vmatprep.subr.bf16.mxu0 0
        %2921 = vmatpush1.bf16.msra.mxu0 %v2918
        %2922 = vmatprep.subr.bf16.mxu0 0
        %2923 = vmatpush1.bf16.msra.mxu0 0
        %2924 = vmatprep.subr.bf16.mxu0 0
        %2925 = vmatpush1.bf16.msra.mxu0 0
        %2926 = vmatprep.subr.bf16.mxu0 0
        %2927 = vmatpush1.bf16.msra.mxu0 0
        %2928 = vmatprep.subr.bf16.mxu0 0
        %2929 = vmatpush1.bf16.msra.mxu0 0
        %2930 = vmatprep.subr.bf16.mxu0 0
        %2931 = vmatpush1.bf16.msra.mxu0 0
        %2932 = vmatprep.subr.bf16.mxu0 0
        %2933 = vmatpush1.bf16.msra.mxu0 0
        %2934 = vmatprep.subr.bf16.mxu0 0
        %2935 = vmatpush1.bf16.msra.mxu0 0
        %2936 = vmatprep.subr.bf16.mxu0 0
        %2937 = vmatpush1.bf16.msra.mxu0 0
        %2938 = vmatprep.subr.bf16.mxu0 0
        %2939 = vmatpush1.bf16.msra.mxu0 0
        %2940 = vmatprep.subr.bf16.mxu0 0
        %2941 = vmatpush1.bf16.msra.mxu0 0
        %2942 = vmatprep.subr.bf16.mxu0 0
        %2943 = vmatpush1.bf16.msra.mxu0 0
        %2944 = vmatprep.subr.bf16.mxu0 0
        %2945 = vmatpush1.bf16.msra.mxu0 0
        %2946 = vmatprep.subr.bf16.mxu0 0
        %2947 = vmatpush1.bf16.msra.mxu0 0
        %2948 = vmatprep.subr.bf16.mxu0 0
        %2949 = vmatpush1.bf16.msra.mxu0 0
        %2950 = vmatprep.subr.bf16.mxu0 0
        %2951 = vmatpush1.bf16.msra.mxu0 0
        %2952 = vmatprep.mubr.bf16.mxu0 0
        %2953 = vmatmul.mubr.bf16.gmra.mrb[0].mxu0 %v2915
        %v2954 = vpop.f32.mrb[0].mxu0
        %v2955 = vadd.f32 0.0, %v2954
        %v2956 = vpop.f32.mrb[0].mxu0
        %v2957 = vpop.f32.mrb[0].mxu0
        %v2958 = vpop.f32.mrb[0].mxu0
        %2959 = vdwg.mxu0
        %v2961 = vrot.slane %v2202, 4
        %2962 = vrot.lane.b32.xlu0 %v1216, 32
        %v2963 = vpop.permute.xlu0 %2962
        %v2965 = vsel %vm2018, %v2961, 0
        %v2968 = vsel %vm2206, %v2963, 0
        %2970 = vmatprep.subr.bf16.mxu0 0
        %2971 = vmatpush1.bf16.msra.mxu0 %v2968
        %2972 = vmatprep.subr.bf16.mxu0 0
        %2973 = vmatpush1.bf16.msra.mxu0 0
        %2974 = vmatprep.subr.bf16.mxu0 0
        %2975 = vmatpush1.bf16.msra.mxu0 0
        %2976 = vmatprep.subr.bf16.mxu0 0
        %2977 = vmatpush1.bf16.msra.mxu0 0
        %2978 = vmatprep.subr.bf16.mxu0 0
        %2979 = vmatpush1.bf16.msra.mxu0 0
        %2980 = vmatprep.subr.bf16.mxu0 0
        %2981 = vmatpush1.bf16.msra.mxu0 0
        %2982 = vmatprep.subr.bf16.mxu0 0
        %2983 = vmatpush1.bf16.msra.mxu0 0
        %2984 = vmatprep.subr.bf16.mxu0 0
        %2985 = vmatpush1.bf16.msra.mxu0 0
        %2986 = vmatprep.subr.bf16.mxu0 0
        %2987 = vmatpush1.bf16.msra.mxu0 0
        %2988 = vmatprep.subr.bf16.mxu0 0
        %2989 = vmatpush1.bf16.msra.mxu0 0
        %2990 = vmatprep.subr.bf16.mxu0 0
        %2991 = vmatpush1.bf16.msra.mxu0 0
        %2992 = vmatprep.subr.bf16.mxu0 0
        %2993 = vmatpush1.bf16.msra.mxu0 0
        %2994 = vmatprep.subr.bf16.mxu0 0
        %2995 = vmatpush1.bf16.msra.mxu0 0
        %2996 = vmatprep.subr.bf16.mxu0 0
        %2997 = vmatpush1.bf16.msra.mxu0 0
        %2998 = vmatprep.subr.bf16.mxu0 0
        %2999 = vmatpush1.bf16.msra.mxu0 0
        %3000 = vmatprep.subr.bf16.mxu0 0
        %3001 = vmatpush1.bf16.msra.mxu0 0
        %3002 = vmatprep.mubr.bf16.mxu0 0
        %3003 = vmatmul.mubr.bf16.gmra.mrb[0].mxu0 %v2965
        %v3004 = vpop.f32.mrb[0].mxu0
        %v3005 = vadd.f32 0.0, %v3004
        %v3006 = vpop.f32.mrb[0].mxu0
        %v3007 = vpop.f32.mrb[0].mxu0
        %v3008 = vpop.f32.mrb[0].mxu0
        %3009 = vdwg.mxu0
        %v3010 = vpack.c.bf16 %v2905, %v2855
        %v3011 = vpack.c.bf16 %v3005, %v2955
        %3014 = vrot.lane.b32.xlu0 %v3010, 96
        %v3015 = vpop.permute.xlu0 %3014
        %3016 = vrot.lane.b32.xlu0 %v3011, 96
        %v3017 = vpop.permute.xlu0 %3016
        %vm3020 = vcmask 1048320
        %3021 = vst.msk [vmem:[#allocation3] sm:$0xff] %vm3020, %v3015
        %3022 = vst.msk [vmem:[#allocation3 + $0x8] sm:$0xff] %vm3020, %v3017
        %v3023 = vld [vmem:[#allocation3] sm:$0xff]
        %v3024 = vld [vmem:[#allocation3 + $0x8] sm:$0xff]
        %v3025 = vld [vmem:[%s642] sm:$0xf]
        %v3026 = vld [vmem:[%s642 + $0x4] sm:$0xf]
        %v3027 = vld [vmem:[%s642 + $0x8] sm:$0xf]
        %v3028 = vld [vmem:[%s642 + $0xc] sm:$0xf]
        %v3029 = vld [vmem:[%s642 + $0x10] sm:$0xf]
        %v3030 = vld [vmem:[%s642 + $0x14] sm:$0xf]
        %v3031 = vld [vmem:[%s642 + $0x18] sm:$0xf]
        %v3032 = vld [vmem:[%s642 + $0x1c] sm:$0xf]
        %v3033 = vld [vmem:[%s642 + $0x20] sm:$0xf]
        %v3034 = vld [vmem:[%s642 + $0x24] sm:$0xf]
        %v3035 = vld [vmem:[%s642 + $0x28] sm:$0xf]
        %v3036 = vld [vmem:[%s642 + $0x2c] sm:$0xf]
        %v3037 = vld [vmem:[%s642 + $0x30] sm:$0xf]
        %v3038 = vld [vmem:[%s642 + $0x34] sm:$0xf]
        %v3039 = vld [vmem:[%s642 + $0x38] sm:$0xf]
        %v3040 = vld [vmem:[%s642 + $0x3c] sm:$0xf]
        %v3041 = vld [vmem:[%s758] sm:$0x1]
        %v3043 = vlaneseq
        %v3044 = vshrl.u32 %v3043, 7
        %v3045 = vsub.s32 0, %v3044
        %v3046 = vrot.slane %v3041, %v3045
        %v3064 = vunpack.c.l.b16 %v3025
        %v3065 = vunpack.c.l.b16 %v3026
        %v3066 = vunpack.c.l.b16 %v3027
        %v3067 = vunpack.c.l.b16 %v3028
        %v3068 = vunpack.c.l.b16 %v3029
        %v3069 = vunpack.c.l.b16 %v3030
        %v3070 = vunpack.c.l.b16 %v3031
        %v3071 = vunpack.c.l.b16 %v3032
        %v3072 = vunpack.c.l.b16 %v3033
        %v3073 = vunpack.c.l.b16 %v3034
        %v3074 = vunpack.c.l.b16 %v3035
        %v3075 = vunpack.c.l.b16 %v3036
        %v3076 = vunpack.c.l.b16 %v3037
        %v3077 = vunpack.c.l.b16 %v3038
        %v3078 = vunpack.c.l.b16 %v3039
        %v3079 = vunpack.c.l.b16 %v3040
        %v3080 = vpack.c.b16 %v3065, %v3064
        %v3081 = vpack.c.b16 %v3067, %v3066
        %v3082 = vpack.c.b16 %v3069, %v3068
        %v3083 = vpack.c.b16 %v3071, %v3070
        %v3084 = vpack.c.b16 %v3073, %v3072
        %v3085 = vpack.c.b16 %v3075, %v3074
        %v3086 = vpack.c.b16 %v3077, %v3076
        %v3087 = vpack.c.b16 %v3079, %v3078
        %3096 = vmatprep.subr.bf16.mxu0 0
        %3097 = vmatpush1.bf16.msra.mxu0 %v3080
        %3098 = vmatprep.subr.bf16.mxu0 0
        %3099 = vmatpush1.bf16.msra.mxu0 %v3081
        %3100 = vmatprep.subr.bf16.mxu0 0
        %3101 = vmatpush1.bf16.msra.mxu0 %v3082
        %3102 = vmatprep.subr.bf16.mxu0 0
        %3103 = vmatpush1.bf16.msra.mxu0 %v3083
        %3104 = vmatprep.subr.bf16.mxu0 0
        %3105 = vmatpush1.bf16.msra.mxu0 %v3084
        %3106 = vmatprep.subr.bf16.mxu0 0
        %3107 = vmatpush1.bf16.msra.mxu0 %v3085
        %3108 = vmatprep.subr.bf16.mxu0 0
        %3109 = vmatpush1.bf16.msra.mxu0 %v3086
        %3110 = vmatprep.subr.bf16.mxu0 0
        %3111 = vmatpush1.bf16.msra.mxu0 %v3087
        %3112 = vmatprep.subr.bf16.mxu0 0
        %3113 = vmatpush1.bf16.msra.mxu0 0
        %3114 = vmatprep.subr.bf16.mxu0 0
        %3115 = vmatpush1.bf16.msra.mxu0 0
        %3116 = vmatprep.subr.bf16.mxu0 0
        %3117 = vmatpush1.bf16.msra.mxu0 0
        %3118 = vmatprep.subr.bf16.mxu0 0
        %3119 = vmatpush1.bf16.msra.mxu0 0
        %3120 = vmatprep.subr.bf16.mxu0 0
        %3121 = vmatpush1.bf16.msra.mxu0 0
        %3122 = vmatprep.subr.bf16.mxu0 0
        %3123 = vmatpush1.bf16.msra.mxu0 0
        %3124 = vmatprep.subr.bf16.mxu0 0
        %3125 = vmatpush1.bf16.msra.mxu0 0
        %3126 = vmatprep.subr.bf16.mxu0 0
        %3127 = vmatpush1.bf16.msra.mxu0 0
        %3128 = vmatprep.mubr.bf16.mxu0 0
        %3129 = vmatmul.mubr.bf16.gmra.mrb[0].mxu0 %v3023
        %v3130 = vpop.f32.mrb[0].mxu0
        %v3131 = vadd.f32 %v3046, %v3130
        %v3132 = vpop.f32.mrb[0].mxu0
        %v3133 = vpop.f32.mrb[0].mxu0
        %v3134 = vadd.f32 %v3046, %v3133
        %v3135 = vpop.f32.mrb[0].mxu0
        %3136 = vmatprep.mubr.bf16.mxu0 0
        %3137 = vmatmul.mubr.bf16.gmra.mrb[0].mxu0 %v3024
        %v3138 = vpop.f32.mrb[0].mxu0
        %v3139 = vadd.f32 %v3046, %v3138
        %v3140 = vpop.f32.mrb[0].mxu0
        %v3141 = vpop.f32.mrb[0].mxu0
        %v3142 = vadd.f32 %v3046, %v3141
        %v3143 = vpop.f32.mrb[0].mxu0
        %3144 = vdwg.mxu0
        %v3145 = vadd.f32 %v797, %v3131
        %v3146 = vadd.f32 %v798, %v3134
        %v3147 = vadd.f32 %v799, %v3139
        %v3148 = vadd.f32 %v800, %v3142
        %v3149 = vld [vmem:[%s774] sm:$0x1]
        %v3150 = vld [vmem:[%s777] sm:$0x1]
        %3151 = vadd.xlane.f32.xlu0 %v3145
        %v3152 = vpop.xlane.xlu0 %3151
        %3153 = vadd.xlane.f32.xlu0 %v3146
        %v3154 = vpop.xlane.xlu0 %3153
        %3155 = vadd.xlane.f32.xlu0 %v3147
        %v3156 = vpop.xlane.xlu0 %3155
        %3157 = vadd.xlane.f32.xlu0 %v3148
        %v3158 = vpop.xlane.xlu0 %3157
        %v3159 = vmul.f32 %v3152, %v811
        %v3160 = vmul.f32 %v3154, %v811
        %v3161 = vmul.f32 %v3156, %v811
        %v3162 = vmul.f32 %v3158, %v811
        %v3163 = vsub.f32 %v3145, %v3159
        %v3164 = vsub.f32 %v3146, %v3160
        %v3165 = vsub.f32 %v3147, %v3161
        %v3166 = vsub.f32 %v3148, %v3162
        %v3167 = vmul.f32 %v3163, %v3163
        %v3168 = vmul.f32 %v3164, %v3164
        %v3169 = vmul.f32 %v3165, %v3165
        %v3170 = vmul.f32 %v3166, %v3166
        %3171 = vadd.xlane.f32.xlu0 %v3167
        %v3172 = vpop.xlane.xlu0 %3171
        %3173 = vadd.xlane.f32.xlu0 %v3168
        %v3174 = vpop.xlane.xlu0 %3173
        %3175 = vadd.xlane.f32.xlu0 %v3169
        %v3176 = vpop.xlane.xlu0 %3175
        %3177 = vadd.xlane.f32.xlu0 %v3170
        %v3178 = vpop.xlane.xlu0 %3177
        %v3179 = vmul.f32 %v3172, 0.007874016
        %v3180 = vmul.f32 %v3174, 0.007874016
        %v3181 = vmul.f32 %v3176, 0.007874016
        %v3182 = vmul.f32 %v3178, 0.007874016
        %v3183 = vrsqrt.pop %v3179
        %v3184 = vmul.f32 %v3179, %v3183
        %vm3185 = vcmp.eq.f32.partialorder %v3179, inf
        %v3186 = vsel %vm3185, %v3179, %v3184
        %vm3187 = vcmp.eq.f32.partialorder %v3179, 0.0
        %v3188 = vand.u32 %v3179, 2147483648
        %v3189 = vsel %vm3187, %v3188, %v3186
        %v3190 = vrsqrt.pop %v3180
        %v3191 = vmul.f32 %v3180, %v3190
        %vm3192 = vcmp.eq.f32.partialorder %v3180, inf
        %v3193 = vsel %vm3192, %v3180, %v3191
        %vm3194 = vcmp.eq.f32.partialorder %v3180, 0.0
        %v3195 = vand.u32 %v3180, 2147483648
        %v3196 = vsel %vm3194, %v3195, %v3193
        %v3197 = vrsqrt.pop %v3181
        %v3198 = vmul.f32 %v3181, %v3197
        %vm3199 = vcmp.eq.f32.partialorder %v3181, inf
        %v3200 = vsel %vm3199, %v3181, %v3198
        %vm3201 = vcmp.eq.f32.partialorder %v3181, 0.0
        %v3202 = vand.u32 %v3181, 2147483648
        %v3203 = vsel %vm3201, %v3202, %v3200
        %v3204 = vrsqrt.pop %v3182
        %v3205 = vmul.f32 %v3182, %v3204
        %vm3206 = vcmp.eq.f32.partialorder %v3182, inf
        %v3207 = vsel %vm3206, %v3182, %v3205
        %vm3208 = vcmp.eq.f32.partialorder %v3182, 0.0
        %v3209 = vand.u32 %v3182, 2147483648
        %v3210 = vsel %vm3208, %v3209, %v3207
        %v3211 = vadd.f32 %v3189, 1e-06
        %v3212 = vadd.f32 %v3196, 1e-06
        %v3213 = vadd.f32 %v3203, 1e-06
        %v3214 = vadd.f32 %v3210, 1e-06
        %v3215 = vrcp.pop %v3211
        %v3216 = vmul.f32 1.0, %v3215
        %v3217 = vrcp.pop %v3212
        %v3218 = vmul.f32 1.0, %v3217
        %v3219 = vrcp.pop %v3213
        %v3220 = vmul.f32 1.0, %v3219
        %v3221 = vrcp.pop %v3214
        %v3222 = vmul.f32 1.0, %v3221
        %v3223 = vmul.f32 %v3163, %v3216
        %v3224 = vmul.f32 %v3164, %v3218
        %v3225 = vmul.f32 %v3165, %v3220
        %v3226 = vmul.f32 %v3166, %v3222
        %v3228 = vlaneseq
        %v3229 = vshrl.u32 %v3228, 7
        %v3230 = vsub.s32 0, %v3229
        %v3231 = vrot.slane %v3149, %v3230
        %v3233 = vmul.f32 %v3223, %v3231
        %v3234 = vmul.f32 %v3224, %v3231
        %v3235 = vmul.f32 %v3225, %v3231
        %v3236 = vmul.f32 %v3226, %v3231
        %v3238 = vlaneseq
        %v3239 = vshrl.u32 %v3238, 7
        %v3240 = vsub.s32 0, %v3239
        %v3241 = vrot.slane %v3150, %v3240
        %v3243 = vadd.f32 %v3233, %v3241
        %v3244 = vadd.f32 %v3234, %v3241
        %v3245 = vadd.f32 %v3235, %v3241
        %v3246 = vadd.f32 %v3236, %v3241
        %v3247 = vpack.c.bf16 %v3244, %v3243
        %v3248 = vpack.c.bf16 %v3246, %v3245
        %v3249 = vld [vmem:[%s651] sm:$0xff]
        %v3250 = vld [vmem:[%s651 + $0x8] sm:$0xff]
        %v3251 = vld [vmem:[%s651 + $0x10] sm:$0xff]
        %v3252 = vld [vmem:[%s651 + $0x18] sm:$0xff]
        %v3253 = vld [vmem:[%s651 + $0x20] sm:$0xff]
        %v3254 = vld [vmem:[%s651 + $0x28] sm:$0xff]
        %v3255 = vld [vmem:[%s651 + $0x30] sm:$0xff]
        %v3256 = vld [vmem:[%s651 + $0x38] sm:$0xff]
        %v3257 = vld [vmem:[%s651 + $0x40] sm:$0xff]
        %v3258 = vld [vmem:[%s651 + $0x48] sm:$0xff]
        %v3259 = vld [vmem:[%s651 + $0x50] sm:$0xff]
        %v3260 = vld [vmem:[%s651 + $0x58] sm:$0xff]
        %v3261 = vld [vmem:[%s651 + $0x60] sm:$0xff]
        %v3262 = vld [vmem:[%s651 + $0x68] sm:$0xff]
        %v3263 = vld [vmem:[%s651 + $0x70] sm:$0xff]
        %v3264 = vld [vmem:[%s651 + $0x78] sm:$0xff]
        %v3265 = vld [vmem:[%s651 + $0x80] sm:$0xff]
        %v3266 = vld [vmem:[%s651 + $0x88] sm:$0xff]
        %v3267 = vld [vmem:[%s651 + $0x90] sm:$0xff]
        %v3268 = vld [vmem:[%s651 + $0x98] sm:$0xff]
        %v3269 = vld [vmem:[%s651 + $0xa0] sm:$0xff]
        %v3270 = vld [vmem:[%s651 + $0xa8] sm:$0xff]
        %v3271 = vld [vmem:[%s651 + $0xb0] sm:$0xff]
        %v3272 = vld [vmem:[%s651 + $0xb8] sm:$0xff]
        %v3273 = vld [vmem:[%s651 + $0xc0] sm:$0xff]
        %v3274 = vld [vmem:[%s651 + $0xc8] sm:$0xff]
        %v3275 = vld [vmem:[%s651 + $0xd0] sm:$0xff]
        %v3276 = vld [vmem:[%s651 + $0xd8] sm:$0xff]
        %v3277 = vld [vmem:[%s651 + $0xe0] sm:$0xff]
        %v3278 = vld [vmem:[%s651 + $0xe8] sm:$0xff]
        %v3279 = vld [vmem:[%s651 + $0xf0] sm:$0xff]
        %v3280 = vld [vmem:[%s651 + $0xf8] sm:$0xff]
        %v3281 = vld [vmem:[%s768] sm:$0xf]
        %v3283 = vlaneseq
        %v3284 = vshrl.u32 %v3283, 7
        %v3285 = vsub.s32 0, %v3284
        %v3286 = vrot.slane %v3281, %v3285
        %v3287 = vlaneseq
        %v3288 = vshrl.u32 %v3287, 7
        %v3289 = vsub.s32 1, %v3288
        %v3290 = vrot.slane %v3281, %v3289
        %v3291 = vlaneseq
        %v3292 = vshrl.u32 %v3291, 7
        %v3293 = vsub.s32 2, %v3292
        %v3294 = vrot.slane %v3281, %v3293
        %v3295 = vlaneseq
        %v3296 = vshrl.u32 %v3295, 7
        %v3297 = vsub.s32 3, %v3296
        %v3298 = vrot.slane %v3281, %v3297
        %v3335 = vunpack.c.l.b16 %v3249
        %v3336 = vunpack.c.h.b16 %v3249
        %v3337 = vunpack.c.l.b16 %v3250
        %v3338 = vunpack.c.h.b16 %v3250
        %v3339 = vunpack.c.l.b16 %v3251
        %v3340 = vunpack.c.h.b16 %v3251
        %v3341 = vunpack.c.l.b16 %v3252
        %v3342 = vunpack.c.h.b16 %v3252
        %v3343 = vunpack.c.l.b16 %v3253
        %v3344 = vunpack.c.h.b16 %v3253
        %v3345 = vunpack.c.l.b16 %v3254
        %v3346 = vunpack.c.h.b16 %v3254
        %v3347 = vunpack.c.l.b16 %v3255
        %v3348 = vunpack.c.h.b16 %v3255
        %v3349 = vunpack.c.l.b16 %v3256
        %v3350 = vunpack.c.h.b16 %v3256
        %v3351 = vunpack.c.l.b16 %v3257
        %v3352 = vunpack.c.h.b16 %v3257
        %v3353 = vunpack.c.l.b16 %v3258
        %v3354 = vunpack.c.h.b16 %v3258
        %v3355 = vunpack.c.l.b16 %v3259
        %v3356 = vunpack.c.h.b16 %v3259
        %v3357 = vunpack.c.l.b16 %v3260
        %v3358 = vunpack.c.h.b16 %v3260
        %v3359 = vunpack.c.l.b16 %v3261
        %v3360 = vunpack.c.h.b16 %v3261
        %v3361 = vunpack.c.l.b16 %v3262
        %v3362 = vunpack.c.h.b16 %v3262
        %v3363 = vunpack.c.l.b16 %v3263
        %v3364 = vunpack.c.h.b16 %v3263
        %v3365 = vunpack.c.l.b16 %v3264
        %v3366 = vunpack.c.h.b16 %v3264
        %v3367 = vunpack.c.l.b16 %v3265
        %v3368 = vunpack.c.h.b16 %v3265
        %v3369 = vunpack.c.l.b16 %v3266
        %v3370 = vunpack.c.h.b16 %v3266
        %v3371 = vunpack.c.l.b16 %v3267
        %v3372 = vunpack.c.h.b16 %v3267
        %v3373 = vunpack.c.l.b16 %v3268
        %v3374 = vunpack.c.h.b16 %v3268
        %v3375 = vunpack.c.l.b16 %v3269
        %v3376 = vunpack.c.h.b16 %v3269
        %v3377 = vunpack.c.l.b16 %v3270
        %v3378 = vunpack.c.h.b16 %v3270
        %v3379 = vunpack.c.l.b16 %v3271
        %v3380 = vunpack.c.h.b16 %v3271
        %v3381 = vunpack.c.l.b16 %v3272
        %v3382 = vunpack.c.h.b16 %v3272
        %v3383 = vunpack.c.l.b16 %v3273
        %v3384 = vunpack.c.h.b16 %v3273
        %v3385 = vunpack.c.l.b16 %v3274
        %v3386 = vunpack.c.h.b16 %v3274
        %v3387 = vunpack.c.l.b16 %v3275
        %v3388 = vunpack.c.h.b16 %v3275
        %v3389 = vunpack.c.l.b16 %v3276
        %v3390 = vunpack.c.h.b16 %v3276
        %v3391 = vunpack.c.l.b16 %v3277
        %v3392 = vunpack.c.h.b16 %v3277
        %v3393 = vunpack.c.l.b16 %v3278
        %v3394 = vunpack.c.h.b16 %v3278
        %v3395 = vunpack.c.l.b16 %v3279
        %v3396 = vunpack.c.h.b16 %v3279
        %v3397 = vunpack.c.l.b16 %v3280
        %v3398 = vunpack.c.h.b16 %v3280
        %v3399 = vpack.c.b16 %v3339, %v3335
        %v3400 = vpack.c.b16 %v3340, %v3336
        %v3401 = vpack.c.b16 %v3341, %v3337
        %v3402 = vpack.c.b16 %v3342, %v3338
        %v3403 = vpack.c.b16 %v3347, %v3343
        %v3404 = vpack.c.b16 %v3348, %v3344
        %v3405 = vpack.c.b16 %v3349, %v3345
        %v3406 = vpack.c.b16 %v3350, %v3346
        %v3407 = vpack.c.b16 %v3355, %v3351
        %v3408 = vpack.c.b16 %v3356, %v3352
        %v3409 = vpack.c.b16 %v3357, %v3353
        %v3410 = vpack.c.b16 %v3358, %v3354
        %v3411 = vpack.c.b16 %v3363, %v3359
        %v3412 = vpack.c.b16 %v3364, %v3360
        %v3413 = vpack.c.b16 %v3365, %v3361
        %v3414 = vpack.c.b16 %v3366, %v3362
        %v3415 = vpack.c.b16 %v3371, %v3367
        %v3416 = vpack.c.b16 %v3372, %v3368
        %v3417 = vpack.c.b16 %v3373, %v3369
        %v3418 = vpack.c.b16 %v3374, %v3370
        %v3419 = vpack.c.b16 %v3379, %v3375
        %v3420 = vpack.c.b16 %v3380, %v3376
        %v3421 = vpack.c.b16 %v3381, %v3377
        %v3422 = vpack.c.b16 %v3382, %v3378
        %v3423 = vpack.c.b16 %v3387, %v3383
        %v3424 = vpack.c.b16 %v3388, %v3384
        %v3425 = vpack.c.b16 %v3389, %v3385
        %v3426 = vpack.c.b16 %v3390, %v3386
        %v3427 = vpack.c.b16 %v3395, %v3391
        %v3428 = vpack.c.b16 %v3396, %v3392
        %v3429 = vpack.c.b16 %v3397, %v3393
        %v3430 = vpack.c.b16 %v3398, %v3394
        %3463 = vmatprep.subr.bf16.mxu0 %v3400
        %3464 = vmatpush1.bf16.msra.mxu0 %v3399
        %3465 = vmatprep.subr.bf16.mxu0 %v3404
        %3466 = vmatpush1.bf16.msra.mxu0 %v3403
        %3467 = vmatprep.subr.bf16.mxu0 %v3408
        %3468 = vmatpush1.bf16.msra.mxu0 %v3407
        %3469 = vmatprep.subr.bf16.mxu0 %v3412
        %3470 = vmatpush1.bf16.msra.mxu0 %v3411
        %3471 = vmatprep.subr.bf16.mxu0 %v3416
        %3472 = vmatpush1.bf16.msra.mxu0 %v3415
        %3473 = vmatprep.subr.bf16.mxu0 %v3420
        %3474 = vmatpush1.bf16.msra.mxu0 %v3419
        %3475 = vmatprep.subr.bf16.mxu0 %v3424
        %3476 = vmatpush1.bf16.msra.mxu0 %v3423
        %3477 = vmatprep.subr.bf16.mxu0 %v3428
        %3478 = vmatpush1.bf16.msra.mxu0 %v3427
        %3479 = vmatprep.subr.bf16.mxu0 0
        %3480 = vmatpush1.bf16.msra.mxu0 0
        %3481 = vmatprep.subr.bf16.mxu0 0
        %3482 = vmatpush1.bf16.msra.mxu0 0
        %3483 = vmatprep.subr.bf16.mxu0 0
        %3484 = vmatpush1.bf16.msra.mxu0 0
        %3485 = vmatprep.subr.bf16.mxu0 0
        %3486 = vmatpush1.bf16.msra.mxu0 0
        %3487 = vmatprep.subr.bf16.mxu0 0
        %3488 = vmatpush1.bf16.msra.mxu0 0
        %3489 = vmatprep.subr.bf16.mxu0 0
        %3490 = vmatpush1.bf16.msra.mxu0 0
        %3491 = vmatprep.subr.bf16.mxu0 0
        %3492 = vmatpush1.bf16.msra.mxu0 0
        %3493 = vmatprep.subr.bf16.mxu0 0
        %3494 = vmatpush1.bf16.msra.mxu0 0
        %3495 = vmatprep.mubr.bf16.mxu0 0
        %3496 = vmatmul.mubr.bf16.gmra.mrb[0].mxu0 %v3247
        %v3497 = vpop.f32.mrb[0].mxu0
        %v3498 = vadd.f32 %v3286, %v3497
        %v3499 = vpop.f32.mrb[0].mxu0
        %v3500 = vadd.f32 %v3290, %v3499
        %v3501 = vpop.f32.mrb[0].mxu0
        %v3502 = vadd.f32 %v3286, %v3501
        %v3503 = vpop.f32.mrb[0].mxu0
        %v3504 = vadd.f32 %v3290, %v3503
        %3505 = vmatprep.mubr.bf16.mxu0 0
        %3506 = vmatmul.mubr.bf16.gmra.mrb[0].mxu0 %v3248
        %v3507 = vpop.f32.mrb[0].mxu0
        %v3508 = vadd.f32 %v3286, %v3507
        %v3509 = vpop.f32.mrb[0].mxu0
        %v3510 = vadd.f32 %v3290, %v3509
        %v3511 = vpop.f32.mrb[0].mxu0
        %v3512 = vadd.f32 %v3286, %v3511
        %v3513 = vpop.f32.mrb[0].mxu0
        %v3514 = vadd.f32 %v3290, %v3513
        %3515 = vdwg.mxu0
        %3516 = vmatprep.subr.bf16.mxu0 %v3402
        %3517 = vmatpush1.bf16.msra.mxu0 %v3401
        %3518 = vmatprep.subr.bf16.mxu0 %v3406
        %3519 = vmatpush1.bf16.msra.mxu0 %v3405
        %3520 = vmatprep.subr.bf16.mxu0 %v3410
        %3521 = vmatpush1.bf16.msra.mxu0 %v3409
        %3522 = vmatprep.subr.bf16.mxu0 %v3414
        %3523 = vmatpush1.bf16.msra.mxu0 %v3413
        %3524 = vmatprep.subr.bf16.mxu0 %v3418
        %3525 = vmatpush1.bf16.msra.mxu0 %v3417
        %3526 = vmatprep.subr.bf16.mxu0 %v3422
        %3527 = vmatpush1.bf16.msra.mxu0 %v3421
        %3528 = vmatprep.subr.bf16.mxu0 %v3426
        %3529 = vmatpush1.bf16.msra.mxu0 %v3425
        %3530 = vmatprep.subr.bf16.mxu0 %v3430
        %3531 = vmatpush1.bf16.msra.mxu0 %v3429
        %3532 = vmatprep.subr.bf16.mxu0 0
        %3533 = vmatpush1.bf16.msra.mxu0 0
        %3534 = vmatprep.subr.bf16.mxu0 0
        %3535 = vmatpush1.bf16.msra.mxu0 0
        %3536 = vmatprep.subr.bf16.mxu0 0
        %3537 = vmatpush1.bf16.msra.mxu0 0
        %3538 = vmatprep.subr.bf16.mxu0 0
        %3539 = vmatpush1.bf16.msra.mxu0 0
        %3540 = vmatprep.subr.bf16.mxu0 0
        %3541 = vmatpush1.bf16.msra.mxu0 0
        %3542 = vmatprep.subr.bf16.mxu0 0
        %3543 = vmatpush1.bf16.msra.mxu0 0
        %3544 = vmatprep.subr.bf16.mxu0 0
        %3545 = vmatpush1.bf16.msra.mxu0 0
        %3546 = vmatprep.subr.bf16.mxu0 0
        %3547 = vmatpush1.bf16.msra.mxu0 0
        %3548 = vmatprep.mubr.bf16.mxu0 0
        %3549 = vmatmul.mubr.bf16.gmra.mrb[0].mxu0 %v3247
        %v3550 = vpop.f32.mrb[0].mxu0
        %v3551 = vadd.f32 %v3294, %v3550
        %v3552 = vpop.f32.mrb[0].mxu0
        %v3553 = vadd.f32 %v3298, %v3552
        %v3554 = vpop.f32.mrb[0].mxu0
        %v3555 = vadd.f32 %v3294, %v3554
        %v3556 = vpop.f32.mrb[0].mxu0
        %v3557 = vadd.f32 %v3298, %v3556
        %3558 = vmatprep.mubr.bf16.mxu0 0
        %3559 = vmatmul.mubr.bf16.gmra.mrb[0].mxu0 %v3248
        %v3560 = vpop.f32.mrb[0].mxu0
        %v3561 = vadd.f32 %v3294, %v3560
        %v3562 = vpop.f32.mrb[0].mxu0
        %v3563 = vadd.f32 %v3298, %v3562
        %v3564 = vpop.f32.mrb[0].mxu0
        %v3565 = vadd.f32 %v3294, %v3564
        %v3566 = vpop.f32.mrb[0].mxu0
        %v3567 = vadd.f32 %v3298, %v3566
        %3568 = vdwg.mxu0
        %v3569 = vmul.f32 %v3498, 0.5
        %v3570 = vmul.f32 %v3500, 0.5
        %v3571 = vmul.f32 %v3551, 0.5
        %v3572 = vmul.f32 %v3553, 0.5
        %v3573 = vmul.f32 %v3502, 0.5
        %v3574 = vmul.f32 %v3504, 0.5
        %v3575 = vmul.f32 %v3555, 0.5
        %v3576 = vmul.f32 %v3557, 0.5
        %v3577 = vmul.f32 %v3508, 0.5
        %v3578 = vmul.f32 %v3510, 0.5
        %v3579 = vmul.f32 %v3561, 0.5
        %v3580 = vmul.f32 %v3563, 0.5
        %v3581 = vmul.f32 %v3512, 0.5
        %v3582 = vmul.f32 %v3514, 0.5
        %v3583 = vmul.f32 %v3565, 0.5
        %v3584 = vmul.f32 %v3567, 0.5
        %v3585 = vmul.f32 %v3498, 0.044715
        %v3586 = vmul.f32 %v3500, 0.044715
        %v3587 = vmul.f32 %v3551, 0.044715
        %v3588 = vmul.f32 %v3553, 0.044715
        %v3589 = vmul.f32 %v3502, 0.044715
        %v3590 = vmul.f32 %v3504, 0.044715
        %v3591 = vmul.f32 %v3555, 0.044715
        %v3592 = vmul.f32 %v3557, 0.044715
        %v3593 = vmul.f32 %v3508, 0.044715
        %v3594 = vmul.f32 %v3510, 0.044715
        %v3595 = vmul.f32 %v3561, 0.044715
        %v3596 = vmul.f32 %v3563, 0.044715
        %v3597 = vmul.f32 %v3512, 0.044715
        %v3598 = vmul.f32 %v3514, 0.044715
        %v3599 = vmul.f32 %v3565, 0.044715
        %v3600 = vmul.f32 %v3567, 0.044715
        %v3601 = vmul.f32 %v3585, %v3498
        %v3602 = vmul.f32 %v3586, %v3500
        %v3603 = vmul.f32 %v3587, %v3551
        %v3604 = vmul.f32 %v3588, %v3553
        %v3605 = vmul.f32 %v3589, %v3502
        %v3606 = vmul.f32 %v3590, %v3504
        %v3607 = vmul.f32 %v3591, %v3555
        %v3608 = vmul.f32 %v3592, %v3557
        %v3609 = vmul.f32 %v3593, %v3508
        %v3610 = vmul.f32 %v3594, %v3510
        %v3611 = vmul.f32 %v3595, %v3561
        %v3612 = vmul.f32 %v3596, %v3563
        %v3613 = vmul.f32 %v3597, %v3512
        %v3614 = vmul.f32 %v3598, %v3514
        %v3615 = vmul.f32 %v3599, %v3565
        %v3616 = vmul.f32 %v3600, %v3567
        %v3617 = vmul.f32 %v3601, %v3498
        %v3618 = vmul.f32 %v3602, %v3500
        %v3619 = vmul.f32 %v3603, %v3551
        %v3620 = vmul.f32 %v3604, %v3553
        %v3621 = vmul.f32 %v3605, %v3502
        %v3622 = vmul.f32 %v3606, %v3504
        %v3623 = vmul.f32 %v3607, %v3555
        %v3624 = vmul.f32 %v3608, %v3557
        %v3625 = vmul.f32 %v3609, %v3508
        %v3626 = vmul.f32 %v3610, %v3510
        %v3627 = vmul.f32 %v3611, %v3561
        %v3628 = vmul.f32 %v3612, %v3563
        %v3629 = vmul.f32 %v3613, %v3512
        %v3630 = vmul.f32 %v3614, %v3514
        %v3631 = vmul.f32 %v3615, %v3565
        %v3632 = vmul.f32 %v3616, %v3567
        %v3633 = vadd.f32 %v3498, %v3617
        %v3634 = vadd.f32 %v3500, %v3618
        %v3635 = vadd.f32 %v3551, %v3619
        %v3636 = vadd.f32 %v3553, %v3620
        %v3637 = vadd.f32 %v3502, %v3621
        %v3638 = vadd.f32 %v3504, %v3622
        %v3639 = vadd.f32 %v3555, %v3623
        %v3640 = vadd.f32 %v3557, %v3624
        %v3641 = vadd.f32 %v3508, %v3625
        %v3642 = vadd.f32 %v3510, %v3626
        %v3643 = vadd.f32 %v3561, %v3627
        %v3644 = vadd.f32 %v3563, %v3628
        %v3645 = vadd.f32 %v3512, %v3629
        %v3646 = vadd.f32 %v3514, %v3630
        %v3647 = vadd.f32 %v3565, %v3631
        %v3648 = vadd.f32 %v3567, %v3632
        %v3649 = vmul.f32 %v3633, 0.7978846
        %v3650 = vmul.f32 %v3634, 0.7978846
        %v3651 = vmul.f32 %v3635, 0.7978846
        %v3652 = vmul.f32 %v3636, 0.7978846
        %v3653 = vmul.f32 %v3637, 0.7978846
        %v3654 = vmul.f32 %v3638, 0.7978846
        %v3655 = vmul.f32 %v3639, 0.7978846
        %v3656 = vmul.f32 %v3640, 0.7978846
        %v3657 = vmul.f32 %v3641, 0.7978846
        %v3658 = vmul.f32 %v3642, 0.7978846
        %v3659 = vmul.f32 %v3643, 0.7978846
        %v3660 = vmul.f32 %v3644, 0.7978846
        %v3661 = vmul.f32 %v3645, 0.7978846
        %v3662 = vmul.f32 %v3646, 0.7978846
        %v3663 = vmul.f32 %v3647, 0.7978846
        %v3664 = vmul.f32 %v3648, 0.7978846
        %v3665 = vtanh.pop %v3649
        %v3666 = vtanh.pop %v3650
        %v3667 = vtanh.pop %v3651
        %v3668 = vtanh.pop %v3652
        %v3669 = vtanh.pop %v3653
        %v3670 = vtanh.pop %v3654
        %v3671 = vtanh.pop %v3655
        %v3672 = vtanh.pop %v3656
        %v3673 = vtanh.pop %v3657
        %v3674 = vtanh.pop %v3658
        %v3675 = vtanh.pop %v3659
        %v3676 = vtanh.pop %v3660
        %v3677 = vtanh.pop %v3661
        %v3678 = vtanh.pop %v3662
        %v3679 = vtanh.pop %v3663
        %v3680 = vtanh.pop %v3664
        %v3681 = vadd.f32 %v3665, 1.0
        %v3682 = vadd.f32 %v3666, 1.0
        %v3683 = vadd.f32 %v3667, 1.0
        %v3684 = vadd.f32 %v3668, 1.0
        %v3685 = vadd.f32 %v3669, 1.0
        %v3686 = vadd.f32 %v3670, 1.0
        %v3687 = vadd.f32 %v3671, 1.0
        %v3688 = vadd.f32 %v3672, 1.0
        %v3689 = vadd.f32 %v3673, 1.0
        %v3690 = vadd.f32 %v3674, 1.0
        %v3691 = vadd.f32 %v3675, 1.0
        %v3692 = vadd.f32 %v3676, 1.0
        %v3693 = vadd.f32 %v3677, 1.0
        %v3694 = vadd.f32 %v3678, 1.0
        %v3695 = vadd.f32 %v3679, 1.0
        %v3696 = vadd.f32 %v3680, 1.0
        %v3697 = vmul.f32 %v3569, %v3681
        %v3698 = vmul.f32 %v3570, %v3682
        %v3699 = vmul.f32 %v3571, %v3683
        %v3700 = vmul.f32 %v3572, %v3684
        %v3701 = vmul.f32 %v3573, %v3685
        %v3702 = vmul.f32 %v3574, %v3686
        %v3703 = vmul.f32 %v3575, %v3687
        %v3704 = vmul.f32 %v3576, %v3688
        %v3705 = vmul.f32 %v3577, %v3689
        %v3706 = vmul.f32 %v3578, %v3690
        %v3707 = vmul.f32 %v3579, %v3691
        %v3708 = vmul.f32 %v3580, %v3692
        %v3709 = vmul.f32 %v3581, %v3693
        %v3710 = vmul.f32 %v3582, %v3694
        %v3711 = vmul.f32 %v3583, %v3695
        %v3712 = vmul.f32 %v3584, %v3696
        %v3713 = vpack.c.bf16 %v3701, %v3697
        %v3714 = vpack.c.bf16 %v3702, %v3698
        %v3715 = vpack.c.bf16 %v3703, %v3699
        %v3716 = vpack.c.bf16 %v3704, %v3700
        %v3717 = vpack.c.bf16 %v3709, %v3705
        %v3718 = vpack.c.bf16 %v3710, %v3706
        %v3719 = vpack.c.bf16 %v3711, %v3707
        %v3720 = vpack.c.bf16 %v3712, %v3708
        %v3721 = vld [vmem:[%s660] sm:$0xf]
        %v3722 = vld [vmem:[%s660 + $0x4] sm:$0xf]
        %v3723 = vld [vmem:[%s660 + $0x8] sm:$0xf]
        %v3724 = vld [vmem:[%s660 + $0xc] sm:$0xf]
        %v3725 = vld [vmem:[%s660 + $0x10] sm:$0xf]
        %v3726 = vld [vmem:[%s660 + $0x14] sm:$0xf]
        %v3727 = vld [vmem:[%s660 + $0x18] sm:$0xf]
        %v3728 = vld [vmem:[%s660 + $0x1c] sm:$0xf]
        %v3729 = vld [vmem:[%s660 + $0x20] sm:$0xf]
        %v3730 = vld [vmem:[%s660 + $0x24] sm:$0xf]
        %v3731 = vld [vmem:[%s660 + $0x28] sm:$0xf]
        %v3732 = vld [vmem:[%s660 + $0x2c] sm:$0xf]
        %v3733 = vld [vmem:[%s660 + $0x30] sm:$0xf]
        %v3734 = vld [vmem:[%s660 + $0x34] sm:$0xf]
        %v3735 = vld [vmem:[%s660 + $0x38] sm:$0xf]
        %v3736 = vld [vmem:[%s660 + $0x3c] sm:$0xf]
        %v3737 = vld [vmem:[%s660 + $0x40] sm:$0xf]
        %v3738 = vld [vmem:[%s660 + $0x44] sm:$0xf]
        %v3739 = vld [vmem:[%s660 + $0x48] sm:$0xf]
        %v3740 = vld [vmem:[%s660 + $0x4c] sm:$0xf]
        %v3741 = vld [vmem:[%s660 + $0x50] sm:$0xf]
        %v3742 = vld [vmem:[%s660 + $0x54] sm:$0xf]
        %v3743 = vld [vmem:[%s660 + $0x58] sm:$0xf]
        %v3744 = vld [vmem:[%s660 + $0x5c] sm:$0xf]
        %v3745 = vld [vmem:[%s660 + $0x60] sm:$0xf]
        %v3746 = vld [vmem:[%s660 + $0x64] sm:$0xf]
        %v3747 = vld [vmem:[%s660 + $0x68] sm:$0xf]
        %v3748 = vld [vmem:[%s660 + $0x6c] sm:$0xf]
        %v3749 = vld [vmem:[%s660 + $0x70] sm:$0xf]
        %v3750 = vld [vmem:[%s660 + $0x74] sm:$0xf]
        %v3751 = vld [vmem:[%s660 + $0x78] sm:$0xf]
        %v3752 = vld [vmem:[%s660 + $0x7c] sm:$0xf]
        %v3753 = vld [vmem:[%s660 + $0x80] sm:$0xf]
        %v3754 = vld [vmem:[%s660 + $0x84] sm:$0xf]
        %v3755 = vld [vmem:[%s660 + $0x88] sm:$0xf]
        %v3756 = vld [vmem:[%s660 + $0x8c] sm:$0xf]
        %v3757 = vld [vmem:[%s660 + $0x90] sm:$0xf]
        %v3758 = vld [vmem:[%s660 + $0x94] sm:$0xf]
        %v3759 = vld [vmem:[%s660 + $0x98] sm:$0xf]
        %v3760 = vld [vmem:[%s660 + $0x9c] sm:$0xf]
        %v3761 = vld [vmem:[%s660 + $0xa0] sm:$0xf]
        %v3762 = vld [vmem:[%s660 + $0xa4] sm:$0xf]
        %v3763 = vld [vmem:[%s660 + $0xa8] sm:$0xf]
        %v3764 = vld [vmem:[%s660 + $0xac] sm:$0xf]
        %v3765 = vld [vmem:[%s660 + $0xb0] sm:$0xf]
        %v3766 = vld [vmem:[%s660 + $0xb4] sm:$0xf]
        %v3767 = vld [vmem:[%s660 + $0xb8] sm:$0xf]
        %v3768 = vld [vmem:[%s660 + $0xbc] sm:$0xf]
        %v3769 = vld [vmem:[%s660 + $0xc0] sm:$0xf]
        %v3770 = vld [vmem:[%s660 + $0xc4] sm:$0xf]
        %v3771 = vld [vmem:[%s660 + $0xc8] sm:$0xf]
        %v3772 = vld [vmem:[%s660 + $0xcc] sm:$0xf]
        %v3773 = vld [vmem:[%s660 + $0xd0] sm:$0xf]
        %v3774 = vld [vmem:[%s660 + $0xd4] sm:$0xf]
        %v3775 = vld [vmem:[%s660 + $0xd8] sm:$0xf]
        %v3776 = vld [vmem:[%s660 + $0xdc] sm:$0xf]
        %v3777 = vld [vmem:[%s660 + $0xe0] sm:$0xf]
        %v3778 = vld [vmem:[%s660 + $0xe4] sm:$0xf]
        %v3779 = vld [vmem:[%s660 + $0xe8] sm:$0xf]
        %v3780 = vld [vmem:[%s660 + $0xec] sm:$0xf]
        %v3781 = vld [vmem:[%s660 + $0xf0] sm:$0xf]
        %v3782 = vld [vmem:[%s660 + $0xf4] sm:$0xf]
        %v3783 = vld [vmem:[%s660 + $0xf8] sm:$0xf]
        %v3784 = vld [vmem:[%s660 + $0xfc] sm:$0xf]
        %v3785 = vld [vmem:[%s771] sm:$0x1]
        %v3787 = vlaneseq
        %v3788 = vshrl.u32 %v3787, 7
        %v3789 = vsub.s32 0, %v3788
        %v3790 = vrot.slane %v3785, %v3789
        %v3856 = vunpack.c.l.b16 %v3721
        %v3857 = vunpack.c.l.b16 %v3722
        %v3858 = vunpack.c.l.b16 %v3723
        %v3859 = vunpack.c.l.b16 %v3724
        %v3860 = vunpack.c.l.b16 %v3725
        %v3861 = vunpack.c.l.b16 %v3726
        %v3862 = vunpack.c.l.b16 %v3727
        %v3863 = vunpack.c.l.b16 %v3728
        %v3864 = vunpack.c.l.b16 %v3729
        %v3865 = vunpack.c.l.b16 %v3730
        %v3866 = vunpack.c.l.b16 %v3731
        %v3867 = vunpack.c.l.b16 %v3732
        %v3868 = vunpack.c.l.b16 %v3733
        %v3869 = vunpack.c.l.b16 %v3734
        %v3870 = vunpack.c.l.b16 %v3735
        %v3871 = vunpack.c.l.b16 %v3736
        %v3872 = vunpack.c.l.b16 %v3737
        %v3873 = vunpack.c.l.b16 %v3738
        %v3874 = vunpack.c.l.b16 %v3739
        %v3875 = vunpack.c.l.b16 %v3740
        %v3876 = vunpack.c.l.b16 %v3741
        %v3877 = vunpack.c.l.b16 %v3742
        %v3878 = vunpack.c.l.b16 %v3743
        %v3879 = vunpack.c.l.b16 %v3744
        %v3880 = vunpack.c.l.b16 %v3745
        %v3881 = vunpack.c.l.b16 %v3746
        %v3882 = vunpack.c.l.b16 %v3747
        %v3883 = vunpack.c.l.b16 %v3748
        %v3884 = vunpack.c.l.b16 %v3749
        %v3885 = vunpack.c.l.b16 %v3750
        %v3886 = vunpack.c.l.b16 %v3751
        %v3887 = vunpack.c.l.b16 %v3752
        %v3888 = vunpack.c.l.b16 %v3753
        %v3889 = vunpack.c.l.b16 %v3754
        %v3890 = vunpack.c.l.b16 %v3755
        %v3891 = vunpack.c.l.b16 %v3756
        %v3892 = vunpack.c.l.b16 %v3757
        %v3893 = vunpack.c.l.b16 %v3758
        %v3894 = vunpack.c.l.b16 %v3759
        %v3895 = vunpack.c.l.b16 %v3760
        %v3896 = vunpack.c.l.b16 %v3761
        %v3897 = vunpack.c.l.b16 %v3762
        %v3898 = vunpack.c.l.b16 %v3763
        %v3899 = vunpack.c.l.b16 %v3764
        %v3900 = vunpack.c.l.b16 %v3765
        %v3901 = vunpack.c.l.b16 %v3766
        %v3902 = vunpack.c.l.b16 %v3767
        %v3903 = vunpack.c.l.b16 %v3768
        %v3904 = vunpack.c.l.b16 %v3769
        %v3905 = vunpack.c.l.b16 %v3770
        %v3906 = vunpack.c.l.b16 %v3771
        %v3907 = vunpack.c.l.b16 %v3772
        %v3908 = vunpack.c.l.b16 %v3773
        %v3909 = vunpack.c.l.b16 %v3774
        %v3910 = vunpack.c.l.b16 %v3775
        %v3911 = vunpack.c.l.b16 %v3776
        %v3912 = vunpack.c.l.b16 %v3777
        %v3913 = vunpack.c.l.b16 %v3778
        %v3914 = vunpack.c.l.b16 %v3779
        %v3915 = vunpack.c.l.b16 %v3780
        %v3916 = vunpack.c.l.b16 %v3781
        %v3917 = vunpack.c.l.b16 %v3782
        %v3918 = vunpack.c.l.b16 %v3783
        %v3919 = vunpack.c.l.b16 %v3784
        %v3920 = vpack.c.b16 %v3857, %v3856
        %v3921 = vpack.c.b16 %v3859, %v3858
        %v3922 = vpack.c.b16 %v3861, %v3860
        %v3923 = vpack.c.b16 %v3863, %v3862
        %v3924 = vpack.c.b16 %v3865, %v3864
        %v3925 = vpack.c.b16 %v3867, %v3866
        %v3926 = vpack.c.b16 %v3869, %v3868
        %v3927 = vpack.c.b16 %v3871, %v3870
        %v3928 = vpack.c.b16 %v3873, %v3872
        %v3929 = vpack.c.b16 %v3875, %v3874
        %v3930 = vpack.c.b16 %v3877, %v3876
        %v3931 = vpack.c.b16 %v3879, %v3878
        %v3932 = vpack.c.b16 %v3881, %v3880
        %v3933 = vpack.c.b16 %v3883, %v3882
        %v3934 = vpack.c.b16 %v3885, %v3884
        %v3935 = vpack.c.b16 %v3887, %v3886
        %v3936 = vpack.c.b16 %v3889, %v3888
        %v3937 = vpack.c.b16 %v3891, %v3890
        %v3938 = vpack.c.b16 %v3893, %v3892
        %v3939 = vpack.c.b16 %v3895, %v3894
        %v3940 = vpack.c.b16 %v3897, %v3896
        %v3941 = vpack.c.b16 %v3899, %v3898
        %v3942 = vpack.c.b16 %v3901, %v3900
        %v3943 = vpack.c.b16 %v3903, %v3902
        %v3944 = vpack.c.b16 %v3905, %v3904
        %v3945 = vpack.c.b16 %v3907, %v3906
        %v3946 = vpack.c.b16 %v3909, %v3908
        %v3947 = vpack.c.b16 %v3911, %v3910
        %v3948 = vpack.c.b16 %v3913, %v3912
        %v3949 = vpack.c.b16 %v3915, %v3914
        %v3950 = vpack.c.b16 %v3917, %v3916
        %v3951 = vpack.c.b16 %v3919, %v3918
        %3984 = vmatprep.subr.bf16.mxu0 0
        %3985 = vmatpush1.bf16.msra.mxu0 %v3920
        %3986 = vmatprep.subr.bf16.mxu0 0
        %3987 = vmatpush1.bf16.msra.mxu0 %v3921
        %3988 = vmatprep.subr.bf16.mxu0 0
        %3989 = vmatpush1.bf16.msra.mxu0 %v3922
        %3990 = vmatprep.subr.bf16.mxu0 0
        %3991 = vmatpush1.bf16.msra.mxu0 %v3923
        %3992 = vmatprep.subr.bf16.mxu0 0
        %3993 = vmatpush1.bf16.msra.mxu0 %v3924
        %3994 = vmatprep.subr.bf16.mxu0 0
        %3995 = vmatpush1.bf16.msra.mxu0 %v3925
        %3996 = vmatprep.subr.bf16.mxu0 0
        %3997 = vmatpush1.bf16.msra.mxu0 %v3926
        %3998 = vmatprep.subr.bf16.mxu0 0
        %3999 = vmatpush1.bf16.msra.mxu0 %v3927
        %4000 = vmatprep.subr.bf16.mxu0 0
        %4001 = vmatpush1.bf16.msra.mxu0 %v3928
        %4002 = vmatprep.subr.bf16.mxu0 0
        %4003 = vmatpush1.bf16.msra.mxu0 %v3929
        %4004 = vmatprep.subr.bf16.mxu0 0
        %4005 = vmatpush1.bf16.msra.mxu0 %v3930
        %4006 = vmatprep.subr.bf16.mxu0 0
        %4007 = vmatpush1.bf16.msra.mxu0 %v3931
        %4008 = vmatprep.subr.bf16.mxu0 0
        %4009 = vmatpush1.bf16.msra.mxu0 %v3932
        %4010 = vmatprep.subr.bf16.mxu0 0
        %4011 = vmatpush1.bf16.msra.mxu0 %v3933
        %4012 = vmatprep.subr.bf16.mxu0 0
        %4013 = vmatpush1.bf16.msra.mxu0 %v3934
        %4014 = vmatprep.subr.bf16.mxu0 0
        %4015 = vmatpush1.bf16.msra.mxu0 %v3935
        %4016 = vmatprep.mubr.bf16.mxu0 %v3714
        %4017 = vmatmul.mubr.bf16.gmra.mrb[0].mxu0 %v3713
        %v4018 = vpop.f32.mrb[0].mxu0
        %v4019 = vadd.f32 %v3790, %v4018
        %v4020 = vpop.f32.mrb[0].mxu0
        %v4021 = vpop.f32.mrb[0].mxu0
        %v4022 = vadd.f32 %v3790, %v4021
        %v4023 = vpop.f32.mrb[0].mxu0
        %4024 = vmatprep.mubr.bf16.mxu0 %v3718
        %4025 = vmatmul.mubr.bf16.gmra.mrb[0].mxu0 %v3717
        %v4026 = vpop.f32.mrb[0].mxu0
        %v4027 = vadd.f32 %v3790, %v4026
        %v4028 = vpop.f32.mrb[0].mxu0
        %v4029 = vpop.f32.mrb[0].mxu0
        %v4030 = vadd.f32 %v3790, %v4029
        %v4031 = vpop.f32.mrb[0].mxu0
        %4032 = vdwg.mxu0
        %4033 = vmatprep.subr.bf16.mxu0 0
        %4034 = vmatpush1.bf16.msra.mxu0 %v3936
        %4035 = vmatprep.subr.bf16.mxu0 0
        %4036 = vmatpush1.bf16.msra.mxu0 %v3937
        %4037 = vmatprep.subr.bf16.mxu0 0
        %4038 = vmatpush1.bf16.msra.mxu0 %v3938
        %4039 = vmatprep.subr.bf16.mxu0 0
        %4040 = vmatpush1.bf16.msra.mxu0 %v3939
        %4041 = vmatprep.subr.bf16.mxu0 0
        %4042 = vmatpush1.bf16.msra.mxu0 %v3940
        %4043 = vmatprep.subr.bf16.mxu0 0
        %4044 = vmatpush1.bf16.msra.mxu0 %v3941
        %4045 = vmatprep.subr.bf16.mxu0 0
        %4046 = vmatpush1.bf16.msra.mxu0 %v3942
        %4047 = vmatprep.subr.bf16.mxu0 0
        %4048 = vmatpush1.bf16.msra.mxu0 %v3943
        %4049 = vmatprep.subr.bf16.mxu0 0
        %4050 = vmatpush1.bf16.msra.mxu0 %v3944
        %4051 = vmatprep.subr.bf16.mxu0 0
        %4052 = vmatpush1.bf16.msra.mxu0 %v3945
        %4053 = vmatprep.subr.bf16.mxu0 0
        %4054 = vmatpush1.bf16.msra.mxu0 %v3946
        %4055 = vmatprep.subr.bf16.mxu0 0
        %4056 = vmatpush1.bf16.msra.mxu0 %v3947
        %4057 = vmatprep.subr.bf16.mxu0 0
        %4058 = vmatpush1.bf16.msra.mxu0 %v3948
        %4059 = vmatprep.subr.bf16.mxu0 0
        %4060 = vmatpush1.bf16.msra.mxu0 %v3949
        %4061 = vmatprep.subr.bf16.mxu0 0
        %4062 = vmatpush1.bf16.msra.mxu0 %v3950
        %4063 = vmatprep.subr.bf16.mxu0 0
        %4064 = vmatpush1.bf16.msra.mxu0 %v3951
        %4065 = vmatprep.mubr.bf16.mxu0 %v3716
        %4066 = vmatmul.mubr.bf16.gmra.mrb[0].mxu0 %v3715
        %v4067 = vpop.f32.mrb[0].mxu0
        %v4068 = vadd.f32 %v4019, %v4067
        %v4069 = vpop.f32.mrb[0].mxu0
        %v4070 = vpop.f32.mrb[0].mxu0
        %v4071 = vadd.f32 %v4022, %v4070
        %v4072 = vpop.f32.mrb[0].mxu0
        %4073 = vmatprep.mubr.bf16.mxu0 %v3720
        %4074 = vmatmul.mubr.bf16.gmra.mrb[0].mxu0 %v3719
        %v4075 = vpop.f32.mrb[0].mxu0
        %v4076 = vadd.f32 %v4027, %v4075
        %v4077 = vpop.f32.mrb[0].mxu0
        %v4078 = vpop.f32.mrb[0].mxu0
        %v4079 = vadd.f32 %v4030, %v4078
        %v4080 = vpop.f32.mrb[0].mxu0
        %4081 = vdwg.mxu0
        %v4082 = vadd.f32 %v3145, %v4068
        %v4083 = vadd.f32 %v3146, %v4071
        %v4084 = vadd.f32 %v3147, %v4076
        %v4085 = vadd.f32 %v3148, %v4079
        %4086 = vst [vmem:[#allocation2] sm:$0xff] %v4082
        %4087 = vst [vmem:[#allocation2 + $0x8] sm:$0xff] %v4083
        %4088 = vst [vmem:[#allocation2 + $0x10] sm:$0xff] %v4084
        %4089 = vst [vmem:[#allocation2 + $0x18] sm:$0xff] %v4085
        %p4090 = scmp.eq.s32.totalorder %s37, 1
        // Predicated region
        $region105: #{tpu_custom_call.1} parent=75 // pred_check
          %p4091 = pneg %p4090
        $region106: #{tpu_custom_call.1} parent=75 // pred_check_branch
          %4093 = sbr.rel (%p4091) target = $region108
        $region107: #{tpu_custom_call.1} parent=75 // pred_region
          %4094 = vst [vmem:[%s750] sm:$0xff] %v4082
          %4095 = vst [vmem:[%s750 + $0x8] sm:$0xff] %v4083
          %4096 = vst [vmem:[%s750 + $0x10] sm:$0xff] %v4084
          %4097 = vst [vmem:[%s750 + $0x18] sm:$0xff] %v4085
        $region108: #{tpu_custom_call.1} parent=75 // pred_fallthru
          _
        %s4098 = sand.u32 %s411, 1
        %s4099 = scalar_lea.sflag [#allocation6], %s4098
        %s4100 = sand.u32 %s411, 1
        %s4101 = smul.addr %s4100, 32
        %s4102 = scalar_lea.vmem [#allocation13], %s4101
        // Predicated region
        $region109: #{tpu_custom_call.1} parent=75 // pred_check
          %p4103 = pneg %p421
        $region110: #{tpu_custom_call.1} parent=75 // pred_check_branch
          %4105 = sbr.rel (%p4103) target = $region112
        $region111: #{tpu_custom_call.1} parent=75 // pred_region
          %s4106 = smul.u32 4, %s36
          %s4108 = ssub.s32 512, 512
          %4109 = vsyncadd %s4099, %s4108
          %s4110 = smul.addr %s4106, 128
          %s4111 = scalar_lea.hbm %s14, %s4110
          %s4112 = sshll.u32 %s4102, 4
          %s4113 = int_to_ptr.vmem [resolvable:$true] %s4112
          %4118 = dma.vmem_to_hbm [thread:$0]  %s4113, 512, %s4111, %s4099, 128, 128, 8
        $region112: #{tpu_custom_call.1} parent=75 // pred_fallthru
          _
      $region76: #{tpu_custom_call.1} parent=5 // pred_fallthru
        _
      %p4119 = scmp.le.s32.totalorder 2, %s27
      // Predicated region
      $region113: #{tpu_custom_call.1} parent=5 // pred_check
        %p4120 = pneg %p4119
      $region114: #{tpu_custom_call.1} parent=5 // pred_check_branch
        %4122 = sbr.rel (%p4120) target = $region116
      $region115: #{tpu_custom_call.1} parent=5 // pred_region
        %s4123 = ssub.s32 %s27, 2
        // Predicated region
        $region117: #{tpu_custom_call.1} parent=115 // pred_check
          %p4124 = pneg %p427
        $region118: #{tpu_custom_call.1} parent=115 // pred_check_branch
          %4126 = sbr.rel (%p4124) target = $region120
        $region119: #{tpu_custom_call.1} parent=115 // pred_region
          %s4127 = sand.u32 %s412, 1
          %s4128 = scalar_lea.sflag [#allocation6], %s4127
          %s4129 = sand.u32 %s412, 1
          %s4130 = smul.addr %s4129, 32
          %s4131 = scalar_lea.vmem [#allocation13], %s4130
          %4132 = dma.done %s4128, 512
        $region120: #{tpu_custom_call.1} parent=115 // pred_fallthru
          _
      $region116: #{tpu_custom_call.1} parent=5 // pred_fallthru
        _
    $region6: #{tpu_custom_call.1} parent=1 // loop_footer
      %s31 = sadd.s32 1, %s27
    $region7: #{tpu_custom_call.1} parent=1 // loop_footer_branch
      %26 = sbr.rel target = $region3
    $region8: #{tpu_custom_call.1} parent=1 // loop_exit
      _
    %4133 = vsyncpa [#allocation5], 1
    %s4134 = scalar_lea.sflag [#allocation5], 1
    %4135 = vsyncpa %s4134, 1
    %4136 = vsyncpa [#allocation8], 1
    %4137 = vsyncpa [#allocation6], 1
    %s4138 = scalar_lea.sflag [#allocation6], 1
    %4139 = vsyncpa %s4138, 1

</llo_original>
